<compile_context>
chip_gen: v6e
topology: v6e:2x2x1
jax: 0.10.0
libtpu: 0.0.40
codegen_flags: <defaults>
</compile_context>

<pallas_src>
import functools
import math

import jax
import jax.numpy as jnp
from jax import lax
from jax.experimental import pallas as pl
from jax.experimental.pallas import tpu as pltpu

_BN_EPS = 1e-5


def _round_up(v, m):
    return (v + m - 1) // m * m


def _pick_band(h):
    for t in (8, 4, 2, 1):
        if h % t == 0:
            return t
    return 1


# ==========================================================================
# Fused ASPP (4 branches) + GAP branch + conv1 + bn1 + ReLU
#   grid = (batch, K-tile); full H8xW8 image per step.
# ==========================================================================
def _aspp_kernel(x_ref, wt_ref, gapw_ref, w1_ref, bsh_ref, gsh_ref, b1sh_ref,
                 o_ref, acc_ref, gap_ref, *, tap_meta, h8, w8, w8p):
    k = pl.program_id(1)

    @pl.when(k == 0)
    def _init():
        acc_ref[...] = jnp.zeros_like(acc_ref)
        gap_ref[...] = jnp.zeros_like(gap_ref)

    xv = x_ref[0]                                     # (h8, w8p, tk) bf16
    xf = xv.reshape(h8 * w8p, -1)                     # (h8*w8p, tk)

    # --- GAP branch: accumulate (sum_hw x) @ gap_w (1/(h8*w8) folded in) ---
    xsum = jnp.sum(xv.astype(jnp.float32), axis=(0, 1), keepdims=True)
    xsum = xsum.reshape(1, -1).astype(jnp.bfloat16)
    gap_ref[...] += jnp.dot(xsum, gapw_ref[...],
                            preferred_element_type=jnp.float32)

    # --- ASPP taps: dilated 3x3 handled as shifted 1x1 matmuls (M = h8*w8p) ---
    for t, (br, dh, wb) in enumerate(tap_meta):
        res = jnp.dot(xf, wt_ref[t], preferred_element_type=jnp.float32)
        res = res.reshape(h8, w8p, 256)
        if wb != 0:
            # result-side W shift: output col w needs res col w+wb (zero outside)
            res = pltpu.roll(res, shift=-wb, axis=1)
            col = lax.broadcasted_iota(jnp.int32, (h8, w8p), 1)[:, :, None]
            valid = jnp.logical_and(col + wb >= 0, col + wb < w8p)
            res = jnp.where(valid, res, 0.0)
        if dh == 0:
            acc_ref[br] += res
        elif dh > 0:
            acc_ref[br, 0:h8 - dh] += res[dh:h8]
        else:
            acc_ref[br, -dh:h8] += res[0:h8 + dh]

    @pl.when(k == pl.num_programs(1) - 1)
    def _fin():
        # GAP branch BN+ReLU, projected through conv1 slice 4, plus bn1 shift
        gap_h = jnp.maximum(gap_ref[...] + gsh_ref[...], 0.0)        # (1,256)
        base = jnp.dot(gap_h.astype(jnp.bfloat16), w1_ref[4],
                       preferred_element_type=jnp.float32) + b1sh_ref[...]
        tot = jnp.zeros((h8 * w8p, 256), jnp.float32)
        for br in range(4):
            hbr = jnp.maximum(acc_ref[br].reshape(h8 * w8p, 256) + bsh_ref[br],
                              0.0)                                    # BN+ReLU
            tot = tot + jnp.dot(hbr.astype(jnp.bfloat16), w1_ref[br],
                                preferred_element_type=jnp.float32)
        tot = jnp.maximum(tot + base, 0.0).reshape(h8, w8p, 256)      # bn1+ReLU
        if w8p != w8:
            tot = tot[:, :w8, :]
        o_ref[0] = tot.astype(o_ref.dtype)


def fused_aspp_conv1(xb, wtaps, tap_meta, gapw, w1_stack, bshift, gapshift,
                     bn1shift, *, h8, w8, w8p, tk=256, out_dtype=jnp.bfloat16):
    """xb: (N, h8, w8p, 2048) bf16 (W zero-padded to w8p).
    wtaps: (t_count, 2048, 256) bf16 (BN-scaled tap matrices, matches tap_meta).
    gapw: (2048, 256) bf16 (gap conv weight * bn scale / (h8*w8)).
    w1_stack: (5, 256, 256) bf16 (conv1 * bn1 scale, per concat slice)."""
    n, _, _, cin = xb.shape
    assert cin % tk == 0
    ks = cin // tk
    t_count = wtaps.shape[0]
    kernel = functools.partial(_aspp_kernel, tap_meta=tap_meta, h8=h8, w8=w8,
                               w8p=w8p)
    return pl.pallas_call(
        kernel,
        out_shape=jax.ShapeDtypeStruct((n, h8, w8, 256), out_dtype),
        grid_spec=pltpu.PrefetchScalarGridSpec(
            num_scalar_prefetch=0,
            grid=(n, ks),
            in_specs=[
                pl.BlockSpec((1, h8, w8p, tk), lambda nn, kk: (nn, 0, 0, kk)),
                pl.BlockSpec((t_count, tk, 256), lambda nn, kk: (0, kk, 0)),
                pl.BlockSpec((tk, 256), lambda nn, kk: (kk, 0)),
                pl.BlockSpec((5, 256, 256), lambda nn, kk: (0, 0, 0)),
                pl.BlockSpec((4, 1, 256), lambda nn, kk: (0, 0, 0)),
                pl.BlockSpec((1, 256), lambda nn, kk: (0, 0)),
                pl.BlockSpec((1, 256), lambda nn, kk: (0, 0)),
            ],
            out_specs=pl.BlockSpec((1, h8, w8, 256), lambda nn, kk: (nn, 0, 0, 0)),
            scratch_shapes=[pltpu.VMEM((4, h8, w8p, 256), jnp.float32),
                            pltpu.VMEM((1, 256), jnp.float32)],
        ),
        compiler_params=pltpu.CompilerParams(
            dimension_semantics=("parallel", "arbitrary"),
            vmem_limit_bytes=64 * 1024 * 1024),
    )(xb, wtaps, gapw, w1_stack, bshift, gapshift, bn1shift)


# ==========================================================================
# Decoder kernel 1: conv_4 (1x1 256->48 + BN + ReLU) fused into
#                   last_conv[0] (3x3 304->nf + BN + ReLU); full image / step.
# ==========================================================================
def _lc1_kernel(y_ref, f_ref, c4w_ref, c4b_ref, wty_ref, wtf_ref, b_ref, o_ref,
                *, H, W, Wa, Wi):
    cm = wty_ref.shape[-1]
    yv = y_ref[0]                                     # (H+2, Wi, 256) bf16
    fv = f_ref[0]                                     # (H+2, Wi, 256) bf16

    # conv_4 on the padded slab; the zero-pad border must stay zero (conv_4
    # runs BEFORE the spatial padding in the reference), so mask it.
    f48 = jnp.dot(fv.reshape((H + 2) * Wi, -1), c4w_ref[...],
                  preferred_element_type=jnp.float32)
    f48 = jnp.maximum(f48 + c4b_ref[...], 0.0).reshape(H + 2, Wi, -1)
    row = lax.broadcasted_iota(jnp.int32, (H + 2, Wi), 0)[:, :, None]
    col = lax.broadcasted_iota(jnp.int32, (H + 2, Wi), 1)[:, :, None]
    interior = jnp.logical_and(jnp.logical_and(row >= 1, row <= H),
                               jnp.logical_and(col >= 1, col <= W))
    f48 = jnp.where(interior, f48, 0.0).astype(jnp.bfloat16)

    acc = jnp.zeros((H, Wa, cm), jnp.float32)
    for a in range(3):
        ya = yv[a:a + H].reshape(H * Wi, -1)
        fa = f48[a:a + H].reshape(H * Wi, -1)
        for b in range(3):
            t = a * 3 + b
            r = jnp.dot(ya, wty_ref[t], preferred_element_type=jnp.float32)
            r = r + jnp.dot(fa, wtf_ref[t], preferred_element_type=jnp.float32)
            acc = acc + r.reshape(H, Wi, cm)[:, b:b + Wa, :]
    z = jnp.maximum(acc + b_ref[...], 0.0)            # BN (folded) + ReLU
    if Wa != W:
        z = z[:, :W, :]
    o_ref[0] = z.astype(o_ref.dtype)


def lc1_conv4_fused(y4p, f4p, c4w, c4b, wty, wtf, b1, *, h, w, wa, wi,
                    out_dtype=jnp.bfloat16):
    n = y4p.shape[0]
    cm = wty.shape[-1]
    kernel = functools.partial(_lc1_kernel, H=h, W=w, Wa=wa, Wi=wi)
    return pl.pallas_call(
        kernel,
        out_shape=jax.ShapeDtypeStruct((n, h, w, cm), out_dtype),
        grid_spec=pltpu.PrefetchScalarGridSpec(
            num_scalar_prefetch=0,
            grid=(n,),
            in_specs=[
                pl.BlockSpec((1, h + 2, wi, y4p.shape[-1]),
                             lambda nn: (nn, 0, 0, 0)),
                pl.BlockSpec((1, h + 2, wi, f4p.shape[-1]),
                             lambda nn: (nn, 0, 0, 0)),
                pl.BlockSpec(c4w.shape, lambda nn: (0, 0)),
                pl.BlockSpec(c4b.shape, lambda nn: (0, 0)),
                pl.BlockSpec(wty.shape, lambda nn: (0, 0, 0)),
                pl.BlockSpec(wtf.shape, lambda nn: (0, 0, 0)),
                pl.BlockSpec(b1.shape, lambda nn: (0, 0)),
            ],
            out_specs=pl.BlockSpec((1, h, w, cm), lambda nn: (nn, 0, 0, 0)),
        ),
        compiler_params=pltpu.CompilerParams(
            dimension_semantics=("parallel",),
            vmem_limit_bytes=64 * 1024 * 1024),
    )(y4p, f4p, c4w, c4b, wty, wtf, b1)


# ==========================================================================
# Decoder kernel 2: last_conv[3] (3x3 nf->nf + BN + ReLU) with the final
#                   1x1(+bias) fused into the epilogue; full image / step.
# ==========================================================================
def _lc2_kernel(z_ref, wt_ref, b_ref, pw_ref, pb_ref, o_ref, *, H, W, Wa, Wi):
    cm = wt_ref.shape[-1]
    zv = z_ref[0]                                     # (H+2, Wi, cm) bf16
    acc = jnp.zeros((H, Wa, cm), jnp.float32)
    for a in range(3):
        za = zv[a:a + H].reshape(H * Wi, -1)
        for b in range(3):
            r = jnp.dot(za, wt_ref[a * 3 + b], preferred_element_type=jnp.float32)
            acc = acc + r.reshape(H, Wi, cm)[:, b:b + Wa, :]
    y = jnp.maximum(acc + b_ref[...], 0.0).astype(jnp.bfloat16)
    out = jnp.dot(y.reshape(H * Wa, cm), pw_ref[...],
                  preferred_element_type=jnp.float32) + pb_ref[...]
    out = out.reshape(H, Wa, -1)
    if Wa != W:
        out = out[:, :W, :]
    o_ref[0] = out.astype(o_ref.dtype)


def lc2_lc3_fused(zp, wt2, b2, pw, pb, *, h, w, wa, wi, out_dtype=jnp.bfloat16):
    n = zp.shape[0]
    cout = pw.shape[-1]
    kernel = functools.partial(_lc2_kernel, H=h, W=w, Wa=wa, Wi=wi)
    return pl.pallas_call(
        kernel,
        out_shape=jax.ShapeDtypeStruct((n, h, w, cout), out_dtype),
        grid_spec=pltpu.PrefetchScalarGridSpec(
            num_scalar_prefetch=0,
            grid=(n,),
            in_specs=[
                pl.BlockSpec((1, h + 2, wi, zp.shape[-1]),
                             lambda nn: (nn, 0, 0, 0)),
                pl.BlockSpec(wt2.shape, lambda nn: (0, 0, 0)),
                pl.BlockSpec(b2.shape, lambda nn: (0, 0)),
                pl.BlockSpec(pw.shape, lambda nn: (0, 0)),
                pl.BlockSpec(pb.shape, lambda nn: (0, 0)),
            ],
            out_specs=pl.BlockSpec((1, h, w, cout), lambda nn: (nn, 0, 0, 0)),
        ),
        compiler_params=pltpu.CompilerParams(
            dimension_semantics=("parallel",),
            vmem_limit_bytes=64 * 1024 * 1024),
    )(zp, wt2, b2, pw, pb)


# ==========================================================================
# Bilinear resize (align_corners=True): band of output rows per grid step,
# input image resident in VMEM, per-row H-lerp (VPU) + one small dot per row.
# ==========================================================================
def _bilinear_kernel(i0_ref, x_ref, mw_ref, o_ref, *, scale_h, th, hin):
    band = pl.program_id(1)
    mw = mw_ref[...]
    rows = []
    for t in range(th):
        ho = band * th + t
        i0 = i0_ref[ho]
        i1 = jnp.minimum(i0 + 1, hin - 1)
        fh = jnp.clip(ho.astype(jnp.float32) * scale_h - i0.astype(jnp.float32),
                      0.0, 1.0)
        ra = x_ref[0, i0].astype(jnp.float32)          # (win, c)
        rb = x_ref[0, i1].astype(jnp.float32)
        rowm = ra + (rb - ra) * fh                     # H-lerp
        rows.append(jnp.dot(mw, rowm, preferred_element_type=jnp.float32))
    o_ref[0] = jnp.stack(rows, axis=0).astype(o_ref.dtype)


def _interp_matrix(in_size, out_size):
    if in_size == 1:
        return jnp.ones((out_size, 1), jnp.float32)
    scale = (in_size - 1) / (out_size - 1) if out_size > 1 else 0.0
    src = jnp.arange(out_size, dtype=jnp.float32) * scale
    i0 = jnp.clip(jnp.floor(src).astype(jnp.int32), 0, in_size - 2)
    frac = src - i0.astype(jnp.float32)
    rows = jnp.arange(out_size)
    m = jnp.zeros((out_size, in_size), jnp.float32)
    m = m.at[rows, i0].add(1.0 - frac)
    m = m.at[rows, i0 + 1].add(frac)
    return m


def bilinear_resize(x_nhwc, out_h, out_w, *, out_dtype):
    n, hin, win, c = x_nhwc.shape
    if hin == out_h and win == out_w:
        return x_nhwc.astype(out_dtype)
    mw = _interp_matrix(win, out_w)                    # (out_w, win) f32
    scale_h = (hin - 1) / (out_h - 1) if (out_h > 1 and hin > 1) else 0.0
    src = jnp.arange(out_h, dtype=jnp.float32) * scale_h
    i0 = jnp.clip(jnp.floor(src).astype(jnp.int32), 0, max(hin - 2, 0))
    th = _pick_band(out_h)
    kernel = functools.partial(_bilinear_kernel, scale_h=float(scale_h),
                               th=th, hin=hin)
    return pl.pallas_call(
        kernel,
        out_shape=jax.ShapeDtypeStruct((n, out_h, out_w, c), out_dtype),
        grid_spec=pltpu.PrefetchScalarGridSpec(
            num_scalar_prefetch=1,
            grid=(n, out_h // th),
            in_specs=[
                pl.BlockSpec((1, hin, win, c), lambda nn, hb, i0r: (nn, 0, 0, 0)),
                pl.BlockSpec((out_w, win), lambda nn, hb, i0r: (0, 0)),
            ],
            out_specs=pl.BlockSpec((1, th, out_w, c),
                                   lambda nn, hb, i0r: (nn, hb, 0, 0)),
        ),
        compiler_params=pltpu.CompilerParams(
            dimension_semantics=("parallel", "parallel")),
    )(i0, x_nhwc, mw)


# ==========================================================================
# Parameters (deterministic kaiming convs, fresh BatchNorm stats, eval fold)
# ==========================================================================
def _kaiming(key, cout, cin, kh, kw):
    fan_in = cin * kh * kw
    std = math.sqrt(2.0 / fan_in)
    return jax.random.normal(key, (cout, cin, kh, kw), jnp.float32) * std


def _bn_fold(c):
    # Fresh BN stats (mean=0, var=1, gamma=1, beta=0); with pretrained stats the
    # fold would be scale=gamma/sqrt(var+eps), shift=beta-mean*scale.
    scale = jnp.full((c,), 1.0 / math.sqrt(1.0 + _BN_EPS), jnp.float32)
    shift = jnp.zeros((c,), jnp.float32)
    return scale, shift


def init_params(key, n_features=64):
    keys = jax.random.split(key, 10)
    p = {}
    p["aspp1_w"] = _kaiming(keys[0], 256, 2048, 1, 1)
    p["aspp2_w"] = _kaiming(keys[1], 256, 2048, 3, 3)
    p["aspp3_w"] = _kaiming(keys[2], 256, 2048, 3, 3)
    p["aspp4_w"] = _kaiming(keys[3], 256, 2048, 3, 3)
    p["gap_w"] = _kaiming(keys[4], 256, 2048, 1, 1)
    p["conv1_w"] = _kaiming(keys[5], 256, 1280, 1, 1)
    p["conv4_w"] = _kaiming(keys[6], 48, 256, 1, 1)
    p["lc1_w"] = _kaiming(keys[7], n_features, 304, 3, 3)
    p["lc2_w"] = _kaiming(keys[8], n_features, n_features, 3, 3)
    p["lc3_w"] = _kaiming(keys[9], n_features, n_features, 1, 1)
    p["lc3_b"] = jnp.zeros((n_features,), jnp.float32)
    for name, c in [("aspp1", 256), ("aspp2", 256), ("aspp3", 256), ("aspp4", 256),
                    ("gap", 256), ("bn1", 256), ("conv4", 48),
                    ("lc1", n_features), ("lc2", n_features)]:
        p[name + "_bn_scale"], p[name + "_bn_shift"] = _bn_fold(c)
    return p


# ==========================================================================
# Forward (head; backbone features supplied as inputs)
# ==========================================================================
def deeplabv3_feature_forward(params, input_nchw, resnet_out_nchw,
                              feature_4_nchw, feature_2_nchw=None, n_features=64):
    del feature_2_nchw  # extracted but unused in the reference forward
    rates = (1, 12, 24, 36)  # os == 8
    in_h, in_w = int(input_nchw.shape[2]), int(input_nchw.shape[3])
    n = int(resnet_out_nchw.shape[0])
    h8, w8 = int(resnet_out_nchw.shape[2]), int(resnet_out_nchw.shape[3])

    def io(w_oihw):            # (O,I,1,1) -> (I,O)
        return w_oihw.reshape(w_oihw.shape[0], w_oihw.shape[1]).T

    def hwio(w_oihw):          # (O,I,3,3) -> (3,3,I,O)
        return jnp.transpose(w_oihw, (2, 3, 1, 0))

    # ---- x: NCHW -> NHWC + bf16 cast in one pass, pad W to a multiple of 8 ----
    w8p = max(8, _round_up(w8, 8))
    xb = jnp.transpose(resnet_out_nchw, (0, 2, 3, 1)).astype(jnp.bfloat16)
    if w8p != w8:
        xb = jnp.pad(xb, ((0, 0), (0, 0), (0, w8p - w8), (0, 0)))

    # ---- ASPP tap list (branch BN scale folded into the weights) ----
    taps = [(0, 0, 0, io(params["aspp1_w"]) * params["aspp1_bn_scale"][None, :])]
    for bi, nm in ((1, "aspp2"), (2, "aspp3"), (3, "aspp4")):
        w = hwio(params[nm + "_w"]) * params[nm + "_bn_scale"][None, None, None, :]
        r = rates[bi]
        for a in (-1, 0, 1):
            if abs(a * r) >= h8:
                continue
            for b in (-1, 0, 1):
                if abs(b * r) >= w8:
                    continue
                taps.append((bi, a * r, b * r, w[a + 1, b + 1]))
    tap_meta = tuple((br, dh, wb) for (br, dh, wb, _) in taps)
    wtaps = jnp.stack([w for (_, _, _, w) in taps]).astype(jnp.bfloat16)

    bshift = jnp.stack([params[nm + "_bn_shift"] for nm in
                        ("aspp1", "aspp2", "aspp3", "aspp4")]
                       ).reshape(4, 1, 256).astype(jnp.float32)
    gapw = (io(params["gap_w"]) * params["gap_bn_scale"][None, :] /
            float(h8 * w8)).astype(jnp.bfloat16)
    gapshift = params["gap_bn_shift"].reshape(1, 256).astype(jnp.float32)
    w1 = io(params["conv1_w"]) * params["bn1_bn_scale"][None, :]     # (1280,256)
    w1_stack = jnp.stack([w1[i * 256:(i + 1) * 256] for i in range(5)]
                         ).astype(jnp.bfloat16)                      # (5,256,256)
    bn1shift = params["bn1_bn_shift"].reshape(1, 256).astype(jnp.float32)

    # ---- fused ASPP + GAP + conv1 + bn1 + ReLU (single kernel) ----
    y8 = fused_aspp_conv1(xb, wtaps, tap_meta, gapw, w1_stack, bshift, gapshift,
                          bn1shift, h8=h8, w8=w8, w8p=w8p)            # (N,H8,W8,256)

    # ---- upsample to stride 4 ----
    h4 = int(math.ceil(in_h / 4))
    w4 = int(math.ceil(in_w / 4))
    y4 = bilinear_resize(y8, h4, w4, out_dtype=jnp.bfloat16)

    # ---- decoder ----
    f4 = jnp.transpose(feature_4_nchw, (0, 2, 3, 1)).astype(jnp.bfloat16)
    assert int(f4.shape[1]) == h4 and int(f4.shape[2]) == w4

    wa = _round_up(w4, 8)
    wi = wa + 8
    pad_w = (1, wi - w4 - 1)
    y4p = jnp.pad(y4, ((0, 0), (1, 1), pad_w, (0, 0)))
    f4p = jnp.pad(f4, ((0, 0), (1, 1), pad_w, (0, 0)))

    c4w = (io(params["conv4_w"]) *
           params["conv4_bn_scale"][None, :]).astype(jnp.bfloat16)    # (256,48)
    c4b = params["conv4_bn_shift"].reshape(1, 48).astype(jnp.float32)
    lc1 = hwio(params["lc1_w"]) * params["lc1_bn_scale"][None, None, None, :]
    wty = lc1[:, :, :256, :].reshape(9, 256, n_features).astype(jnp.bfloat16)
    wtf = lc1[:, :, 256:, :].reshape(9, 48, n_features).astype(jnp.bfloat16)
    b1 = params["lc1_bn_shift"].reshape(1, n_features).astype(jnp.float32)
    z = lc1_conv4_fused(y4p, f4p, c4w, c4b, wty, wtf, b1,
                        h=h4, w=w4, wa=wa, wi=wi)                     # (N,h4,w4,nf)

    zp = jnp.pad(z, ((0, 0), (1, 1), pad_w, (0, 0)))
    wt2 = (hwio(params["lc2_w"]) * params["lc2_bn_scale"][None, None, None, :]
           ).reshape(9, n_features, n_features).astype(jnp.bfloat16)
    b2 = params["lc2_bn_shift"].reshape(1, n_features).astype(jnp.float32)
    lc3w = io(params["lc3_w"]).astype(jnp.bfloat16)                   # (nf,nf)
    lc3b = params["lc3_b"].reshape(1, n_features).astype(jnp.float32)
    z2 = lc2_lc3_fused(zp, wt2, b2, lc3w, lc3b,
                       h=h4, w=w4, wa=wa, wi=wi)                      # (N,h4,w4,nf)

    # ---- final upsample to input resolution ----
    out = bilinear_resize(z2, in_h, in_w, out_dtype=jnp.float32)      # (N,H,W,nf)
    return jnp.transpose(out, (0, 3, 1, 2))                           # NCHW


# ==========================================================================
# Test
# ==========================================================================
if __name__ == "__main__":
    key = jax.random.PRNGKey(0)
    k_in, k_out, k_f4, k_f2, k_par = jax.random.split(key, 5)

    B, H, W = 2, 32, 32          # os = 8 -> backbone out at H/8, feature_4 at H/4
    n_features = 64

    input_nchw = jax.random.normal(k_in, (B, 3, H, W), jnp.float32)
    resnet_out = jax.random.normal(k_out, (B, 2048, H // 8, W // 8), jnp.float32)
    feature_4 = jax.random.normal(k_f4, (B, 256, H // 4, W // 4), jnp.float32)
    feature_2 = jax.random.normal(k_f2, (B, 64, H // 2, W // 2), jnp.float32)  # unused

    params = init_params(k_par, n_features=n_features)

    out = deeplabv3_feature_forward(params, input_nchw, resnet_out,
                                    feature_4, feature_2, n_features=n_features)
    out = jax.block_until_ready(out)

    assert out.shape == (B, n_features, H, W), out.shape
    assert out.dtype == jnp.float32
    assert bool(jnp.all(jnp.isfinite(out)))
    print("KERNEL_OK")
</pallas_src>

<mosaic_0001>
module attributes {stable_mosaic.version = 11 : i64} {
  func.func @_aspp_kernel(%arg0: i32, %arg1: i32, %arg2: memref<1x4x8x256xbf16, #tpu.memory_space<vmem>>, %arg3: memref<4x256x256xbf16, #tpu.memory_space<vmem>>, %arg4: memref<256x256xbf16, #tpu.memory_space<vmem>>, %arg5: memref<5x256x256xbf16, #tpu.memory_space<vmem>>, %arg6: memref<4x1x256xf32, #tpu.memory_space<vmem>>, %arg7: memref<1x256xf32, #tpu.memory_space<vmem>>, %arg8: memref<1x256xf32, #tpu.memory_space<vmem>>, %arg9: memref<1x4x4x256xbf16, #tpu.memory_space<vmem>>, %arg10: memref<4x4x8x256xf32, #tpu.memory_space<vmem>>, %arg11: memref<1x256xf32, #tpu.memory_space<vmem>>) attributes {dimension_semantics = [#tpu.dimension_semantics<parallel>, #tpu.dimension_semantics<arbitrary>], iteration_bounds = array<i64: 2, 8>, scalar_prefetch = 0 : i64, scratch_operands = 2 : i64, tpu.core_type = #tpu.core_type<tc>, window_params = [{transform_indices = @transform_0, window_bounds = array<i64: 1, 4, 8, 256>}, {transform_indices = @transform_1, window_bounds = array<i64: 4, 256, 256>}, {transform_indices = @transform_2, window_bounds = array<i64: 256, 256>}, {pipeline_mode = #tpu.pipeline_mode<synchronous>, transform_indices = @transform_3, window_bounds = array<i64: 5, 256, 256>}, {pipeline_mode = #tpu.pipeline_mode<synchronous>, transform_indices = @transform_4, window_bounds = array<i64: 4, 1, 256>}, {pipeline_mode = #tpu.pipeline_mode<synchronous>, transform_indices = @transform_5, window_bounds = array<i64: 1, 256>}, {pipeline_mode = #tpu.pipeline_mode<synchronous>, transform_indices = @transform_6, window_bounds = array<i64: 1, 256>}, {transform_indices = @transform_7, window_bounds = array<i64: 1, 4, 4, 256>}]} {
    %c0_i32 = arith.constant 0 : i32
    %0 = arith.cmpi eq, %arg1, %c0_i32 : i32
    %1 = arith.extui %0 : i1 to i32
    %c0_i32_0 = arith.constant 0 : i32
    %2 = arith.cmpi ne, %1, %c0_i32_0 : i32
    scf.if %2 {
      %cst_57 = arith.constant 0.000000e+00 : f32
      %59 = vector.broadcast %cst_57 : f32 to vector<4x4x8x256xf32>
      %c0_58 = arith.constant 0 : index
      %c0_59 = arith.constant 0 : index
      %c0_60 = arith.constant 0 : index
      %c0_61 = arith.constant 0 : index
      %60 = vector.load %arg10[%c0_58, %c0_59, %c0_60, %c0_61] : memref<4x4x8x256xf32, #tpu.memory_space<vmem>>, vector<4x4x8x256xf32>
      tpu.vector_store %arg10[%c0_58, %c0_59, %c0_60, %c0_61], %59 {strides = array<i32>} : memref<4x4x8x256xf32, #tpu.memory_space<vmem>>, vector<4x4x8x256xf32>,
      %cst_62 = arith.constant 0.000000e+00 : f32
      %61 = vector.broadcast %cst_62 : f32 to vector<1x256xf32>
      %c0_63 = arith.constant 0 : index
      %c0_64 = arith.constant 0 : index
      %62 = vector.load %arg11[%c0_63, %c0_64] : memref<1x256xf32, #tpu.memory_space<vmem>>, vector<1x256xf32>
      tpu.vector_store %arg11[%c0_63, %c0_64], %61 {strides = array<i32>} : memref<1x256xf32, #tpu.memory_space<vmem>>, vector<1x256xf32>,
    } else {
    }
    %c0 = arith.constant 0 : index
    %c0_1 = arith.constant 0 : index
    %c0_2 = arith.constant 0 : index
    %c0_3 = arith.constant 0 : index
    %3 = vector.load %arg2[%c0, %c0_1, %c0_2, %c0_3] : memref<1x4x8x256xbf16, #tpu.memory_space<vmem>>, vector<1x4x8x256xbf16>
    %4 = vector.shape_cast %3 : vector<1x4x8x256xbf16> to vector<4x8x256xbf16>
    %5 = vector.shape_cast %4 : vector<4x8x256xbf16> to vector<32x256xbf16>
    %6 = arith.extf %4 : vector<4x8x256xbf16> to vector<4x8x256xf32>
    %cst = arith.constant dense<0.000000e+00> : vector<256xf32>
    %7 = vector.multi_reduction <add>, %6, %cst [0, 1] : vector<4x8x256xf32> to vector<256xf32>
    %8 = vector.shape_cast %7 : vector<256xf32> to vector<1x1x256xf32>
    %9 = vector.shape_cast %8 : vector<1x1x256xf32> to vector<1x256xf32>
    %10 = arith.truncf %9 : vector<1x256xf32> to vector<1x256xbf16>
    %c0_4 = arith.constant 0 : index
    %c0_5 = arith.constant 0 : index
    %11 = vector.load %arg11[%c0_4, %c0_5] : memref<1x256xf32, #tpu.memory_space<vmem>>, vector<1x256xf32>
    %c0_6 = arith.constant 0 : index
    %c0_7 = arith.constant 0 : index
    %12 = vector.load %arg4[%c0_6, %c0_7] : memref<256x256xbf16, #tpu.memory_space<vmem>>, vector<256x256xbf16>
    %cst_8 = arith.constant dense<0.000000e+00> : vector<1x256xf32>
    %13 = tpu.matmul %10, %12, %cst_8 {dimension_numbers = #tpu.dot_dimension_numbers<[1], [0], [0], [1], [0, 0, 1, 1], [], []>} : vector<1x256xbf16>, vector<256x256xbf16>, vector<1x256xf32> -> vector<1x256xf32>
    %14 = arith.addf %11, %13 : vector<1x256xf32>
    %c0_9 = arith.constant 0 : index
    %c0_10 = arith.constant 0 : index
    %15 = vector.load %arg11[%c0_9, %c0_10] : memref<1x256xf32, #tpu.memory_space<vmem>>, vector<1x256xf32>
    tpu.vector_store %arg11[%c0_9, %c0_10], %14 {strides = array<i32>} : memref<1x256xf32, #tpu.memory_space<vmem>>, vector<1x256xf32>,
    %c0_11 = arith.constant 0 : index
    %c0_12 = arith.constant 0 : index
    %c0_13 = arith.constant 0 : index
    %16 = vector.load %arg3[%c0_11, %c0_12, %c0_13] : memref<4x256x256xbf16, #tpu.memory_space<vmem>>, vector<1x256x256xbf16>
    %17 = vector.shape_cast %16 : vector<1x256x256xbf16> to vector<256x256xbf16>
    %cst_14 = arith.constant dense<0.000000e+00> : vector<32x256xf32>
    %18 = tpu.matmul %5, %17, %cst_14 {dimension_numbers = #tpu.dot_dimension_numbers<[1], [0], [0], [1], [0, 0, 1, 1], [], []>} : vector<32x256xbf16>, vector<256x256xbf16>, vector<32x256xf32> -> vector<32x256xf32>
    %19 = vector.shape_cast %18 : vector<32x256xf32> to vector<4x8x256xf32>
    %c0_15 = arith.constant 0 : index
    %c0_16 = arith.constant 0 : index
    %c0_17 = arith.constant 0 : index
    %c0_18 = arith.constant 0 : index
    %20 = vector.load %arg10[%c0_15, %c0_16, %c0_17, %c0_18] : memref<4x4x8x256xf32, #tpu.memory_space<vmem>>, vector<1x4x8x256xf32>
    %21 = vector.shape_cast %20 : vector<1x4x8x256xf32> to vector<4x8x256xf32>
    %22 = arith.addf %21, %19 : vector<4x8x256xf32>
    %c0_19 = arith.constant 0 : index
    %c0_20 = arith.constant 0 : index
    %c0_21 = arith.constant 0 : index
    %c0_22 = arith.constant 0 : index
    %23 = vector.load %arg10[%c0_19, %c0_20, %c0_21, %c0_22] : memref<4x4x8x256xf32, #tpu.memory_space<vmem>>, vector<1x4x8x256xf32>
    %24 = vector.shape_cast %23 : vector<1x4x8x256xf32> to vector<4x8x256xf32>
    %25 = vector.shape_cast %22 : vector<4x8x256xf32> to vector<1x4x8x256xf32>
    tpu.vector_store %arg10[%c0_19, %c0_20, %c0_21, %c0_22], %25 {strides = array<i32>} : memref<4x4x8x256xf32, #tpu.memory_space<vmem>>, vector<1x4x8x256xf32>,
    %c1 = arith.constant 1 : index
    %c0_23 = arith.constant 0 : index
    %c0_24 = arith.constant 0 : index
    %26 = vector.load %arg3[%c1, %c0_23, %c0_24] : memref<4x256x256xbf16, #tpu.memory_space<vmem>>, vector<1x256x256xbf16>
    %27 = vector.shape_cast %26 : vector<1x256x256xbf16> to vector<256x256xbf16>
    %cst_25 = arith.constant dense<0.000000e+00> : vector<32x256xf32>
    %28 = tpu.matmul %5, %27, %cst_25 {dimension_numbers = #tpu.dot_dimension_numbers<[1], [0], [0], [1], [0, 0, 1, 1], [], []>} : vector<32x256xbf16>, vector<256x256xbf16>, vector<32x256xf32> -> vector<32x256xf32>
    %29 = vector.shape_cast %28 : vector<32x256xf32> to vector<4x8x256xf32>
    %c1_26 = arith.constant 1 : index
    %c0_27 = arith.constant 0 : index
    %c0_28 = arith.constant 0 : index
    %c0_29 = arith.constant 0 : index
    %30 = vector.load %arg10[%c1_26, %c0_27, %c0_28, %c0_29] : memref<4x4x8x256xf32, #tpu.memory_space<vmem>>, vector<1x4x8x256xf32>
    %31 = vector.shape_cast %30 : vector<1x4x8x256xf32> to vector<4x8x256xf32>
    %32 = arith.addf %31, %29 : vector<4x8x256xf32>
    %c1_30 = arith.constant 1 : index
    %c0_31 = arith.constant 0 : index
    %c0_32 = arith.constant 0 : index
    %c0_33 = arith.constant 0 : index
    %33 = vector.load %arg10[%c1_30, %c0_31, %c0_32, %c0_33] : memref<4x4x8x256xf32, #tpu.memory_space<vmem>>, vector<1x4x8x256xf32>
    %34 = vector.shape_cast %33 : vector<1x4x8x256xf32> to vector<4x8x256xf32>
    %35 = vector.shape_cast %32 : vector<4x8x256xf32> to vector<1x4x8x256xf32>
    tpu.vector_store %arg10[%c1_30, %c0_31, %c0_32, %c0_33], %35 {strides = array<i32>} : memref<4x4x8x256xf32, #tpu.memory_space<vmem>>, vector<1x4x8x256xf32>,
    %c2 = arith.constant 2 : index
    %c0_34 = arith.constant 0 : index
    %c0_35 = arith.constant 0 : index
    %36 = vector.load %arg3[%c2, %c0_34, %c0_35] : memref<4x256x256xbf16, #tpu.memory_space<vmem>>, vector<1x256x256xbf16>
    %37 = vector.shape_cast %36 : vector<1x256x256xbf16> to vector<256x256xbf16>
    %cst_36 = arith.constant dense<0.000000e+00> : vector<32x256xf32>
    %38 = tpu.matmul %5, %37, %cst_36 {dimension_numbers = #tpu.dot_dimension_numbers<[1], [0], [0], [1], [0, 0, 1, 1], [], []>} : vector<32x256xbf16>, vector<256x256xbf16>, vector<32x256xf32> -> vector<32x256xf32>
    %39 = vector.shape_cast %38 : vector<32x256xf32> to vector<4x8x256xf32>
    %c2_37 = arith.constant 2 : index
    %c0_38 = arith.constant 0 : index
    %c0_39 = arith.constant 0 : index
    %c0_40 = arith.constant 0 : index
    %40 = vector.load %arg10[%c2_37, %c0_38, %c0_39, %c0_40] : memref<4x4x8x256xf32, #tpu.memory_space<vmem>>, vector<1x4x8x256xf32>
    %41 = vector.shape_cast %40 : vector<1x4x8x256xf32> to vector<4x8x256xf32>
    %42 = arith.addf %41, %39 : vector<4x8x256xf32>
    %c2_41 = arith.constant 2 : index
    %c0_42 = arith.constant 0 : index
    %c0_43 = arith.constant 0 : index
    %c0_44 = arith.constant 0 : index
    %43 = vector.load %arg10[%c2_41, %c0_42, %c0_43, %c0_44] : memref<4x4x8x256xf32, #tpu.memory_space<vmem>>, vector<1x4x8x256xf32>
    %44 = vector.shape_cast %43 : vector<1x4x8x256xf32> to vector<4x8x256xf32>
    %45 = vector.shape_cast %42 : vector<4x8x256xf32> to vector<1x4x8x256xf32>
    tpu.vector_store %arg10[%c2_41, %c0_42, %c0_43, %c0_44], %45 {strides = array<i32>} : memref<4x4x8x256xf32, #tpu.memory_space<vmem>>, vector<1x4x8x256xf32>,
    %c3 = arith.constant 3 : index
    %c0_45 = arith.constant 0 : index
    %c0_46 = arith.constant 0 : index
    %46 = vector.load %arg3[%c3, %c0_45, %c0_46] : memref<4x256x256xbf16, #tpu.memory_space<vmem>>, vector<1x256x256xbf16>
    %47 = vector.shape_cast %46 : vector<1x256x256xbf16> to vector<256x256xbf16>
    %cst_47 = arith.constant dense<0.000000e+00> : vector<32x256xf32>
    %48 = tpu.matmul %5, %47, %cst_47 {dimension_numbers = #tpu.dot_dimension_numbers<[1], [0], [0], [1], [0, 0, 1, 1], [], []>} : vector<32x256xbf16>, vector<256x256xbf16>, vector<32x256xf32> -> vector<32x256xf32>
    %49 = vector.shape_cast %48 : vector<32x256xf32> to vector<4x8x256xf32>
    %c3_48 = arith.constant 3 : index
    %c0_49 = arith.constant 0 : index
    %c0_50 = arith.constant 0 : index
    %c0_51 = arith.constant 0 : index
    %50 = vector.load %arg10[%c3_48, %c0_49, %c0_50, %c0_51] : memref<4x4x8x256xf32, #tpu.memory_space<vmem>>, vector<1x4x8x256xf32>
    %51 = vector.shape_cast %50 : vector<1x4x8x256xf32> to vector<4x8x256xf32>
    %52 = arith.addf %51, %49 : vector<4x8x256xf32>
    %c3_52 = arith.constant 3 : index
    %c0_53 = arith.constant 0 : index
    %c0_54 = arith.constant 0 : index
    %c0_55 = arith.constant 0 : index
    %53 = vector.load %arg10[%c3_52, %c0_53, %c0_54, %c0_55] : memref<4x4x8x256xf32, #tpu.memory_space<vmem>>, vector<1x4x8x256xf32>
    %54 = vector.shape_cast %53 : vector<1x4x8x256xf32> to vector<4x8x256xf32>
    %55 = vector.shape_cast %52 : vector<4x8x256xf32> to vector<1x4x8x256xf32>
    tpu.vector_store %arg10[%c3_52, %c0_53, %c0_54, %c0_55], %55 {strides = array<i32>} : memref<4x4x8x256xf32, #tpu.memory_space<vmem>>, vector<1x4x8x256xf32>,
    %c7_i32 = arith.constant 7 : i32
    %56 = arith.cmpi eq, %arg1, %c7_i32 : i32
    %57 = arith.extui %56 : i1 to i32
    %c0_i32_56 = arith.constant 0 : i32
    %58 = arith.cmpi ne, %57, %c0_i32_56 : i32
    scf.if %58 {
      %c0_57 = arith.constant 0 : index
      %c0_58 = arith.constant 0 : index
      %59 = vector.load %arg11[%c0_57, %c0_58] : memref<1x256xf32, #tpu.memory_space<vmem>>, vector<1x256xf32>
      %c0_59 = arith.constant 0 : index
      %c0_60 = arith.constant 0 : index
      %60 = vector.load %arg7[%c0_59, %c0_60] : memref<1x256xf32, #tpu.memory_space<vmem>>, vector<1x256xf32>
      %61 = arith.addf %59, %60 : vector<1x256xf32>
      %cst_61 = arith.constant 0.000000e+00 : f32
      %62 = vector.broadcast %cst_61 : f32 to vector<1x256xf32>
      %63 = arith.maximumf %61, %62 : vector<1x256xf32>
      %64 = arith.truncf %63 : vector<1x256xf32> to vector<1x256xbf16>
      %c4 = arith.constant 4 : index
      %c0_62 = arith.constant 0 : index
      %c0_63 = arith.constant 0 : index
      %65 = vector.load %arg5[%c4, %c0_62, %c0_63] : memref<5x256x256xbf16, #tpu.memory_space<vmem>>, vector<1x256x256xbf16>
      %66 = vector.shape_cast %65 : vector<1x256x256xbf16> to vector<256x256xbf16>
      %cst_64 = arith.constant dense<0.000000e+00> : vector<1x256xf32>
      %67 = tpu.matmul %64, %66, %cst_64 {dimension_numbers = #tpu.dot_dimension_numbers<[1], [0], [0], [1], [0, 0, 1, 1], [], []>} : vector<1x256xbf16>, vector<256x256xbf16>, vector<1x256xf32> -> vector<1x256xf32>
      %c0_65 = arith.constant 0 : index
      %c0_66 = arith.constant 0 : index
      %68 = vector.load %arg8[%c0_65, %c0_66] : memref<1x256xf32, #tpu.memory_space<vmem>>, vector<1x256xf32>
      %69 = arith.addf %67, %68 : vector<1x256xf32>
      %cst_67 = arith.constant 0.000000e+00 : f32
      %70 = vector.broadcast %cst_67 : f32 to vector<32x256xf32>
      %c0_68 = arith.constant 0 : index
      %c0_69 = arith.constant 0 : index
      %c0_70 = arith.constant 0 : index
      %c0_71 = arith.constant 0 : index
      %71 = vector.load %arg10[%c0_68, %c0_69, %c0_70, %c0_71] : memref<4x4x8x256xf32, #tpu.memory_space<vmem>>, vector<1x4x8x256xf32>
      %72 = vector.shape_cast %71 : vector<1x4x8x256xf32> to vector<4x8x256xf32>
      %73 = vector.shape_cast %72 : vector<4x8x256xf32> to vector<32x256xf32>
      %c0_72 = arith.constant 0 : index
      %c0_73 = arith.constant 0 : index
      %c0_74 = arith.constant 0 : index
      %74 = vector.load %arg6[%c0_72, %c0_73, %c0_74] : memref<4x1x256xf32, #tpu.memory_space<vmem>>, vector<1x1x256xf32>
      %75 = vector.shape_cast %74 : vector<1x1x256xf32> to vector<1x256xf32>
      %76 = vector.broadcast %75 : vector<1x256xf32> to vector<32x256xf32>
      %77 = arith.addf %73, %76 : vector<32x256xf32>
      %cst_75 = arith.constant 0.000000e+00 : f32
      %78 = vector.broadcast %cst_75 : f32 to vector<32x256xf32>
      %79 = arith.maximumf %77, %78 : vector<32x256xf32>
      %80 = arith.truncf %79 : vector<32x256xf32> to vector<32x256xbf16>
      %c0_76 = arith.constant 0 : index
      %c0_77 = arith.constant 0 : index
      %c0_78 = arith.constant 0 : index
      %81 = vector.load %arg5[%c0_76, %c0_77, %c0_78] : memref<5x256x256xbf16, #tpu.memory_space<vmem>>, vector<1x256x256xbf16>
      %82 = vector.shape_cast %81 : vector<1x256x256xbf16> to vector<256x256xbf16>
      %cst_79 = arith.constant dense<0.000000e+00> : vector<32x256xf32>
      %83 = tpu.matmul %80, %82, %cst_79 {dimension_numbers = #tpu.dot_dimension_numbers<[1], [0], [0], [1], [0, 0, 1, 1], [], []>} : vector<32x256xbf16>, vector<256x256xbf16>, vector<32x256xf32> -> vector<32x256xf32>
      %84 = arith.addf %70, %83 : vector<32x256xf32>
      %c1_80 = arith.constant 1 : index
      %c0_81 = arith.constant 0 : index
      %c0_82 = arith.constant 0 : index
      %c0_83 = arith.constant 0 : index
      %85 = vector.load %arg10[%c1_80, %c0_81, %c0_82, %c0_83] : memref<4x4x8x256xf32, #tpu.memory_space<vmem>>, vector<1x4x8x256xf32>
      %86 = vector.shape_cast %85 : vector<1x4x8x256xf32> to vector<4x8x256xf32>
      %87 = vector.shape_cast %86 : vector<4x8x256xf32> to vector<32x256xf32>
      %c1_84 = arith.constant 1 : index
      %c0_85 = arith.constant 0 : index
      %c0_86 = arith.constant 0 : index
      %88 = vector.load %arg6[%c1_84, %c0_85, %c0_86] : memref<4x1x256xf32, #tpu.memory_space<vmem>>, vector<1x1x256xf32>
      %89 = vector.shape_cast %88 : vector<1x1x256xf32> to vector<1x256xf32>
      %90 = vector.broadcast %89 : vector<1x256xf32> to vector<32x256xf32>
      %91 = arith.addf %87, %90 : vector<32x256xf32>
      %cst_87 = arith.constant 0.000000e+00 : f32
      %92 = vector.broadcast %cst_87 : f32 to vector<32x256xf32>
      %93 = arith.maximumf %91, %92 : vector<32x256xf32>
      %94 = arith.truncf %93 : vector<32x256xf32> to vector<32x256xbf16>
      %c1_88 = arith.constant 1 : index
      %c0_89 = arith.constant 0 : index
      %c0_90 = arith.constant 0 : index
      %95 = vector.load %arg5[%c1_88, %c0_89, %c0_90] : memref<5x256x256xbf16, #tpu.memory_space<vmem>>, vector<1x256x256xbf16>
      %96 = vector.shape_cast %95 : vector<1x256x256xbf16> to vector<256x256xbf16>
      %cst_91 = arith.constant dense<0.000000e+00> : vector<32x256xf32>
      %97 = tpu.matmul %94, %96, %cst_91 {dimension_numbers = #tpu.dot_dimension_numbers<[1], [0], [0], [1], [0, 0, 1, 1], [], []>} : vector<32x256xbf16>, vector<256x256xbf16>, vector<32x256xf32> -> vector<32x256xf32>
      %98 = arith.addf %84, %97 : vector<32x256xf32>
      %c2_92 = arith.constant 2 : index
      %c0_93 = arith.constant 0 : index
      %c0_94 = arith.constant 0 : index
      %c0_95 = arith.constant 0 : index
      %99 = vector.load %arg10[%c2_92, %c0_93, %c0_94, %c0_95] : memref<4x4x8x256xf32, #tpu.memory_space<vmem>>, vector<1x4x8x256xf32>
      %100 = vector.shape_cast %99 : vector<1x4x8x256xf32> to vector<4x8x256xf32>
      %101 = vector.shape_cast %100 : vector<4x8x256xf32> to vector<32x256xf32>
      %c2_96 = arith.constant 2 : index
      %c0_97 = arith.constant 0 : index
      %c0_98 = arith.constant 0 : index
      %102 = vector.load %arg6[%c2_96, %c0_97, %c0_98] : memref<4x1x256xf32, #tpu.memory_space<vmem>>, vector<1x1x256xf32>
      %103 = vector.shape_cast %102 : vector<1x1x256xf32> to vector<1x256xf32>
      %104 = vector.broadcast %103 : vector<1x256xf32> to vector<32x256xf32>
      %105 = arith.addf %101, %104 : vector<32x256xf32>
      %cst_99 = arith.constant 0.000000e+00 : f32
      %106 = vector.broadcast %cst_99 : f32 to vector<32x256xf32>
      %107 = arith.maximumf %105, %106 : vector<32x256xf32>
      %108 = arith.truncf %107 : vector<32x256xf32> to vector<32x256xbf16>
      %c2_100 = arith.constant 2 : index
      %c0_101 = arith.constant 0 : index
      %c0_102 = arith.constant 0 : index
      %109 = vector.load %arg5[%c2_100, %c0_101, %c0_102] : memref<5x256x256xbf16, #tpu.memory_space<vmem>>, vector<1x256x256xbf16>
      %110 = vector.shape_cast %109 : vector<1x256x256xbf16> to vector<256x256xbf16>
      %cst_103 = arith.constant dense<0.000000e+00> : vector<32x256xf32>
      %111 = tpu.matmul %108, %110, %cst_103 {dimension_numbers = #tpu.dot_dimension_numbers<[1], [0], [0], [1], [0, 0, 1, 1], [], []>} : vector<32x256xbf16>, vector<256x256xbf16>, vector<32x256xf32> -> vector<32x256xf32>
      %112 = arith.addf %98, %111 : vector<32x256xf32>
      %c3_104 = arith.constant 3 : index
      %c0_105 = arith.constant 0 : index
      %c0_106 = arith.constant 0 : index
      %c0_107 = arith.constant 0 : index
      %113 = vector.load %arg10[%c3_104, %c0_105, %c0_106, %c0_107] : memref<4x4x8x256xf32, #tpu.memory_space<vmem>>, vector<1x4x8x256xf32>
      %114 = vector.shape_cast %113 : vector<1x4x8x256xf32> to vector<4x8x256xf32>
      %115 = vector.shape_cast %114 : vector<4x8x256xf32> to vector<32x256xf32>
      %c3_108 = arith.constant 3 : index
      %c0_109 = arith.constant 0 : index
      %c0_110 = arith.constant 0 : index
      %116 = vector.load %arg6[%c3_108, %c0_109, %c0_110] : memref<4x1x256xf32, #tpu.memory_space<vmem>>, vector<1x1x256xf32>
      %117 = vector.shape_cast %116 : vector<1x1x256xf32> to vector<1x256xf32>
      %118 = vector.broadcast %117 : vector<1x256xf32> to vector<32x256xf32>
      %119 = arith.addf %115, %118 : vector<32x256xf32>
      %cst_111 = arith.constant 0.000000e+00 : f32
      %120 = vector.broadcast %cst_111 : f32 to vector<32x256xf32>
      %121 = arith.maximumf %119, %120 : vector<32x256xf32>
      %122 = arith.truncf %121 : vector<32x256xf32> to vector<32x256xbf16>
      %c3_112 = arith.constant 3 : index
      %c0_113 = arith.constant 0 : index
      %c0_114 = arith.constant 0 : index
      %123 = vector.load %arg5[%c3_112, %c0_113, %c0_114] : memref<5x256x256xbf16, #tpu.memory_space<vmem>>, vector<1x256x256xbf16>
      %124 = vector.shape_cast %123 : vector<1x256x256xbf16> to vector<256x256xbf16>
      %cst_115 = arith.constant dense<0.000000e+00> : vector<32x256xf32>
      %125 = tpu.matmul %122, %124, %cst_115 {dimension_numbers = #tpu.dot_dimension_numbers<[1], [0], [0], [1], [0, 0, 1, 1], [], []>} : vector<32x256xbf16>, vector<256x256xbf16>, vector<32x256xf32> -> vector<32x256xf32>
      %126 = arith.addf %112, %125 : vector<32x256xf32>
      %127 = vector.broadcast %69 : vector<1x256xf32> to vector<32x256xf32>
      %128 = arith.addf %126, %127 : vector<32x256xf32>
      %cst_116 = arith.constant 0.000000e+00 : f32
      %129 = vector.broadcast %cst_116 : f32 to vector<32x256xf32>
      %130 = arith.maximumf %128, %129 : vector<32x256xf32>
      %131 = vector.shape_cast %130 : vector<32x256xf32> to vector<4x8x256xf32>
      %132 = vector.extract_strided_slice %131 {offsets = [0, 0, 0], sizes = [4, 4, 256], strides = [1, 1, 1]} : vector<4x8x256xf32> to vector<4x4x256xf32>
      %133 = arith.truncf %132 : vector<4x4x256xf32> to vector<4x4x256xbf16>
      %c0_117 = arith.constant 0 : index
      %c0_118 = arith.constant 0 : index
      %c0_119 = arith.constant 0 : index
      %c0_120 = arith.constant 0 : index
      %134 = vector.load %arg9[%c0_117, %c0_118, %c0_119, %c0_120] : memref<1x4x4x256xbf16, #tpu.memory_space<vmem>>, vector<1x4x4x256xbf16>
      %135 = vector.shape_cast %134 : vector<1x4x4x256xbf16> to vector<4x4x256xbf16>
      %136 = vector.shape_cast %133 : vector<4x4x256xbf16> to vector<1x4x4x256xbf16>
      tpu.vector_store %arg9[%c0_117, %c0_118, %c0_119, %c0_120], %136 {strides = array<i32>} : memref<1x4x4x256xbf16, #tpu.memory_space<vmem>>, vector<1x4x4x256xbf16>,
    } else {
    }
    return
  }
  func.func @transform_0(%arg0: i32, %arg1: i32) -> (i32, i32, i32, i32) {
    %c0_i32 = arith.constant 0 : i32
    %c0_i32_0 = arith.constant 0 : i32
    %c0_i32_1 = arith.constant 0 : i32
    return %arg0, %c0_i32, %c0_i32_0, %arg1 : i32, i32, i32, i32
  }
  func.func @transform_1(%arg0: i32, %arg1: i32) -> (i32, i32, i32) {
    %c0_i32 = arith.constant 0 : i32
    %c0_i32_0 = arith.constant 0 : i32
    %c0_i32_1 = arith.constant 0 : i32
    return %c0_i32, %arg1, %c0_i32_0 : i32, i32, i32
  }
  func.func @transform_2(%arg0: i32, %arg1: i32) -> (i32, i32) {
    %c0_i32 = arith.constant 0 : i32
    %c0_i32_0 = arith.constant 0 : i32
    return %arg1, %c0_i32 : i32, i32
  }
  func.func @transform_3(%arg0: i32, %arg1: i32) -> (i32, i32, i32) {
    %c0_i32 = arith.constant 0 : i32
    %c0_i32_0 = arith.constant 0 : i32
    %c0_i32_1 = arith.constant 0 : i32
    %c0_i32_2 = arith.constant 0 : i32
    return %c0_i32, %c0_i32_0, %c0_i32_1 : i32, i32, i32
  }
  func.func @transform_4(%arg0: i32, %arg1: i32) -> (i32, i32, i32) {
    %c0_i32 = arith.constant 0 : i32
    %c0_i32_0 = arith.constant 0 : i32
    %c0_i32_1 = arith.constant 0 : i32
    %c0_i32_2 = arith.constant 0 : i32
    return %c0_i32, %c0_i32_0, %c0_i32_1 : i32, i32, i32
  }
  func.func @transform_5(%arg0: i32, %arg1: i32) -> (i32, i32) {
    %c0_i32 = arith.constant 0 : i32
    %c0_i32_0 = arith.constant 0 : i32
    %c0_i32_1 = arith.constant 0 : i32
    return %c0_i32, %c0_i32_0 : i32, i32
  }
  func.func @transform_6(%arg0: i32, %arg1: i32) -> (i32, i32) {
    %c0_i32 = arith.constant 0 : i32
    %c0_i32_0 = arith.constant 0 : i32
    %c0_i32_1 = arith.constant 0 : i32
    return %c0_i32, %c0_i32_0 : i32, i32
  }
  func.func @transform_7(%arg0: i32, %arg1: i32) -> (i32, i32, i32, i32) {
    %c0_i32 = arith.constant 0 : i32
    %c0_i32_0 = arith.constant 0 : i32
    %c0_i32_1 = arith.constant 0 : i32
    %c0_i32_2 = arith.constant 0 : i32
    return %arg0, %c0_i32, %c0_i32_0, %c0_i32_1 : i32, i32, i32, i32
  }
}

</mosaic_0001>

<llo_original>
// kernel: tpu_custom_call.1
$region0: #{tpu_custom_call.1}
  #allocation0 [shape = 'u32[]', space=smem, size = 0x4, offset = 0x4, fixed_abs, tag = 'smem constant byte address 0x4 - core index']
  #allocation1 [shape = 'u32[144,128]{1,0:T(1,128)}', space=vmem, size = 0x12000, scoped, tag = 'internal scratch']
  #allocation2 [shape = 'f32[4,4,8,256]{3,2,1,0:T(8,128)}', space=vmem, size = 0x20000, scoped, tag = 'scratch operand']
  #allocation3 [shape = 'f32[1,256]{1,0:T(1,128)}', space=vmem, size = 0x400, scoped, tag = 'scratch operand']
  #allocation17 [shape = 's32[]', space=sflag, size = 0x4, offset = 0, fixed_abs, tag = 'sflag constant byte address 0x0 - dummy sync flag']
  %s0 = inlined_call_operand.hbm [shape: bf16[2,4,8,2048], index: 0, kind: input, shape index: {}]
  %s1 = inlined_call_operand.hbm [shape: bf16[4,2048,256], index: 1, kind: input, shape index: {}]
  %s2 = inlined_call_operand.hbm [shape: bf16[2048,256], index: 2, kind: input, shape index: {}]
  %s3 = inlined_call_operand.hbm [shape: bf16[5,256,256], index: 3, kind: input, shape index: {}]
  %s4 = inlined_call_operand.hbm [shape: f32[4,1,256], index: 4, kind: input, shape index: {}]
  %s5 = inlined_call_operand.hbm [shape: f32[1,256], index: 5, kind: input, shape index: {}]
  %s6 = inlined_call_operand.hbm [shape: f32[1,256], index: 6, kind: input, shape index: {}]
  %s7 = inlined_call_operand.hbm [shape: bf16[2,4,4,256], index: 7, kind: output, shape index: {}]
  %s8 = sld [smem:[#allocation0]]
  $region97: #{tpu_custom_call.1} parent=0
    _
  %s10 = ssub.s32 1, %s8
  %s11 = scalar_select 0, %s10, %s8
  $region1: #{tpu_custom_call.1} parent=0
    #allocation4 [shape = 'u8[32768]{0}', space=vmem, size = 0x8000, scoped, tag = 'input window, operand 0']
    #allocation5 [shape = 's32[2]{0}', space=sflag, size = 0x8, scoped, tag = 'scoped memory for tpu_custom_call.1']
    #allocation6 [shape = 's32[2]{0}', space=sflag, size = 0x8, scoped, tag = 'scoped memory for tpu_custom_call.1']
    #allocation7 [shape = 'u8[1048576]{0}', space=vmem, size = 0x100000, scoped, tag = 'input window, operand 1']
    #allocation8 [shape = 's32[2]{0}', space=sflag, size = 0x8, scoped, tag = 'scoped memory for tpu_custom_call.1']
    #allocation9 [shape = 'u8[262144]{0}', space=vmem, size = 0x40000, scoped, tag = 'input window, operand 2']
    #allocation10 [shape = 'u8[655360]{0}', space=vmem, size = 0xa0000, scoped, tag = 'input window, operand 3, single buffered']
    #allocation11 [shape = 's32[1]{0}', space=sflag, size = 0x4, scoped, tag = 'scoped memory for tpu_custom_call.1']
    #allocation12 [shape = 'u8[4096]{0}', space=vmem, size = 0x1000, scoped, tag = 'input window, operand 4, single buffered']
    #allocation13 [shape = 'u8[1024]{0}', space=vmem, size = 0x400, scoped, tag = 'input window, operand 5, single buffered']
    #allocation14 [shape = 's32[1]{0}', space=sflag, size = 0x4, scoped, tag = 'scoped memory for tpu_custom_call.1']
    #allocation15 [shape = 'u8[1024]{0}', space=vmem, size = 0x400, scoped, tag = 'input window, operand 6, single buffered']
    #allocation16 [shape = 'u8[16384]{0}', space=vmem, size = 0x4000, scoped, tag = 'output window, operand 0']
    %12 = vsyncpa [#allocation5], 0
    %s13 = scalar_lea.sflag [#allocation5], 1
    %14 = vsyncpa %s13, 0
    %15 = vsyncpa [#allocation8], 0
    %s16 = scalar_lea.sflag [#allocation8], 1
    %17 = vsyncpa %s16, 0
    %18 = vsyncpa [#allocation11], 0
    %19 = vsyncpa [#allocation14], 0
    %20 = vsyncpa [#allocation6], 0
    %s21 = scalar_lea.sflag [#allocation6], 1
    %22 = vsyncpa %s21, 0
    loop: start=0, step=1, limit=18
    $region2: #{tpu_custom_call.1} parent=1 // loop_pre_header
      _
    $region3: #{tpu_custom_call.1} parent=1 // loop_header
      %s24 = sphi 0, %s28
      %p25 = scmp.ge.s32.totalorder %s24, 18
      %s31 = sphi 0, %s43
      %s32 = sphi 0, %s39
      %s33 = sphi 0, %s31
      %s34 = sphi 0, %s32
      %s35 = sphi 0, %s33
      %s36 = sphi 0, %s34
      %s48 = sphi 0, %s50
      %s51 = sphi 0, %s48
      %s52 = sphi 0, %s51
      %s68 = sphi 0, %s52
      %s74 = sphi 0, %s76
      %s77 = sphi 0, %s74
      %s78 = sphi 0, %s77
      %s94 = sphi 0, %s78
      %s100 = sphi 0, %s102
      %s103 = sphi 0, %s100
      %s104 = sphi 0, %s103
      %s120 = sphi 0, %s104
      %s124 = sphi 0, %s124
      %s126 = sphi 0, %s124
      %s127 = sphi 0, %s126
      %s141 = sphi 0, %s127
      %s145 = sphi 0, %s145
      %s147 = sphi 0, %s145
      %s148 = sphi 0, %s147
      %s162 = sphi 0, %s148
      %s166 = sphi 0, %s166
      %s168 = sphi 0, %s166
      %s169 = sphi 0, %s168
      %s183 = sphi 0, %s169
      %s187 = sphi 0, %s187
      %s189 = sphi 0, %s187
      %s190 = sphi 0, %s189
      %s204 = sphi 0, %s190
      %s210 = sphi 0, %s212
      %s213 = sphi 0, %s210
      %s214 = sphi 0, %s213
      %s230 = sphi 0, %s214
    $region4: #{tpu_custom_call.1} parent=1 // loop_header_branch
      %27 = sbr.rel (%p25) target = $region8
    $region5: #{tpu_custom_call.1} parent=1 // loop_body
      %s29 = ssub.s32 %s24, 1
      %s30 = ssub.s32 %s24, 2
      %s37 = sadd.s32 1, %s32
      %p38 = scmp.ge.s32.totalorder %s37, 8
      %s39 = scalar_select %p38, 0, %s37
      %s40 = sadd.s32 1, %s31
      %s41 = scalar_select %p38, %s40, %s31
      %p42 = scmp.ge.s32.totalorder %s41, 2
      %s43 = scalar_select %p42, 0, %s41
      %s44 = ssub.s32 %s31, %s43
      %s45 = ssub.s32 %s32, %s39
      %s46 = sor.u32 %s44, %s45
      %p47 = scmp.eq.s32.totalorder %s46, 0
      %s49 = sadd.s32 %s48, 1
      %s50 = scalar_select %p47, %s48, %s49
      %p53 = pneg %p47
      %p54 = scmp.eq.s32.totalorder %s24, 15
      %p55 = por %p53, %p54
      %p56 = scmp.ne.s32.totalorder %s48, %s51
      %p57 = scmp.eq.s32.totalorder %s24, 0
      %p58 = por %p56, %p57
      %p59 = scmp.ne.s32.totalorder %s48, %s51
      %p60 = scmp.eq.s32.totalorder %s29, 15
      %p61 = por %p59, %p60
      %p62 = scmp.ne.s32.totalorder %s51, %s52
      %p63 = scmp.eq.s32.totalorder %s29, 0
      %p64 = por %p62, %p63
      %p65 = scmp.ne.s32.totalorder %s51, %s52
      %p66 = scmp.eq.s32.totalorder %s30, 15
      %p67 = por %p65, %p66
      %p69 = scmp.ne.s32.totalorder %s52, %s68
      %p70 = scmp.eq.s32.totalorder %s30, 0
      %p71 = por %p69, %p70
      %s72 = ssub.s32 %s32, %s39
      %p73 = scmp.eq.s32.totalorder %s72, 0
      %s75 = sadd.s32 %s74, 1
      %s76 = scalar_select %p73, %s74, %s75
      %p79 = pneg %p73
      %p80 = scmp.eq.s32.totalorder %s24, 15
      %p81 = por %p79, %p80
      %p82 = scmp.ne.s32.totalorder %s74, %s77
      %p83 = scmp.eq.s32.totalorder %s24, 0
      %p84 = por %p82, %p83
      %p85 = scmp.ne.s32.totalorder %s74, %s77
      %p86 = scmp.eq.s32.totalorder %s29, 15
      %p87 = por %p85, %p86
      %p88 = scmp.ne.s32.totalorder %s77, %s78
      %p89 = scmp.eq.s32.totalorder %s29, 0
      %p90 = por %p88, %p89
      %p91 = scmp.ne.s32.totalorder %s77, %s78
      %p92 = scmp.eq.s32.totalorder %s30, 15
      %p93 = por %p91, %p92
      %p95 = scmp.ne.s32.totalorder %s78, %s94
      %p96 = scmp.eq.s32.totalorder %s30, 0
      %p97 = por %p95, %p96
      %s98 = ssub.s32 %s32, %s39
      %p99 = scmp.eq.s32.totalorder %s98, 0
      %s101 = sadd.s32 %s100, 1
      %s102 = scalar_select %p99, %s100, %s101
      %p105 = pneg %p99
      %p106 = scmp.eq.s32.totalorder %s24, 15
      %p107 = por %p105, %p106
      %p108 = scmp.ne.s32.totalorder %s100, %s103
      %p109 = scmp.eq.s32.totalorder %s24, 0
      %p110 = por %p108, %p109
      %p111 = scmp.ne.s32.totalorder %s100, %s103
      %p112 = scmp.eq.s32.totalorder %s29, 15
      %p113 = por %p111, %p112
      %p114 = scmp.ne.s32.totalorder %s103, %s104
      %p115 = scmp.eq.s32.totalorder %s29, 0
      %p116 = por %p114, %p115
      %p117 = scmp.ne.s32.totalorder %s103, %s104
      %p118 = scmp.eq.s32.totalorder %s30, 15
      %p119 = por %p117, %p118
      %p121 = scmp.ne.s32.totalorder %s104, %s120
      %p122 = scmp.eq.s32.totalorder %s30, 0
      %p123 = por %p121, %p122
      %s125 = sadd.s32 %s124, 1
      %p128 = scmp.eq.s32.totalorder %s24, 15
      %p129 = scmp.ne.s32.totalorder %s124, %s126
      %p130 = scmp.eq.s32.totalorder %s24, 0
      %p131 = por %p129, %p130
      %p132 = scmp.ne.s32.totalorder %s124, %s126
      %p133 = scmp.eq.s32.totalorder %s29, 15
      %p134 = por %p132, %p133
      %p135 = scmp.ne.s32.totalorder %s126, %s127
      %p136 = scmp.eq.s32.totalorder %s29, 0
      %p137 = por %p135, %p136
      %p138 = scmp.ne.s32.totalorder %s126, %s127
      %p139 = scmp.eq.s32.totalorder %s30, 15
      %p140 = por %p138, %p139
      %p142 = scmp.ne.s32.totalorder %s127, %s141
      %p143 = scmp.eq.s32.totalorder %s30, 0
      %p144 = por %p142, %p143
      %s146 = sadd.s32 %s145, 1
      %p149 = scmp.eq.s32.totalorder %s24, 15
      %p150 = scmp.ne.s32.totalorder %s145, %s147
      %p151 = scmp.eq.s32.totalorder %s24, 0
      %p152 = por %p150, %p151
      %p153 = scmp.ne.s32.totalorder %s145, %s147
      %p154 = scmp.eq.s32.totalorder %s29, 15
      %p155 = por %p153, %p154
      %p156 = scmp.ne.s32.totalorder %s147, %s148
      %p157 = scmp.eq.s32.totalorder %s29, 0
      %p158 = por %p156, %p157
      %p159 = scmp.ne.s32.totalorder %s147, %s148
      %p160 = scmp.eq.s32.totalorder %s30, 15
      %p161 = por %p159, %p160
      %p163 = scmp.ne.s32.totalorder %s148, %s162
      %p164 = scmp.eq.s32.totalorder %s30, 0
      %p165 = por %p163, %p164
      %s167 = sadd.s32 %s166, 1
      %p170 = scmp.eq.s32.totalorder %s24, 15
      %p171 = scmp.ne.s32.totalorder %s166, %s168
      %p172 = scmp.eq.s32.totalorder %s24, 0
      %p173 = por %p171, %p172
      %p174 = scmp.ne.s32.totalorder %s166, %s168
      %p175 = scmp.eq.s32.totalorder %s29, 15
      %p176 = por %p174, %p175
      %p177 = scmp.ne.s32.totalorder %s168, %s169
      %p178 = scmp.eq.s32.totalorder %s29, 0
      %p179 = por %p177, %p178
      %p180 = scmp.ne.s32.totalorder %s168, %s169
      %p181 = scmp.eq.s32.totalorder %s30, 15
      %p182 = por %p180, %p181
      %p184 = scmp.ne.s32.totalorder %s169, %s183
      %p185 = scmp.eq.s32.totalorder %s30, 0
      %p186 = por %p184, %p185
      %s188 = sadd.s32 %s187, 1
      %p191 = scmp.eq.s32.totalorder %s24, 15
      %p192 = scmp.ne.s32.totalorder %s187, %s189
      %p193 = scmp.eq.s32.totalorder %s24, 0
      %p194 = por %p192, %p193
      %p195 = scmp.ne.s32.totalorder %s187, %s189
      %p196 = scmp.eq.s32.totalorder %s29, 15
      %p197 = por %p195, %p196
      %p198 = scmp.ne.s32.totalorder %s189, %s190
      %p199 = scmp.eq.s32.totalorder %s29, 0
      %p200 = por %p198, %p199
      %p201 = scmp.ne.s32.totalorder %s189, %s190
      %p202 = scmp.eq.s32.totalorder %s30, 15
      %p203 = por %p201, %p202
      %p205 = scmp.ne.s32.totalorder %s190, %s204
      %p206 = scmp.eq.s32.totalorder %s30, 0
      %p207 = por %p205, %p206
      %s208 = ssub.s32 %s31, %s43
      %p209 = scmp.eq.s32.totalorder %s208, 0
      %s211 = sadd.s32 %s210, 1
      %s212 = scalar_select %p209, %s210, %s211
      %p215 = pneg %p209
      %p216 = scmp.eq.s32.totalorder %s24, 15
      %p217 = por %p215, %p216
      %p218 = scmp.ne.s32.totalorder %s210, %s213
      %p219 = scmp.eq.s32.totalorder %s24, 0
      %p220 = por %p218, %p219
      %p221 = scmp.ne.s32.totalorder %s210, %s213
      %p222 = scmp.eq.s32.totalorder %s29, 15
      %p223 = por %p221, %p222
      %p224 = scmp.ne.s32.totalorder %s213, %s214
      %p225 = scmp.eq.s32.totalorder %s29, 0
      %p226 = por %p224, %p225
      %p227 = scmp.ne.s32.totalorder %s213, %s214
      %p228 = scmp.eq.s32.totalorder %s30, 15
      %p229 = por %p227, %p228
      %p231 = scmp.ne.s32.totalorder %s214, %s230
      %p232 = scmp.eq.s32.totalorder %s30, 0
      %p233 = por %p231, %p232
      %p234 = scmp.le.s32.totalorder 1, %s24
      %p235 = scmp.lt.s32.totalorder %s24, 17
      %p236 = pnand %p234, %p235
      %p237 = pneg %p236
      // Predicated region
      $region9: #{tpu_custom_call.1} parent=5 // pred_check
        _
      $region10: #{tpu_custom_call.1} parent=5 // pred_check_branch
        %239 = sbr.rel (%p236) target = $region12
      $region11: #{tpu_custom_call.1} parent=5 // pred_region
        %s240 = ssub.s32 %s24, 1
        // Predicated region
        $region13: #{tpu_custom_call.1} parent=11 // pred_check
          %p241 = pneg %p137
        $region14: #{tpu_custom_call.1} parent=11 // pred_check_branch
          %243 = sbr.rel (%p241) target = $region16
        $region15: #{tpu_custom_call.1} parent=11 // pred_region
          %s245 = ssub.s32 20480, 20480
          %246 = vsyncadd [#allocation11], %s245
          %s247 = sshll.u32 [#allocation10], 4
          %s248 = int_to_ptr.vmem [resolvable:$true] %s247
          %253 = dma.hbm_to_vmem [thread:$0]  %s3, 20480, %s248, [#allocation11], 128, 128, 8
        $region16: #{tpu_custom_call.1} parent=11 // pred_fallthru
          _
        // Predicated region
        $region17: #{tpu_custom_call.1} parent=11 // pred_check
          %p254 = pneg %p158
        $region18: #{tpu_custom_call.1} parent=11 // pred_check_branch
          %256 = sbr.rel (%p254) target = $region20
        $region19: #{tpu_custom_call.1} parent=11 // pred_region
          %s258 = ssub.s32 128, 128
          %259 = vsyncadd [#allocation11], %s258
          %s260 = sshll.u32 [#allocation12], 4
          %s261 = int_to_ptr.vmem [resolvable:$true] %s260
          %266 = dma.hbm_to_vmem [thread:$0]  %s4, 128, %s261, [#allocation11], 32, 32, 2
        $region20: #{tpu_custom_call.1} parent=11 // pred_fallthru
          _
        // Predicated region
        $region21: #{tpu_custom_call.1} parent=11 // pred_check
          %p267 = pneg %p179
        $region22: #{tpu_custom_call.1} parent=11 // pred_check_branch
          %269 = sbr.rel (%p267) target = $region24
        $region23: #{tpu_custom_call.1} parent=11 // pred_region
          %s271 = ssub.s32 32, 32
          %272 = vsyncadd [#allocation14], %s271
          %s274 = sshll.u32 [#allocation13], 4
          %s275 = int_to_ptr.vmem [resolvable:$true] %s274
          %277 = dma.hbm_to_vmem [thread:$0]  %s5, 32, %s275, [#allocation14]
        $region24: #{tpu_custom_call.1} parent=11 // pred_fallthru
          _
        // Predicated region
        $region25: #{tpu_custom_call.1} parent=11 // pred_check
          %p278 = pneg %p200
        $region26: #{tpu_custom_call.1} parent=11 // pred_check_branch
          %280 = sbr.rel (%p278) target = $region28
        $region27: #{tpu_custom_call.1} parent=11 // pred_region
          %s282 = ssub.s32 32, 32
          %283 = vsyncadd [#allocation14], %s282
          %s285 = sshll.u32 [#allocation15], 4
          %s286 = int_to_ptr.vmem [resolvable:$true] %s285
          %288 = dma.hbm_to_vmem [thread:$0]  %s6, 32, %s286, [#allocation14]
        $region28: #{tpu_custom_call.1} parent=11 // pred_fallthru
          _
      $region12: #{tpu_custom_call.1} parent=5 // pred_fallthru
        _
      %p289 = scmp.lt.s32.totalorder %s24, 16
      // Predicated region
      $region29: #{tpu_custom_call.1} parent=5 // pred_check
        %p290 = pneg %p289
      $region30: #{tpu_custom_call.1} parent=5 // pred_check_branch
        %292 = sbr.rel (%p290) target = $region32
      $region31: #{tpu_custom_call.1} parent=5 // pred_region
        // Predicated region
        $region33: #{tpu_custom_call.1} parent=31 // pred_check
          %p293 = pneg %p58
        $region34: #{tpu_custom_call.1} parent=31 // pred_check_branch
          %295 = sbr.rel (%p293) target = $region36
        $region35: #{tpu_custom_call.1} parent=31 // pred_region
          %s296 = sand.u32 %s48, 1
          %s297 = scalar_lea.sflag [#allocation5], %s296
          %s298 = sand.u32 %s48, 1
          %s299 = smul.addr %s298, 32
          %s300 = scalar_lea.vmem [#allocation4], %s299
          %s301 = smul.u32 2, %s32
          %s303 = ssub.s32 512, 512
          %304 = vsyncadd %s297, %s303
          %s305 = smul.addr %s31, 64
          %s306 = sadd.s32 %s301, %s305
          %s307 = smul.addr %s306, 64
          %s308 = scalar_lea.hbm %s0, %s307
          %s309 = sshll.u32 %s300, 4
          %s310 = int_to_ptr.vmem [resolvable:$true] %s309
          %315 = dma.hbm_to_vmem [thread:$0]  %s308, 512, %s310, %s297, 1024, 128, 8
        $region36: #{tpu_custom_call.1} parent=31 // pred_fallthru
          _
        // Predicated region
        $region37: #{tpu_custom_call.1} parent=31 // pred_check
          %p316 = pneg %p84
        $region38: #{tpu_custom_call.1} parent=31 // pred_check_branch
          %318 = sbr.rel (%p316) target = $region40
        $region39: #{tpu_custom_call.1} parent=31 // pred_region
          #allocation18 [shape = 'u32[6]{0}', space=smem, size = 0x18, scoped, tag = 'DMA stride descriptor']
          %s319 = sand.u32 %s24, 1
          %s320 = scalar_lea.sflag [#allocation8], %s319
          %s321 = sand.u32 %s74, 1
          %s322 = smul.addr %s321, 1024
          %s323 = scalar_lea.vmem [#allocation7], %s322
          %s324 = smul.u32 32, %s32
          %s326 = ssub.s32 16384, 16384
          %327 = vsyncadd %s320, %s326
          %s328 = smul.addr %s324, 2
          %s329 = smul.addr %s328, 64
          %s330 = scalar_lea.hbm %s1, %s329
          %s332 = sshll.u32 1, 14
          %s333 = sxor.u32 4294967295, %s332
          %s335 = sld [smem:[#allocation0]]
          %s336 = sadd.s32 2, %s335
          %s338 = sshll.u32 7, 26
          %s339 = sxor.u32 4294967295, %s338
          %s340 = sand.u32 0, %s339
          %s341 = sshll.u32 %s336, 26
          %s342 = sor.u32 %s340, %s341
          %s343 = sshll.u32 %s323, 4
          %s344 = int_to_ptr.vmem [resolvable:$true] %s343
          %350 = sst [smem:[#allocation18]] 32768
          %s351 = scalar_lea.smem [#allocation18], 1
          %352 = sst [smem:[%s351]] 4096
          %s353 = scalar_lea.smem [#allocation18], 2
          %354 = sst [smem:[%s353]] 32
          %s355 = scalar_lea.smem [#allocation18], 3
          %356 = sst [smem:[%s355]] 128
          %s357 = scalar_lea.smem [#allocation18], 4
          %358 = sst [smem:[%s357]] 128
          %s359 = scalar_lea.smem [#allocation18], 5
          %360 = sst [smem:[%s359]] 8
          %362 = dma.general %s330, 16384, %s344, %s320, 131072, [#allocation18], %s342, 0
        $region40: #{tpu_custom_call.1} parent=31 // pred_fallthru
          _
        // Predicated region
        $region41: #{tpu_custom_call.1} parent=31 // pred_check
          %p363 = pneg %p110
        $region42: #{tpu_custom_call.1} parent=31 // pred_check_branch
          %365 = sbr.rel (%p363) target = $region44
        $region43: #{tpu_custom_call.1} parent=31 // pred_region
          %s366 = sand.u32 %s24, 1
          %s367 = scalar_lea.sflag [#allocation8], %s366
          %s368 = sand.u32 %s100, 1
          %s369 = smul.addr %s368, 256
          %s370 = scalar_lea.vmem [#allocation9], %s369
          %s371 = smul.u32 32, %s32
          %s373 = ssub.s32 4096, 4096
          %374 = vsyncadd %s367, %s373
          %s375 = smul.addr %s371, 2
          %s376 = smul.addr %s375, 64
          %s377 = scalar_lea.hbm %s2, %s376
          %s378 = sshll.u32 %s370, 4
          %s379 = int_to_ptr.vmem [resolvable:$true] %s378
          %384 = dma.hbm_to_vmem [thread:$0]  %s377, 4096, %s379, %s367, 128, 128, 8
        $region44: #{tpu_custom_call.1} parent=31 // pred_fallthru
          _
      $region32: #{tpu_custom_call.1} parent=5 // pred_fallthru
        _
      %p385 = scmp.le.s32.totalorder 1, %s24
      %p386 = scmp.lt.s32.totalorder %s24, 17
      %p387 = pnand %p385, %p386
      %p388 = pneg %p387
      // Predicated region
      $region45: #{tpu_custom_call.1} parent=5 // pred_check
        _
      $region46: #{tpu_custom_call.1} parent=5 // pred_check_branch
        %390 = sbr.rel (%p387) target = $region48
      $region47: #{tpu_custom_call.1} parent=5 // pred_region
        %s391 = ssub.s32 %s24, 1
        %s392 = sand.u32 %s51, 1
        %s393 = scalar_lea.sflag [#allocation5], %s392
        %s394 = sand.u32 %s51, 1
        %s395 = smul.addr %s394, 32
        %s396 = scalar_lea.vmem [#allocation4], %s395
        // Predicated region
        $region49: #{tpu_custom_call.1} parent=47 // pred_check
          %p397 = pneg %p64
        $region50: #{tpu_custom_call.1} parent=47 // pred_check_branch
          %399 = sbr.rel (%p397) target = $region52
        $region51: #{tpu_custom_call.1} parent=47 // pred_region
          %400 = dma.done %s393, 512
        $region52: #{tpu_custom_call.1} parent=47 // pred_fallthru
          _
        %s401 = sand.u32 %s29, 1
        %s402 = scalar_lea.sflag [#allocation8], %s401
        %s403 = sand.u32 %s77, 1
        %s404 = smul.addr %s403, 1024
        %s405 = scalar_lea.vmem [#allocation7], %s404
        // Predicated region
        $region53: #{tpu_custom_call.1} parent=47 // pred_check
          %p406 = pneg %p90
        $region54: #{tpu_custom_call.1} parent=47 // pred_check_branch
          %408 = sbr.rel (%p406) target = $region56
        $region55: #{tpu_custom_call.1} parent=47 // pred_region
          %409 = dma.done %s402, 16384
        $region56: #{tpu_custom_call.1} parent=47 // pred_fallthru
          _
        %s410 = sand.u32 %s29, 1
        %s411 = scalar_lea.sflag [#allocation8], %s410
        %s412 = sand.u32 %s103, 1
        %s413 = smul.addr %s412, 256
        %s414 = scalar_lea.vmem [#allocation9], %s413
        // Predicated region
        $region57: #{tpu_custom_call.1} parent=47 // pred_check
          %p415 = pneg %p116
        $region58: #{tpu_custom_call.1} parent=47 // pred_check_branch
          %417 = sbr.rel (%p415) target = $region60
        $region59: #{tpu_custom_call.1} parent=47 // pred_region
          %418 = dma.done %s411, 4096
        $region60: #{tpu_custom_call.1} parent=47 // pred_fallthru
          _
        // Predicated region
        $region61: #{tpu_custom_call.1} parent=47 // pred_check
          %p419 = pneg %p137
        $region62: #{tpu_custom_call.1} parent=47 // pred_check_branch
          %421 = sbr.rel (%p419) target = $region64
        $region63: #{tpu_custom_call.1} parent=47 // pred_region
          %422 = dma.done [#allocation11], 20480
        $region64: #{tpu_custom_call.1} parent=47 // pred_fallthru
          _
        // Predicated region
        $region65: #{tpu_custom_call.1} parent=47 // pred_check
          %p423 = pneg %p158
        $region66: #{tpu_custom_call.1} parent=47 // pred_check_branch
          %425 = sbr.rel (%p423) target = $region68
        $region67: #{tpu_custom_call.1} parent=47 // pred_region
          %426 = dma.done [#allocation11], 128
        $region68: #{tpu_custom_call.1} parent=47 // pred_fallthru
          _
        // Predicated region
        $region69: #{tpu_custom_call.1} parent=47 // pred_check
          %p427 = pneg %p179
        $region70: #{tpu_custom_call.1} parent=47 // pred_check_branch
          %429 = sbr.rel (%p427) target = $region72
        $region71: #{tpu_custom_call.1} parent=47 // pred_region
          %430 = dma.done [#allocation14], 32
        $region72: #{tpu_custom_call.1} parent=47 // pred_fallthru
          _
        // Predicated region
        $region73: #{tpu_custom_call.1} parent=47 // pred_check
          %p431 = pneg %p200
        $region74: #{tpu_custom_call.1} parent=47 // pred_check_branch
          %433 = sbr.rel (%p431) target = $region76
        $region75: #{tpu_custom_call.1} parent=47 // pred_region
          %434 = dma.done [#allocation14], 32
        $region76: #{tpu_custom_call.1} parent=47 // pred_fallthru
          _
        %s435 = sand.u32 %s51, 1
        %s436 = scalar_lea.sflag [#allocation5], %s435
        %s437 = sand.u32 %s51, 1
        %s438 = smul.addr %s437, 32
        %s439 = scalar_lea.vmem [#allocation4], %s438
        %p440 = pneg %p64
        %p441 = pneg %p61
        %s442 = sand.u32 %s29, 1
        %s443 = scalar_lea.sflag [#allocation8], %s442
        %s444 = sand.u32 %s77, 1
        %s445 = smul.addr %s444, 1024
        %s446 = scalar_lea.vmem [#allocation7], %s445
        %p447 = pneg %p90
        %p448 = pneg %p87
        %s449 = sand.u32 %s29, 1
        %s450 = scalar_lea.sflag [#allocation8], %s449
        %s451 = sand.u32 %s103, 1
        %s452 = smul.addr %s451, 256
        %s453 = scalar_lea.vmem [#allocation9], %s452
        %p454 = pneg %p116
        %p455 = pneg %p113
        %p456 = pneg %p137
        %p457 = pneg %p134
        %p458 = pneg %p158
        %p459 = pneg %p155
        %p460 = pneg %p179
        %p461 = pneg %p176
        %p462 = pneg %p200
        %p463 = pneg %p197
        %p464 = pneg %p226
        %p465 = pneg %p223
        %s466 = sand.u32 %s213, 1
        %s467 = scalar_lea.sflag [#allocation6], %s466
        %s468 = sand.u32 %s213, 1
        %s469 = smul.addr %s468, 16
        %s470 = scalar_lea.vmem [#allocation16], %s469
        %s471 = smul.u32 2, %s34
        %s472 = smul.u32 32, %s34
        %s473 = smul.u32 32, %s34
        %p474 = scmp.eq.s32.totalorder %s34, 0
        // Predicated region
        $region77: #{tpu_custom_call.1} parent=47 // pred_check
          %p475 = pneg %p474
        $region78: #{tpu_custom_call.1} parent=47 // pred_check_branch
          %477 = sbr.rel (%p475) target = $region80
        $region79: #{tpu_custom_call.1} parent=47 // pred_region
          %478 = vst [vmem:[#allocation2] sm:$0xff] 0.0
          %479 = vst [vmem:[#allocation2 + $0x8] sm:$0xff] 0.0
          %480 = vst [vmem:[#allocation2 + $0x10] sm:$0xff] 0.0
          %481 = vst [vmem:[#allocation2 + $0x18] sm:$0xff] 0.0
          %482 = vst [vmem:[#allocation2 + $0x20] sm:$0xff] 0.0
          %483 = vst [vmem:[#allocation2 + $0x28] sm:$0xff] 0.0
          %484 = vst [vmem:[#allocation2 + $0x30] sm:$0xff] 0.0
          %485 = vst [vmem:[#allocation2 + $0x38] sm:$0xff] 0.0
          %486 = vst [vmem:[#allocation2 + $0x40] sm:$0xff] 0.0
          %487 = vst [vmem:[#allocation2 + $0x48] sm:$0xff] 0.0
          %488 = vst [vmem:[#allocation2 + $0x50] sm:$0xff] 0.0
          %489 = vst [vmem:[#allocation2 + $0x58] sm:$0xff] 0.0
          %490 = vst [vmem:[#allocation2 + $0x60] sm:$0xff] 0.0
          %491 = vst [vmem:[#allocation2 + $0x68] sm:$0xff] 0.0
          %492 = vst [vmem:[#allocation2 + $0x70] sm:$0xff] 0.0
          %493 = vst [vmem:[#allocation2 + $0x78] sm:$0xff] 0.0
          %494 = vst [vmem:[#allocation2 + $0x80] sm:$0xff] 0.0
          %495 = vst [vmem:[#allocation2 + $0x88] sm:$0xff] 0.0
          %496 = vst [vmem:[#allocation2 + $0x90] sm:$0xff] 0.0
          %497 = vst [vmem:[#allocation2 + $0x98] sm:$0xff] 0.0
          %498 = vst [vmem:[#allocation2 + $0xa0] sm:$0xff] 0.0
          %499 = vst [vmem:[#allocation2 + $0xa8] sm:$0xff] 0.0
          %500 = vst [vmem:[#allocation2 + $0xb0] sm:$0xff] 0.0
          %501 = vst [vmem:[#allocation2 + $0xb8] sm:$0xff] 0.0
          %502 = vst [vmem:[#allocation2 + $0xc0] sm:$0xff] 0.0
          %503 = vst [vmem:[#allocation2 + $0xc8] sm:$0xff] 0.0
          %504 = vst [vmem:[#allocation2 + $0xd0] sm:$0xff] 0.0
          %505 = vst [vmem:[#allocation2 + $0xd8] sm:$0xff] 0.0
          %506 = vst [vmem:[#allocation2 + $0xe0] sm:$0xff] 0.0
          %507 = vst [vmem:[#allocation2 + $0xe8] sm:$0xff] 0.0
          %508 = vst [vmem:[#allocation2 + $0xf0] sm:$0xff] 0.0
          %509 = vst [vmem:[#allocation2 + $0xf8] sm:$0xff] 0.0
          %v510 = vlaneseq
          %vm511 = vcmp.ge.s32.totalorder %v510, 0
          %vm512 = vcmp.lt.s32.totalorder %v510, 256
          %vm513 = vmand %vm511, %vm512
          %514 = vst.msk [vmem:[#allocation3] sm:$0x3] %vm513, 0.0
        $region80: #{tpu_custom_call.1} parent=47 // pred_fallthru
          _
        %v515 = vld [vmem:[%s396] sm:$0xff]
        %v516 = vld [vmem:[%s396 + $0x8] sm:$0xff]
        %v517 = vld [vmem:[%s396 + $0x10] sm:$0xff]
        %v518 = vld [vmem:[%s396 + $0x18] sm:$0xff]
        %v519 = vunpack.c.l.bf16 %v515
        %v520 = vunpack.c.h.bf16 %v515
        %v521 = vunpack.c.l.bf16 %v516
        %v522 = vunpack.c.h.bf16 %v516
        %v523 = vunpack.c.l.bf16 %v517
        %v524 = vunpack.c.h.bf16 %v517
        %v525 = vunpack.c.l.bf16 %v518
        %v526 = vunpack.c.h.bf16 %v518
        %v527 = vadd.f32 %v519, %v521
        %v528 = vadd.f32 %v527, %v523
        %v529 = vadd.f32 %v528, %v525
        %v530 = vrot.slane %v529, 4
        %v531 = vadd.f32 %v529, %v530
        %v532 = vrot.slane %v531, 2
        %v533 = vadd.f32 %v531, %v532
        %v534 = vrot.slane %v533, 1
        %v535 = vadd.f32 %v533, %v534
        %v536 = vadd.f32 %v520, %v522
        %v537 = vadd.f32 %v536, %v524
        %v538 = vadd.f32 %v537, %v526
        %v539 = vrot.slane %v538, 4
        %v540 = vadd.f32 %v538, %v539
        %v541 = vrot.slane %v540, 2
        %v542 = vadd.f32 %v540, %v541
        %v543 = vrot.slane %v542, 1
        %v544 = vadd.f32 %v542, %v543
        %v545 = vpack.c.bf16 %v535, %v535
        %v546 = vpack.c.bf16 %v544, %v544
        %v547 = vld [vmem:[#allocation3] sm:$0x3]
        %v548 = vld [vmem:[%s414] sm:$0xff]
        %v549 = vld [vmem:[%s414 + $0x8] sm:$0xff]
        %v550 = vld [vmem:[%s414 + $0x10] sm:$0xff]
        %v551 = vld [vmem:[%s414 + $0x18] sm:$0xff]
        %v552 = vld [vmem:[%s414 + $0x20] sm:$0xff]
        %v553 = vld [vmem:[%s414 + $0x28] sm:$0xff]
        %v554 = vld [vmem:[%s414 + $0x30] sm:$0xff]
        %v555 = vld [vmem:[%s414 + $0x38] sm:$0xff]
        %v556 = vld [vmem:[%s414 + $0x40] sm:$0xff]
        %v557 = vld [vmem:[%s414 + $0x48] sm:$0xff]
        %v558 = vld [vmem:[%s414 + $0x50] sm:$0xff]
        %v559 = vld [vmem:[%s414 + $0x58] sm:$0xff]
        %v560 = vld [vmem:[%s414 + $0x60] sm:$0xff]
        %v561 = vld [vmem:[%s414 + $0x68] sm:$0xff]
        %v562 = vld [vmem:[%s414 + $0x70] sm:$0xff]
        %v563 = vld [vmem:[%s414 + $0x78] sm:$0xff]
        %v564 = vld [vmem:[%s414 + $0x80] sm:$0xff]
        %v565 = vld [vmem:[%s414 + $0x88] sm:$0xff]
        %v566 = vld [vmem:[%s414 + $0x90] sm:$0xff]
        %v567 = vld [vmem:[%s414 + $0x98] sm:$0xff]
        %v568 = vld [vmem:[%s414 + $0xa0] sm:$0xff]
        %v569 = vld [vmem:[%s414 + $0xa8] sm:$0xff]
        %v570 = vld [vmem:[%s414 + $0xb0] sm:$0xff]
        %v571 = vld [vmem:[%s414 + $0xb8] sm:$0xff]
        %v572 = vld [vmem:[%s414 + $0xc0] sm:$0xff]
        %v573 = vld [vmem:[%s414 + $0xc8] sm:$0xff]
        %v574 = vld [vmem:[%s414 + $0xd0] sm:$0xff]
        %v575 = vld [vmem:[%s414 + $0xd8] sm:$0xff]
        %v576 = vld [vmem:[%s414 + $0xe0] sm:$0xff]
        %v577 = vld [vmem:[%s414 + $0xe8] sm:$0xff]
        %v578 = vld [vmem:[%s414 + $0xf0] sm:$0xff]
        %v579 = vld [vmem:[%s414 + $0xf8] sm:$0xff]
        %v612 = vunpack.c.l.b16 %v548
        %v613 = vunpack.c.h.b16 %v548
        %v614 = vunpack.c.l.b16 %v549
        %v615 = vunpack.c.h.b16 %v549
        %v616 = vunpack.c.l.b16 %v550
        %v617 = vunpack.c.h.b16 %v550
        %v618 = vunpack.c.l.b16 %v551
        %v619 = vunpack.c.h.b16 %v551
        %v620 = vunpack.c.l.b16 %v552
        %v621 = vunpack.c.h.b16 %v552
        %v622 = vunpack.c.l.b16 %v553
        %v623 = vunpack.c.h.b16 %v553
        %v624 = vunpack.c.l.b16 %v554
        %v625 = vunpack.c.h.b16 %v554
        %v626 = vunpack.c.l.b16 %v555
        %v627 = vunpack.c.h.b16 %v555
        %v628 = vunpack.c.l.b16 %v556
        %v629 = vunpack.c.h.b16 %v556
        %v630 = vunpack.c.l.b16 %v557
        %v631 = vunpack.c.h.b16 %v557
        %v632 = vunpack.c.l.b16 %v558
        %v633 = vunpack.c.h.b16 %v558
        %v634 = vunpack.c.l.b16 %v559
        %v635 = vunpack.c.h.b16 %v559
        %v636 = vunpack.c.l.b16 %v560
        %v637 = vunpack.c.h.b16 %v560
        %v638 = vunpack.c.l.b16 %v561
        %v639 = vunpack.c.h.b16 %v561
        %v640 = vunpack.c.l.b16 %v562
        %v641 = vunpack.c.h.b16 %v562
        %v642 = vunpack.c.l.b16 %v563
        %v643 = vunpack.c.h.b16 %v563
        %v644 = vunpack.c.l.b16 %v564
        %v645 = vunpack.c.h.b16 %v564
        %v646 = vunpack.c.l.b16 %v565
        %v647 = vunpack.c.h.b16 %v565
        %v648 = vunpack.c.l.b16 %v566
        %v649 = vunpack.c.h.b16 %v566
        %v650 = vunpack.c.l.b16 %v567
        %v651 = vunpack.c.h.b16 %v567
        %v652 = vunpack.c.l.b16 %v568
        %v653 = vunpack.c.h.b16 %v568
        %v654 = vunpack.c.l.b16 %v569
        %v655 = vunpack.c.h.b16 %v569
        %v656 = vunpack.c.l.b16 %v570
        %v657 = vunpack.c.h.b16 %v570
        %v658 = vunpack.c.l.b16 %v571
        %v659 = vunpack.c.h.b16 %v571
        %v660 = vunpack.c.l.b16 %v572
        %v661 = vunpack.c.h.b16 %v572
        %v662 = vunpack.c.l.b16 %v573
        %v663 = vunpack.c.h.b16 %v573
        %v664 = vunpack.c.l.b16 %v574
        %v665 = vunpack.c.h.b16 %v574
        %v666 = vunpack.c.l.b16 %v575
        %v667 = vunpack.c.h.b16 %v575
        %v668 = vunpack.c.l.b16 %v576
        %v669 = vunpack.c.h.b16 %v576
        %v670 = vunpack.c.l.b16 %v577
        %v671 = vunpack.c.h.b16 %v577
        %v672 = vunpack.c.l.b16 %v578
        %v673 = vunpack.c.h.b16 %v578
        %v674 = vunpack.c.l.b16 %v579
        %v675 = vunpack.c.h.b16 %v579
        %v676 = vpack.c.b16 %v614, %v612
        %v677 = vpack.c.b16 %v615, %v613
        %v678 = vpack.c.b16 %v618, %v616
        %v679 = vpack.c.b16 %v619, %v617
        %v680 = vpack.c.b16 %v622, %v620
        %v681 = vpack.c.b16 %v623, %v621
        %v682 = vpack.c.b16 %v626, %v624
        %v683 = vpack.c.b16 %v627, %v625
        %v684 = vpack.c.b16 %v630, %v628
        %v685 = vpack.c.b16 %v631, %v629
        %v686 = vpack.c.b16 %v634, %v632
        %v687 = vpack.c.b16 %v635, %v633
        %v688 = vpack.c.b16 %v638, %v636
        %v689 = vpack.c.b16 %v639, %v637
        %v690 = vpack.c.b16 %v642, %v640
        %v691 = vpack.c.b16 %v643, %v641
        %v692 = vpack.c.b16 %v646, %v644
        %v693 = vpack.c.b16 %v647, %v645
        %v694 = vpack.c.b16 %v650, %v648
        %v695 = vpack.c.b16 %v651, %v649
        %v696 = vpack.c.b16 %v654, %v652
        %v697 = vpack.c.b16 %v655, %v653
        %v698 = vpack.c.b16 %v658, %v656
        %v699 = vpack.c.b16 %v659, %v657
        %v700 = vpack.c.b16 %v662, %v660
        %v701 = vpack.c.b16 %v663, %v661
        %v702 = vpack.c.b16 %v666, %v664
        %v703 = vpack.c.b16 %v667, %v665
        %v704 = vpack.c.b16 %v670, %v668
        %v705 = vpack.c.b16 %v671, %v669
        %v706 = vpack.c.b16 %v674, %v672
        %v707 = vpack.c.b16 %v675, %v673
        %740 = vmatprep.subr.bf16.mxu0 %v691
        %741 = vmatpush1.bf16.msra.mxu0 %v690
        %742 = vmatprep.subr.bf16.mxu0 %v689
        %743 = vmatpush1.bf16.msra.mxu0 %v688
        %744 = vmatprep.subr.bf16.mxu0 %v687
        %745 = vmatpush1.bf16.msra.mxu0 %v686
        %746 = vmatprep.subr.bf16.mxu0 %v685
        %747 = vmatpush1.bf16.msra.mxu0 %v684
        %748 = vmatprep.subr.bf16.mxu0 %v683
        %749 = vmatpush1.bf16.msra.mxu0 %v682
        %750 = vmatprep.subr.bf16.mxu0 %v681
        %751 = vmatpush1.bf16.msra.mxu0 %v680
        %752 = vmatprep.subr.bf16.mxu0 %v679
        %753 = vmatpush1.bf16.msra.mxu0 %v678
        %754 = vmatprep.subr.bf16.mxu0 %v677
        %755 = vmatpush1.bf16.msra.mxu0 %v676
        %756 = vmatprep.subr.bf16.mxu0 %v707
        %757 = vmatpush2.bf16.msra.mxu0 %v706
        %758 = vmatprep.subr.bf16.mxu0 %v705
        %759 = vmatpush2.bf16.msra.mxu0 %v704
        %760 = vmatprep.subr.bf16.mxu0 %v703
        %761 = vmatpush2.bf16.msra.mxu0 %v702
        %762 = vmatprep.subr.bf16.mxu0 %v701
        %763 = vmatpush2.bf16.msra.mxu0 %v700
        %764 = vmatprep.subr.bf16.mxu0 %v699
        %765 = vmatpush2.bf16.msra.mxu0 %v698
        %766 = vmatprep.subr.bf16.mxu0 %v697
        %767 = vmatpush2.bf16.msra.mxu0 %v696
        %768 = vmatprep.subr.bf16.mxu0 %v695
        %769 = vmatpush2.bf16.msra.mxu0 %v694
        %770 = vmatprep.subr.bf16.mxu0 %v693
        %771 = vmatpush2.bf16.msra.mxu0 %v692
        %772 = vmatprep.mubr.bf16.mxu0 %v546
        %773 = vmatmul.mubr.bf16.gmra.mxu0 %v545
        %v774 = vpop.f32.mrf.mxu0
        %v775 = vadd.f32 0.0, %v774
        %v776 = vpop.f32.mrf.mxu0
        %v777 = vadd.f32 0.0, %v776
        %v778 = vpop.f32.mrf.mxu0
        %v779 = vpop.f32.mrf.mxu0
        %780 = vdwg.mxu0
        %v783 = vcombine.low %v775, %v777
        %v785 = vunpack.c.l.s4 1966171168
        %v786 = vunpack.c.0.s8 %v785
        %v787 = vlaneseq
        %v788 = vshrl.u32 %v787, 7
        %v789 = vsub.s32 %v786, %v788
        %v790 = vrot.slane %v783, %v789
        %v792 = vunpack.c.l.s4 1966171168
        %v793 = vunpack.c.0.s8 %v792
        %v794 = vlaneseq
        %v795 = vshrl.u32 %v794, 7
        %v796 = vsub.s32 %v793, %v795
        %v797 = vrot.slane %v790, %v796
        %v799 = vadd.f32 %v547, %v797
        %v800 = vlaneseq
        %vm801 = vcmp.ge.s32.totalorder %v800, 0
        %vm802 = vcmp.lt.s32.totalorder %v800, 256
        %vm803 = vmand %vm801, %vm802
        %804 = vst.msk [vmem:[#allocation3] sm:$0x3] %vm803, %v799
        %v805 = vld [vmem:[%s405] sm:$0xff]
        %v806 = vld [vmem:[%s405 + $0x8] sm:$0xff]
        %v807 = vld [vmem:[%s405 + $0x10] sm:$0xff]
        %v808 = vld [vmem:[%s405 + $0x18] sm:$0xff]
        %v809 = vld [vmem:[%s405 + $0x20] sm:$0xff]
        %v810 = vld [vmem:[%s405 + $0x28] sm:$0xff]
        %v811 = vld [vmem:[%s405 + $0x30] sm:$0xff]
        %v812 = vld [vmem:[%s405 + $0x38] sm:$0xff]
        %v813 = vld [vmem:[%s405 + $0x40] sm:$0xff]
        %v814 = vld [vmem:[%s405 + $0x48] sm:$0xff]
        %v815 = vld [vmem:[%s405 + $0x50] sm:$0xff]
        %v816 = vld [vmem:[%s405 + $0x58] sm:$0xff]
        %v817 = vld [vmem:[%s405 + $0x60] sm:$0xff]
        %v818 = vld [vmem:[%s405 + $0x68] sm:$0xff]
        %v819 = vld [vmem:[%s405 + $0x70] sm:$0xff]
        %v820 = vld [vmem:[%s405 + $0x78] sm:$0xff]
        %v821 = vld [vmem:[%s405 + $0x80] sm:$0xff]
        %v822 = vld [vmem:[%s405 + $0x88] sm:$0xff]
        %v823 = vld [vmem:[%s405 + $0x90] sm:$0xff]
        %v824 = vld [vmem:[%s405 + $0x98] sm:$0xff]
        %v825 = vld [vmem:[%s405 + $0xa0] sm:$0xff]
        %v826 = vld [vmem:[%s405 + $0xa8] sm:$0xff]
        %v827 = vld [vmem:[%s405 + $0xb0] sm:$0xff]
        %v828 = vld [vmem:[%s405 + $0xb8] sm:$0xff]
        %v829 = vld [vmem:[%s405 + $0xc0] sm:$0xff]
        %v830 = vld [vmem:[%s405 + $0xc8] sm:$0xff]
        %v831 = vld [vmem:[%s405 + $0xd0] sm:$0xff]
        %v832 = vld [vmem:[%s405 + $0xd8] sm:$0xff]
        %v833 = vld [vmem:[%s405 + $0xe0] sm:$0xff]
        %v834 = vld [vmem:[%s405 + $0xe8] sm:$0xff]
        %v835 = vld [vmem:[%s405 + $0xf0] sm:$0xff]
        %v836 = vld [vmem:[%s405 + $0xf8] sm:$0xff]
        %v841 = vunpack.c.l.b16 %v515
        %v842 = vunpack.c.h.b16 %v515
        %v843 = vunpack.c.l.b16 %v516
        %v844 = vunpack.c.h.b16 %v516
        %v845 = vunpack.c.l.b16 %v517
        %v846 = vunpack.c.h.b16 %v517
        %v847 = vunpack.c.l.b16 %v518
        %v848 = vunpack.c.h.b16 %v518
        %v849 = vpack.c.b16 %v843, %v841
        %v850 = vpack.c.b16 %v844, %v842
        %v851 = vpack.c.b16 %v847, %v845
        %v852 = vpack.c.b16 %v848, %v846
        %v889 = vunpack.c.l.b16 %v805
        %v890 = vunpack.c.h.b16 %v805
        %v891 = vunpack.c.l.b16 %v806
        %v892 = vunpack.c.h.b16 %v806
        %v893 = vunpack.c.l.b16 %v807
        %v894 = vunpack.c.h.b16 %v807
        %v895 = vunpack.c.l.b16 %v808
        %v896 = vunpack.c.h.b16 %v808
        %v897 = vunpack.c.l.b16 %v809
        %v898 = vunpack.c.h.b16 %v809
        %v899 = vunpack.c.l.b16 %v810
        %v900 = vunpack.c.h.b16 %v810
        %v901 = vunpack.c.l.b16 %v811
        %v902 = vunpack.c.h.b16 %v811
        %v903 = vunpack.c.l.b16 %v812
        %v904 = vunpack.c.h.b16 %v812
        %v905 = vunpack.c.l.b16 %v813
        %v906 = vunpack.c.h.b16 %v813
        %v907 = vunpack.c.l.b16 %v814
        %v908 = vunpack.c.h.b16 %v814
        %v909 = vunpack.c.l.b16 %v815
        %v910 = vunpack.c.h.b16 %v815
        %v911 = vunpack.c.l.b16 %v816
        %v912 = vunpack.c.h.b16 %v816
        %v913 = vunpack.c.l.b16 %v817
        %v914 = vunpack.c.h.b16 %v817
        %v915 = vunpack.c.l.b16 %v818
        %v916 = vunpack.c.h.b16 %v818
        %v917 = vunpack.c.l.b16 %v819
        %v918 = vunpack.c.h.b16 %v819
        %v919 = vunpack.c.l.b16 %v820
        %v920 = vunpack.c.h.b16 %v820
        %v921 = vunpack.c.l.b16 %v821
        %v922 = vunpack.c.h.b16 %v821
        %v923 = vunpack.c.l.b16 %v822
        %v924 = vunpack.c.h.b16 %v822
        %v925 = vunpack.c.l.b16 %v823
        %v926 = vunpack.c.h.b16 %v823
        %v927 = vunpack.c.l.b16 %v824
        %v928 = vunpack.c.h.b16 %v824
        %v929 = vunpack.c.l.b16 %v825
        %v930 = vunpack.c.h.b16 %v825
        %v931 = vunpack.c.l.b16 %v826
        %v932 = vunpack.c.h.b16 %v826
        %v933 = vunpack.c.l.b16 %v827
        %v934 = vunpack.c.h.b16 %v827
        %v935 = vunpack.c.l.b16 %v828
        %v936 = vunpack.c.h.b16 %v828
        %v937 = vunpack.c.l.b16 %v829
        %v938 = vunpack.c.h.b16 %v829
        %v939 = vunpack.c.l.b16 %v830
        %v940 = vunpack.c.h.b16 %v830
        %v941 = vunpack.c.l.b16 %v831
        %v942 = vunpack.c.h.b16 %v831
        %v943 = vunpack.c.l.b16 %v832
        %v944 = vunpack.c.h.b16 %v832
        %v945 = vunpack.c.l.b16 %v833
        %v946 = vunpack.c.h.b16 %v833
        %v947 = vunpack.c.l.b16 %v834
        %v948 = vunpack.c.h.b16 %v834
        %v949 = vunpack.c.l.b16 %v835
        %v950 = vunpack.c.h.b16 %v835
        %v951 = vunpack.c.l.b16 %v836
        %v952 = vunpack.c.h.b16 %v836
        %v953 = vpack.c.b16 %v891, %v889
        %v954 = vpack.c.b16 %v892, %v890
        %v955 = vpack.c.b16 %v895, %v893
        %v956 = vpack.c.b16 %v896, %v894
        %v957 = vpack.c.b16 %v899, %v897
        %v958 = vpack.c.b16 %v900, %v898
        %v959 = vpack.c.b16 %v903, %v901
        %v960 = vpack.c.b16 %v904, %v902
        %v961 = vpack.c.b16 %v907, %v905
        %v962 = vpack.c.b16 %v908, %v906
        %v963 = vpack.c.b16 %v911, %v909
        %v964 = vpack.c.b16 %v912, %v910
        %v965 = vpack.c.b16 %v915, %v913
        %v966 = vpack.c.b16 %v916, %v914
        %v967 = vpack.c.b16 %v919, %v917
        %v968 = vpack.c.b16 %v920, %v918
        %v969 = vpack.c.b16 %v923, %v921
        %v970 = vpack.c.b16 %v924, %v922
        %v971 = vpack.c.b16 %v927, %v925
        %v972 = vpack.c.b16 %v928, %v926
        %v973 = vpack.c.b16 %v931, %v929
        %v974 = vpack.c.b16 %v932, %v930
        %v975 = vpack.c.b16 %v935, %v933
        %v976 = vpack.c.b16 %v936, %v934
        %v977 = vpack.c.b16 %v939, %v937
        %v978 = vpack.c.b16 %v940, %v938
        %v979 = vpack.c.b16 %v943, %v941
        %v980 = vpack.c.b16 %v944, %v942
        %v981 = vpack.c.b16 %v947, %v945
        %v982 = vpack.c.b16 %v948, %v946
        %v983 = vpack.c.b16 %v951, %v949
        %v984 = vpack.c.b16 %v952, %v950
        %1017 = vmatprep.subr.bf16.mxu0 %v968
        %1018 = vmatpush1.bf16.msra.mxu0 %v967
        %1019 = vmatprep.subr.bf16.mxu0 %v966
        %1020 = vmatpush1.bf16.msra.mxu0 %v965
        %1021 = vmatprep.subr.bf16.mxu0 %v964
        %1022 = vmatpush1.bf16.msra.mxu0 %v963
        %1023 = vmatprep.subr.bf16.mxu0 %v962
        %1024 = vmatpush1.bf16.msra.mxu0 %v961
        %1025 = vmatprep.subr.bf16.mxu0 %v960
        %1026 = vmatpush1.bf16.msra.mxu0 %v959
        %1027 = vmatprep.subr.bf16.mxu0 %v958
        %1028 = vmatpush1.bf16.msra.mxu0 %v957
        %1029 = vmatprep.subr.bf16.mxu0 %v956
        %1030 = vmatpush1.bf16.msra.mxu0 %v955
        %1031 = vmatprep.subr.bf16.mxu0 %v954
        %1032 = vmatpush1.bf16.msra.mxu0 %v953
        %1033 = vmatprep.subr.bf16.mxu0 %v984
        %1034 = vmatpush2.bf16.msra.mxu0 %v983
        %1035 = vmatprep.subr.bf16.mxu0 %v982
        %1036 = vmatpush2.bf16.msra.mxu0 %v981
        %1037 = vmatprep.subr.bf16.mxu0 %v980
        %1038 = vmatpush2.bf16.msra.mxu0 %v979
        %1039 = vmatprep.subr.bf16.mxu0 %v978
        %1040 = vmatpush2.bf16.msra.mxu0 %v977
        %1041 = vmatprep.subr.bf16.mxu0 %v976
        %1042 = vmatpush2.bf16.msra.mxu0 %v975
        %1043 = vmatprep.subr.bf16.mxu0 %v974
        %1044 = vmatpush2.bf16.msra.mxu0 %v973
        %1045 = vmatprep.subr.bf16.mxu0 %v972
        %1046 = vmatpush2.bf16.msra.mxu0 %v971
        %1047 = vmatprep.subr.bf16.mxu0 %v970
        %1048 = vmatpush2.bf16.msra.mxu0 %v969
        %1049 = vmatprep.mubr.bf16.mxu0 %v850
        %1050 = vmatmul.mubr.bf16.gmra.mxu0 %v849
        %v1051 = vpop.f32.mrf.mxu0
        %v1052 = vadd.f32 0.0, %v1051
        %v1053 = vpop.f32.mrf.mxu0
        %v1054 = vadd.f32 0.0, %v1053
        %v1055 = vpop.f32.mrf.mxu0
        %v1056 = vadd.f32 0.0, %v1055
        %v1057 = vpop.f32.mrf.mxu0
        %v1058 = vadd.f32 0.0, %v1057
        %1059 = vmatprep.mubr.bf16.mxu0 %v852
        %1060 = vmatmul.mubr.bf16.gmra.mxu0 %v851
        %v1061 = vpop.f32.mrf.mxu0
        %v1062 = vadd.f32 0.0, %v1061
        %v1063 = vpop.f32.mrf.mxu0
        %v1064 = vadd.f32 0.0, %v1063
        %v1065 = vpop.f32.mrf.mxu0
        %v1066 = vadd.f32 0.0, %v1065
        %v1067 = vpop.f32.mrf.mxu0
        %v1068 = vadd.f32 0.0, %v1067
        %1069 = vdwg.mxu0
        %v1070 = vld [vmem:[#allocation2] sm:$0xff]
        %v1071 = vld [vmem:[#allocation2 + $0x8] sm:$0xff]
        %v1072 = vld [vmem:[#allocation2 + $0x10] sm:$0xff]
        %v1073 = vld [vmem:[#allocation2 + $0x18] sm:$0xff]
        %v1074 = vld [vmem:[#allocation2 + $0x20] sm:$0xff]
        %v1075 = vld [vmem:[#allocation2 + $0x28] sm:$0xff]
        %v1076 = vld [vmem:[#allocation2 + $0x30] sm:$0xff]
        %v1077 = vld [vmem:[#allocation2 + $0x38] sm:$0xff]
        %v1078 = vadd.f32 %v1070, %v1052
        %v1079 = vadd.f32 %v1071, %v1054
        %v1080 = vadd.f32 %v1072, %v1056
        %v1081 = vadd.f32 %v1073, %v1058
        %v1082 = vadd.f32 %v1074, %v1062
        %v1083 = vadd.f32 %v1075, %v1064
        %v1084 = vadd.f32 %v1076, %v1066
        %v1085 = vadd.f32 %v1077, %v1068
        %1086 = vst [vmem:[#allocation2] sm:$0xff] %v1078
        %1087 = vst [vmem:[#allocation2 + $0x8] sm:$0xff] %v1079
        %1088 = vst [vmem:[#allocation2 + $0x10] sm:$0xff] %v1080
        %1089 = vst [vmem:[#allocation2 + $0x18] sm:$0xff] %v1081
        %1090 = vst [vmem:[#allocation2 + $0x20] sm:$0xff] %v1082
        %1091 = vst [vmem:[#allocation2 + $0x28] sm:$0xff] %v1083
        %1092 = vst [vmem:[#allocation2 + $0x30] sm:$0xff] %v1084
        %1093 = vst [vmem:[#allocation2 + $0x38] sm:$0xff] %v1085
        %s1094 = scalar_lea.vmem %s405, 256 [#allocation7]
        %v1095 = vld [vmem:[%s1094] sm:$0xff]
        %v1096 = vld [vmem:[%s1094 + $0x8] sm:$0xff]
        %v1097 = vld [vmem:[%s1094 + $0x10] sm:$0xff]
        %v1098 = vld [vmem:[%s1094 + $0x18] sm:$0xff]
        %v1099 = vld [vmem:[%s1094 + $0x20] sm:$0xff]
        %v1100 = vld [vmem:[%s1094 + $0x28] sm:$0xff]
        %v1101 = vld [vmem:[%s1094 + $0x30] sm:$0xff]
        %v1102 = vld [vmem:[%s1094 + $0x38] sm:$0xff]
        %v1103 = vld [vmem:[%s1094 + $0x40] sm:$0xff]
        %v1104 = vld [vmem:[%s1094 + $0x48] sm:$0xff]
        %v1105 = vld [vmem:[%s1094 + $0x50] sm:$0xff]
        %v1106 = vld [vmem:[%s1094 + $0x58] sm:$0xff]
        %v1107 = vld [vmem:[%s1094 + $0x60] sm:$0xff]
        %v1108 = vld [vmem:[%s1094 + $0x68] sm:$0xff]
        %v1109 = vld [vmem:[%s1094 + $0x70] sm:$0xff]
        %v1110 = vld [vmem:[%s1094 + $0x78] sm:$0xff]
        %v1111 = vld [vmem:[%s1094 + $0x80] sm:$0xff]
        %v1112 = vld [vmem:[%s1094 + $0x88] sm:$0xff]
        %v1113 = vld [vmem:[%s1094 + $0x90] sm:$0xff]
        %v1114 = vld [vmem:[%s1094 + $0x98] sm:$0xff]
        %v1115 = vld [vmem:[%s1094 + $0xa0] sm:$0xff]
        %v1116 = vld [vmem:[%s1094 + $0xa8] sm:$0xff]
        %v1117 = vld [vmem:[%s1094 + $0xb0] sm:$0xff]
        %v1118 = vld [vmem:[%s1094 + $0xb8] sm:$0xff]
        %v1119 = vld [vmem:[%s1094 + $0xc0] sm:$0xff]
        %v1120 = vld [vmem:[%s1094 + $0xc8] sm:$0xff]
        %v1121 = vld [vmem:[%s1094 + $0xd0] sm:$0xff]
        %v1122 = vld [vmem:[%s1094 + $0xd8] sm:$0xff]
        %v1123 = vld [vmem:[%s1094 + $0xe0] sm:$0xff]
        %v1124 = vld [vmem:[%s1094 + $0xe8] sm:$0xff]
        %v1125 = vld [vmem:[%s1094 + $0xf0] sm:$0xff]
        %v1126 = vld [vmem:[%s1094 + $0xf8] sm:$0xff]
        %v1159 = vunpack.c.l.b16 %v1095
        %v1160 = vunpack.c.h.b16 %v1095
        %v1161 = vunpack.c.l.b16 %v1096
        %v1162 = vunpack.c.h.b16 %v1096
        %v1163 = vunpack.c.l.b16 %v1097
        %v1164 = vunpack.c.h.b16 %v1097
        %v1165 = vunpack.c.l.b16 %v1098
        %v1166 = vunpack.c.h.b16 %v1098
        %v1167 = vunpack.c.l.b16 %v1099
        %v1168 = vunpack.c.h.b16 %v1099
        %v1169 = vunpack.c.l.b16 %v1100
        %v1170 = vunpack.c.h.b16 %v1100
        %v1171 = vunpack.c.l.b16 %v1101
        %v1172 = vunpack.c.h.b16 %v1101
        %v1173 = vunpack.c.l.b16 %v1102
        %v1174 = vunpack.c.h.b16 %v1102
        %v1175 = vunpack.c.l.b16 %v1103
        %v1176 = vunpack.c.h.b16 %v1103
        %v1177 = vunpack.c.l.b16 %v1104
        %v1178 = vunpack.c.h.b16 %v1104
        %v1179 = vunpack.c.l.b16 %v1105
        %v1180 = vunpack.c.h.b16 %v1105
        %v1181 = vunpack.c.l.b16 %v1106
        %v1182 = vunpack.c.h.b16 %v1106
        %v1183 = vunpack.c.l.b16 %v1107
        %v1184 = vunpack.c.h.b16 %v1107
        %v1185 = vunpack.c.l.b16 %v1108
        %v1186 = vunpack.c.h.b16 %v1108
        %v1187 = vunpack.c.l.b16 %v1109
        %v1188 = vunpack.c.h.b16 %v1109
        %v1189 = vunpack.c.l.b16 %v1110
        %v1190 = vunpack.c.h.b16 %v1110
        %v1191 = vunpack.c.l.b16 %v1111
        %v1192 = vunpack.c.h.b16 %v1111
        %v1193 = vunpack.c.l.b16 %v1112
        %v1194 = vunpack.c.h.b16 %v1112
        %v1195 = vunpack.c.l.b16 %v1113
        %v1196 = vunpack.c.h.b16 %v1113
        %v1197 = vunpack.c.l.b16 %v1114
        %v1198 = vunpack.c.h.b16 %v1114
        %v1199 = vunpack.c.l.b16 %v1115
        %v1200 = vunpack.c.h.b16 %v1115
        %v1201 = vunpack.c.l.b16 %v1116
        %v1202 = vunpack.c.h.b16 %v1116
        %v1203 = vunpack.c.l.b16 %v1117
        %v1204 = vunpack.c.h.b16 %v1117
        %v1205 = vunpack.c.l.b16 %v1118
        %v1206 = vunpack.c.h.b16 %v1118
        %v1207 = vunpack.c.l.b16 %v1119
        %v1208 = vunpack.c.h.b16 %v1119
        %v1209 = vunpack.c.l.b16 %v1120
        %v1210 = vunpack.c.h.b16 %v1120
        %v1211 = vunpack.c.l.b16 %v1121
        %v1212 = vunpack.c.h.b16 %v1121
        %v1213 = vunpack.c.l.b16 %v1122
        %v1214 = vunpack.c.h.b16 %v1122
        %v1215 = vunpack.c.l.b16 %v1123
        %v1216 = vunpack.c.h.b16 %v1123
        %v1217 = vunpack.c.l.b16 %v1124
        %v1218 = vunpack.c.h.b16 %v1124
        %v1219 = vunpack.c.l.b16 %v1125
        %v1220 = vunpack.c.h.b16 %v1125
        %v1221 = vunpack.c.l.b16 %v1126
        %v1222 = vunpack.c.h.b16 %v1126
        %v1223 = vpack.c.b16 %v1161, %v1159
        %v1224 = vpack.c.b16 %v1162, %v1160
        %v1225 = vpack.c.b16 %v1165, %v1163
        %v1226 = vpack.c.b16 %v1166, %v1164
        %v1227 = vpack.c.b16 %v1169, %v1167
        %v1228 = vpack.c.b16 %v1170, %v1168
        %v1229 = vpack.c.b16 %v1173, %v1171
        %v1230 = vpack.c.b16 %v1174, %v1172
        %v1231 = vpack.c.b16 %v1177, %v1175
        %v1232 = vpack.c.b16 %v1178, %v1176
        %v1233 = vpack.c.b16 %v1181, %v1179
        %v1234 = vpack.c.b16 %v1182, %v1180
        %v1235 = vpack.c.b16 %v1185, %v1183
        %v1236 = vpack.c.b16 %v1186, %v1184
        %v1237 = vpack.c.b16 %v1189, %v1187
        %v1238 = vpack.c.b16 %v1190, %v1188
        %v1239 = vpack.c.b16 %v1193, %v1191
        %v1240 = vpack.c.b16 %v1194, %v1192
        %v1241 = vpack.c.b16 %v1197, %v1195
        %v1242 = vpack.c.b16 %v1198, %v1196
        %v1243 = vpack.c.b16 %v1201, %v1199
        %v1244 = vpack.c.b16 %v1202, %v1200
        %v1245 = vpack.c.b16 %v1205, %v1203
        %v1246 = vpack.c.b16 %v1206, %v1204
        %v1247 = vpack.c.b16 %v1209, %v1207
        %v1248 = vpack.c.b16 %v1210, %v1208
        %v1249 = vpack.c.b16 %v1213, %v1211
        %v1250 = vpack.c.b16 %v1214, %v1212
        %v1251 = vpack.c.b16 %v1217, %v1215
        %v1252 = vpack.c.b16 %v1218, %v1216
        %v1253 = vpack.c.b16 %v1221, %v1219
        %v1254 = vpack.c.b16 %v1222, %v1220
        %1287 = vmatprep.subr.bf16.mxu0 %v1238
        %1288 = vmatpush1.bf16.msra.mxu0 %v1237
        %1289 = vmatprep.subr.bf16.mxu0 %v1236
        %1290 = vmatpush1.bf16.msra.mxu0 %v1235
        %1291 = vmatprep.subr.bf16.mxu0 %v1234
        %1292 = vmatpush1.bf16.msra.mxu0 %v1233
        %1293 = vmatprep.subr.bf16.mxu0 %v1232
        %1294 = vmatpush1.bf16.msra.mxu0 %v1231
        %1295 = vmatprep.subr.bf16.mxu0 %v1230
        %1296 = vmatpush1.bf16.msra.mxu0 %v1229
        %1297 = vmatprep.subr.bf16.mxu0 %v1228
        %1298 = vmatpush1.bf16.msra.mxu0 %v1227
        %1299 = vmatprep.subr.bf16.mxu0 %v1226
        %1300 = vmatpush1.bf16.msra.mxu0 %v1225
        %1301 = vmatprep.subr.bf16.mxu0 %v1224
        %1302 = vmatpush1.bf16.msra.mxu0 %v1223
        %1303 = vmatprep.subr.bf16.mxu0 %v1254
        %1304 = vmatpush2.bf16.msra.mxu0 %v1253
        %1305 = vmatprep.subr.bf16.mxu0 %v1252
        %1306 = vmatpush2.bf16.msra.mxu0 %v1251
        %1307 = vmatprep.subr.bf16.mxu0 %v1250
        %1308 = vmatpush2.bf16.msra.mxu0 %v1249
        %1309 = vmatprep.subr.bf16.mxu0 %v1248
        %1310 = vmatpush2.bf16.msra.mxu0 %v1247
        %1311 = vmatprep.subr.bf16.mxu0 %v1246
        %1312 = vmatpush2.bf16.msra.mxu0 %v1245
        %1313 = vmatprep.subr.bf16.mxu0 %v1244
        %1314 = vmatpush2.bf16.msra.mxu0 %v1243
        %1315 = vmatprep.subr.bf16.mxu0 %v1242
        %1316 = vmatpush2.bf16.msra.mxu0 %v1241
        %1317 = vmatprep.subr.bf16.mxu0 %v1240
        %1318 = vmatpush2.bf16.msra.mxu0 %v1239
        %1319 = vmatprep.mubr.bf16.mxu0 %v850
        %1320 = vmatmul.mubr.bf16.gmra.mxu0 %v849
        %v1321 = vpop.f32.mrf.mxu0
        %v1322 = vadd.f32 0.0, %v1321
        %v1323 = vpop.f32.mrf.mxu0
        %v1324 = vadd.f32 0.0, %v1323
        %v1325 = vpop.f32.mrf.mxu0
        %v1326 = vadd.f32 0.0, %v1325
        %v1327 = vpop.f32.mrf.mxu0
        %v1328 = vadd.f32 0.0, %v1327
        %1329 = vmatprep.mubr.bf16.mxu0 %v852
        %1330 = vmatmul.mubr.bf16.gmra.mxu0 %v851
        %v1331 = vpop.f32.mrf.mxu0
        %v1332 = vadd.f32 0.0, %v1331
        %v1333 = vpop.f32.mrf.mxu0
        %v1334 = vadd.f32 0.0, %v1333
        %v1335 = vpop.f32.mrf.mxu0
        %v1336 = vadd.f32 0.0, %v1335
        %v1337 = vpop.f32.mrf.mxu0
        %v1338 = vadd.f32 0.0, %v1337
        %1339 = vdwg.mxu0
        %s1340 = scalar_lea.vmem [#allocation2], 64
        %v1341 = vld [vmem:[%s1340] sm:$0xff]
        %v1342 = vld [vmem:[%s1340 + $0x8] sm:$0xff]
        %v1343 = vld [vmem:[%s1340 + $0x10] sm:$0xff]
        %v1344 = vld [vmem:[%s1340 + $0x18] sm:$0xff]
        %v1345 = vld [vmem:[%s1340 + $0x20] sm:$0xff]
        %v1346 = vld [vmem:[%s1340 + $0x28] sm:$0xff]
        %v1347 = vld [vmem:[%s1340 + $0x30] sm:$0xff]
        %v1348 = vld [vmem:[%s1340 + $0x38] sm:$0xff]
        %v1349 = vadd.f32 %v1341, %v1322
        %v1350 = vadd.f32 %v1342, %v1324
        %v1351 = vadd.f32 %v1343, %v1326
        %v1352 = vadd.f32 %v1344, %v1328
        %v1353 = vadd.f32 %v1345, %v1332
        %v1354 = vadd.f32 %v1346, %v1334
        %v1355 = vadd.f32 %v1347, %v1336
        %v1356 = vadd.f32 %v1348, %v1338
        %1357 = vst [vmem:[%s1340] sm:$0xff] %v1349
        %1358 = vst [vmem:[%s1340 + $0x8] sm:$0xff] %v1350
        %1359 = vst [vmem:[%s1340 + $0x10] sm:$0xff] %v1351
        %1360 = vst [vmem:[%s1340 + $0x18] sm:$0xff] %v1352
        %1361 = vst [vmem:[%s1340 + $0x20] sm:$0xff] %v1353
        %1362 = vst [vmem:[%s1340 + $0x28] sm:$0xff] %v1354
        %1363 = vst [vmem:[%s1340 + $0x30] sm:$0xff] %v1355
        %1364 = vst [vmem:[%s1340 + $0x38] sm:$0xff] %v1356
        %s1365 = scalar_lea.vmem %s405, 512 [#allocation7]
        %v1366 = vld [vmem:[%s1365] sm:$0xff]
        %v1367 = vld [vmem:[%s1365 + $0x8] sm:$0xff]
        %v1368 = vld [vmem:[%s1365 + $0x10] sm:$0xff]
        %v1369 = vld [vmem:[%s1365 + $0x18] sm:$0xff]
        %v1370 = vld [vmem:[%s1365 + $0x20] sm:$0xff]
        %v1371 = vld [vmem:[%s1365 + $0x28] sm:$0xff]
        %v1372 = vld [vmem:[%s1365 + $0x30] sm:$0xff]
        %v1373 = vld [vmem:[%s1365 + $0x38] sm:$0xff]
        %v1374 = vld [vmem:[%s1365 + $0x40] sm:$0xff]
        %v1375 = vld [vmem:[%s1365 + $0x48] sm:$0xff]
        %v1376 = vld [vmem:[%s1365 + $0x50] sm:$0xff]
        %v1377 = vld [vmem:[%s1365 + $0x58] sm:$0xff]
        %v1378 = vld [vmem:[%s1365 + $0x60] sm:$0xff]
        %v1379 = vld [vmem:[%s1365 + $0x68] sm:$0xff]
        %v1380 = vld [vmem:[%s1365 + $0x70] sm:$0xff]
        %v1381 = vld [vmem:[%s1365 + $0x78] sm:$0xff]
        %v1382 = vld [vmem:[%s1365 + $0x80] sm:$0xff]
        %v1383 = vld [vmem:[%s1365 + $0x88] sm:$0xff]
        %v1384 = vld [vmem:[%s1365 + $0x90] sm:$0xff]
        %v1385 = vld [vmem:[%s1365 + $0x98] sm:$0xff]
        %v1386 = vld [vmem:[%s1365 + $0xa0] sm:$0xff]
        %v1387 = vld [vmem:[%s1365 + $0xa8] sm:$0xff]
        %v1388 = vld [vmem:[%s1365 + $0xb0] sm:$0xff]
        %v1389 = vld [vmem:[%s1365 + $0xb8] sm:$0xff]
        %v1390 = vld [vmem:[%s1365 + $0xc0] sm:$0xff]
        %v1391 = vld [vmem:[%s1365 + $0xc8] sm:$0xff]
        %v1392 = vld [vmem:[%s1365 + $0xd0] sm:$0xff]
        %v1393 = vld [vmem:[%s1365 + $0xd8] sm:$0xff]
        %v1394 = vld [vmem:[%s1365 + $0xe0] sm:$0xff]
        %v1395 = vld [vmem:[%s1365 + $0xe8] sm:$0xff]
        %v1396 = vld [vmem:[%s1365 + $0xf0] sm:$0xff]
        %v1397 = vld [vmem:[%s1365 + $0xf8] sm:$0xff]
        %v1430 = vunpack.c.l.b16 %v1366
        %v1431 = vunpack.c.h.b16 %v1366
        %v1432 = vunpack.c.l.b16 %v1367
        %v1433 = vunpack.c.h.b16 %v1367
        %v1434 = vunpack.c.l.b16 %v1368
        %v1435 = vunpack.c.h.b16 %v1368
        %v1436 = vunpack.c.l.b16 %v1369
        %v1437 = vunpack.c.h.b16 %v1369
        %v1438 = vunpack.c.l.b16 %v1370
        %v1439 = vunpack.c.h.b16 %v1370
        %v1440 = vunpack.c.l.b16 %v1371
        %v1441 = vunpack.c.h.b16 %v1371
        %v1442 = vunpack.c.l.b16 %v1372
        %v1443 = vunpack.c.h.b16 %v1372
        %v1444 = vunpack.c.l.b16 %v1373
        %v1445 = vunpack.c.h.b16 %v1373
        %v1446 = vunpack.c.l.b16 %v1374
        %v1447 = vunpack.c.h.b16 %v1374
        %v1448 = vunpack.c.l.b16 %v1375
        %v1449 = vunpack.c.h.b16 %v1375
        %v1450 = vunpack.c.l.b16 %v1376
        %v1451 = vunpack.c.h.b16 %v1376
        %v1452 = vunpack.c.l.b16 %v1377
        %v1453 = vunpack.c.h.b16 %v1377
        %v1454 = vunpack.c.l.b16 %v1378
        %v1455 = vunpack.c.h.b16 %v1378
        %v1456 = vunpack.c.l.b16 %v1379
        %v1457 = vunpack.c.h.b16 %v1379
        %v1458 = vunpack.c.l.b16 %v1380
        %v1459 = vunpack.c.h.b16 %v1380
        %v1460 = vunpack.c.l.b16 %v1381
        %v1461 = vunpack.c.h.b16 %v1381
        %v1462 = vunpack.c.l.b16 %v1382
        %v1463 = vunpack.c.h.b16 %v1382
        %v1464 = vunpack.c.l.b16 %v1383
        %v1465 = vunpack.c.h.b16 %v1383
        %v1466 = vunpack.c.l.b16 %v1384
        %v1467 = vunpack.c.h.b16 %v1384
        %v1468 = vunpack.c.l.b16 %v1385
        %v1469 = vunpack.c.h.b16 %v1385
        %v1470 = vunpack.c.l.b16 %v1386
        %v1471 = vunpack.c.h.b16 %v1386
        %v1472 = vunpack.c.l.b16 %v1387
        %v1473 = vunpack.c.h.b16 %v1387
        %v1474 = vunpack.c.l.b16 %v1388
        %v1475 = vunpack.c.h.b16 %v1388
        %v1476 = vunpack.c.l.b16 %v1389
        %v1477 = vunpack.c.h.b16 %v1389
        %v1478 = vunpack.c.l.b16 %v1390
        %v1479 = vunpack.c.h.b16 %v1390
        %v1480 = vunpack.c.l.b16 %v1391
        %v1481 = vunpack.c.h.b16 %v1391
        %v1482 = vunpack.c.l.b16 %v1392
        %v1483 = vunpack.c.h.b16 %v1392
        %v1484 = vunpack.c.l.b16 %v1393
        %v1485 = vunpack.c.h.b16 %v1393
        %v1486 = vunpack.c.l.b16 %v1394
        %v1487 = vunpack.c.h.b16 %v1394
        %v1488 = vunpack.c.l.b16 %v1395
        %v1489 = vunpack.c.h.b16 %v1395
        %v1490 = vunpack.c.l.b16 %v1396
        %v1491 = vunpack.c.h.b16 %v1396
        %v1492 = vunpack.c.l.b16 %v1397
        %v1493 = vunpack.c.h.b16 %v1397
        %v1494 = vpack.c.b16 %v1432, %v1430
        %v1495 = vpack.c.b16 %v1433, %v1431
        %v1496 = vpack.c.b16 %v1436, %v1434
        %v1497 = vpack.c.b16 %v1437, %v1435
        %v1498 = vpack.c.b16 %v1440, %v1438
        %v1499 = vpack.c.b16 %v1441, %v1439
        %v1500 = vpack.c.b16 %v1444, %v1442
        %v1501 = vpack.c.b16 %v1445, %v1443
        %v1502 = vpack.c.b16 %v1448, %v1446
        %v1503 = vpack.c.b16 %v1449, %v1447
        %v1504 = vpack.c.b16 %v1452, %v1450
        %v1505 = vpack.c.b16 %v1453, %v1451
        %v1506 = vpack.c.b16 %v1456, %v1454
        %v1507 = vpack.c.b16 %v1457, %v1455
        %v1508 = vpack.c.b16 %v1460, %v1458
        %v1509 = vpack.c.b16 %v1461, %v1459
        %v1510 = vpack.c.b16 %v1464, %v1462
        %v1511 = vpack.c.b16 %v1465, %v1463
        %v1512 = vpack.c.b16 %v1468, %v1466
        %v1513 = vpack.c.b16 %v1469, %v1467
        %v1514 = vpack.c.b16 %v1472, %v1470
        %v1515 = vpack.c.b16 %v1473, %v1471
        %v1516 = vpack.c.b16 %v1476, %v1474
        %v1517 = vpack.c.b16 %v1477, %v1475
        %v1518 = vpack.c.b16 %v1480, %v1478
        %v1519 = vpack.c.b16 %v1481, %v1479
        %v1520 = vpack.c.b16 %v1484, %v1482
        %v1521 = vpack.c.b16 %v1485, %v1483
        %v1522 = vpack.c.b16 %v1488, %v1486
        %v1523 = vpack.c.b16 %v1489, %v1487
        %v1524 = vpack.c.b16 %v1492, %v1490
        %v1525 = vpack.c.b16 %v1493, %v1491
        %1558 = vmatprep.subr.bf16.mxu0 %v1509
        %1559 = vmatpush1.bf16.msra.mxu0 %v1508
        %1560 = vmatprep.subr.bf16.mxu0 %v1507
        %1561 = vmatpush1.bf16.msra.mxu0 %v1506
        %1562 = vmatprep.subr.bf16.mxu0 %v1505
        %1563 = vmatpush1.bf16.msra.mxu0 %v1504
        %1564 = vmatprep.subr.bf16.mxu0 %v1503
        %1565 = vmatpush1.bf16.msra.mxu0 %v1502
        %1566 = vmatprep.subr.bf16.mxu0 %v1501
        %1567 = vmatpush1.bf16.msra.mxu0 %v1500
        %1568 = vmatprep.subr.bf16.mxu0 %v1499
        %1569 = vmatpush1.bf16.msra.mxu0 %v1498
        %1570 = vmatprep.subr.bf16.mxu0 %v1497
        %1571 = vmatpush1.bf16.msra.mxu0 %v1496
        %1572 = vmatprep.subr.bf16.mxu0 %v1495
        %1573 = vmatpush1.bf16.msra.mxu0 %v1494
        %1574 = vmatprep.subr.bf16.mxu0 %v1525
        %1575 = vmatpush2.bf16.msra.mxu0 %v1524
        %1576 = vmatprep.subr.bf16.mxu0 %v1523
        %1577 = vmatpush2.bf16.msra.mxu0 %v1522
        %1578 = vmatprep.subr.bf16.mxu0 %v1521
        %1579 = vmatpush2.bf16.msra.mxu0 %v1520
        %1580 = vmatprep.subr.bf16.mxu0 %v1519
        %1581 = vmatpush2.bf16.msra.mxu0 %v1518
        %1582 = vmatprep.subr.bf16.mxu0 %v1517
        %1583 = vmatpush2.bf16.msra.mxu0 %v1516
        %1584 = vmatprep.subr.bf16.mxu0 %v1515
        %1585 = vmatpush2.bf16.msra.mxu0 %v1514
        %1586 = vmatprep.subr.bf16.mxu0 %v1513
        %1587 = vmatpush2.bf16.msra.mxu0 %v1512
        %1588 = vmatprep.subr.bf16.mxu0 %v1511
        %1589 = vmatpush2.bf16.msra.mxu0 %v1510
        %1590 = vmatprep.mubr.bf16.mxu0 %v850
        %1591 = vmatmul.mubr.bf16.gmra.mxu0 %v849
        %v1592 = vpop.f32.mrf.mxu0
        %v1593 = vadd.f32 0.0, %v1592
        %v1594 = vpop.f32.mrf.mxu0
        %v1595 = vadd.f32 0.0, %v1594
        %v1596 = vpop.f32.mrf.mxu0
        %v1597 = vadd.f32 0.0, %v1596
        %v1598 = vpop.f32.mrf.mxu0
        %v1599 = vadd.f32 0.0, %v1598
        %1600 = vmatprep.mubr.bf16.mxu0 %v852
        %1601 = vmatmul.mubr.bf16.gmra.mxu0 %v851
        %v1602 = vpop.f32.mrf.mxu0
        %v1603 = vadd.f32 0.0, %v1602
        %v1604 = vpop.f32.mrf.mxu0
        %v1605 = vadd.f32 0.0, %v1604
        %v1606 = vpop.f32.mrf.mxu0
        %v1607 = vadd.f32 0.0, %v1606
        %v1608 = vpop.f32.mrf.mxu0
        %v1609 = vadd.f32 0.0, %v1608
        %1610 = vdwg.mxu0
        %s1611 = scalar_lea.vmem [#allocation2], 128
        %v1612 = vld [vmem:[%s1611] sm:$0xff]
        %v1613 = vld [vmem:[%s1611 + $0x8] sm:$0xff]
        %v1614 = vld [vmem:[%s1611 + $0x10] sm:$0xff]
        %v1615 = vld [vmem:[%s1611 + $0x18] sm:$0xff]
        %v1616 = vld [vmem:[%s1611 + $0x20] sm:$0xff]
        %v1617 = vld [vmem:[%s1611 + $0x28] sm:$0xff]
        %v1618 = vld [vmem:[%s1611 + $0x30] sm:$0xff]
        %v1619 = vld [vmem:[%s1611 + $0x38] sm:$0xff]
        %v1620 = vadd.f32 %v1612, %v1593
        %v1621 = vadd.f32 %v1613, %v1595
        %v1622 = vadd.f32 %v1614, %v1597
        %v1623 = vadd.f32 %v1615, %v1599
        %v1624 = vadd.f32 %v1616, %v1603
        %v1625 = vadd.f32 %v1617, %v1605
        %v1626 = vadd.f32 %v1618, %v1607
        %v1627 = vadd.f32 %v1619, %v1609
        %1628 = vst [vmem:[%s1611] sm:$0xff] %v1620
        %1629 = vst [vmem:[%s1611 + $0x8] sm:$0xff] %v1621
        %1630 = vst [vmem:[%s1611 + $0x10] sm:$0xff] %v1622
        %1631 = vst [vmem:[%s1611 + $0x18] sm:$0xff] %v1623
        %1632 = vst [vmem:[%s1611 + $0x20] sm:$0xff] %v1624
        %1633 = vst [vmem:[%s1611 + $0x28] sm:$0xff] %v1625
        %1634 = vst [vmem:[%s1611 + $0x30] sm:$0xff] %v1626
        %1635 = vst [vmem:[%s1611 + $0x38] sm:$0xff] %v1627
        %s1636 = scalar_lea.vmem %s405, 768 [#allocation7]
        %v1637 = vld [vmem:[%s1636] sm:$0xff]
        %v1638 = vld [vmem:[%s1636 + $0x8] sm:$0xff]
        %v1639 = vld [vmem:[%s1636 + $0x10] sm:$0xff]
        %v1640 = vld [vmem:[%s1636 + $0x18] sm:$0xff]
        %v1641 = vld [vmem:[%s1636 + $0x20] sm:$0xff]
        %v1642 = vld [vmem:[%s1636 + $0x28] sm:$0xff]
        %v1643 = vld [vmem:[%s1636 + $0x30] sm:$0xff]
        %v1644 = vld [vmem:[%s1636 + $0x38] sm:$0xff]
        %v1645 = vld [vmem:[%s1636 + $0x40] sm:$0xff]
        %v1646 = vld [vmem:[%s1636 + $0x48] sm:$0xff]
        %v1647 = vld [vmem:[%s1636 + $0x50] sm:$0xff]
        %v1648 = vld [vmem:[%s1636 + $0x58] sm:$0xff]
        %v1649 = vld [vmem:[%s1636 + $0x60] sm:$0xff]
        %v1650 = vld [vmem:[%s1636 + $0x68] sm:$0xff]
        %v1651 = vld [vmem:[%s1636 + $0x70] sm:$0xff]
        %v1652 = vld [vmem:[%s1636 + $0x78] sm:$0xff]
        %v1653 = vld [vmem:[%s1636 + $0x80] sm:$0xff]
        %v1654 = vld [vmem:[%s1636 + $0x88] sm:$0xff]
        %v1655 = vld [vmem:[%s1636 + $0x90] sm:$0xff]
        %v1656 = vld [vmem:[%s1636 + $0x98] sm:$0xff]
        %v1657 = vld [vmem:[%s1636 + $0xa0] sm:$0xff]
        %v1658 = vld [vmem:[%s1636 + $0xa8] sm:$0xff]
        %v1659 = vld [vmem:[%s1636 + $0xb0] sm:$0xff]
        %v1660 = vld [vmem:[%s1636 + $0xb8] sm:$0xff]
        %v1661 = vld [vmem:[%s1636 + $0xc0] sm:$0xff]
        %v1662 = vld [vmem:[%s1636 + $0xc8] sm:$0xff]
        %v1663 = vld [vmem:[%s1636 + $0xd0] sm:$0xff]
        %v1664 = vld [vmem:[%s1636 + $0xd8] sm:$0xff]
        %v1665 = vld [vmem:[%s1636 + $0xe0] sm:$0xff]
        %v1666 = vld [vmem:[%s1636 + $0xe8] sm:$0xff]
        %v1667 = vld [vmem:[%s1636 + $0xf0] sm:$0xff]
        %v1668 = vld [vmem:[%s1636 + $0xf8] sm:$0xff]
        %v1701 = vunpack.c.l.b16 %v1637
        %v1702 = vunpack.c.h.b16 %v1637
        %v1703 = vunpack.c.l.b16 %v1638
        %v1704 = vunpack.c.h.b16 %v1638
        %v1705 = vunpack.c.l.b16 %v1639
        %v1706 = vunpack.c.h.b16 %v1639
        %v1707 = vunpack.c.l.b16 %v1640
        %v1708 = vunpack.c.h.b16 %v1640
        %v1709 = vunpack.c.l.b16 %v1641
        %v1710 = vunpack.c.h.b16 %v1641
        %v1711 = vunpack.c.l.b16 %v1642
        %v1712 = vunpack.c.h.b16 %v1642
        %v1713 = vunpack.c.l.b16 %v1643
        %v1714 = vunpack.c.h.b16 %v1643
        %v1715 = vunpack.c.l.b16 %v1644
        %v1716 = vunpack.c.h.b16 %v1644
        %v1717 = vunpack.c.l.b16 %v1645
        %v1718 = vunpack.c.h.b16 %v1645
        %v1719 = vunpack.c.l.b16 %v1646
        %v1720 = vunpack.c.h.b16 %v1646
        %v1721 = vunpack.c.l.b16 %v1647
        %v1722 = vunpack.c.h.b16 %v1647
        %v1723 = vunpack.c.l.b16 %v1648
        %v1724 = vunpack.c.h.b16 %v1648
        %v1725 = vunpack.c.l.b16 %v1649
        %v1726 = vunpack.c.h.b16 %v1649
        %v1727 = vunpack.c.l.b16 %v1650
        %v1728 = vunpack.c.h.b16 %v1650
        %v1729 = vunpack.c.l.b16 %v1651
        %v1730 = vunpack.c.h.b16 %v1651
        %v1731 = vunpack.c.l.b16 %v1652
        %v1732 = vunpack.c.h.b16 %v1652
        %v1733 = vunpack.c.l.b16 %v1653
        %v1734 = vunpack.c.h.b16 %v1653
        %v1735 = vunpack.c.l.b16 %v1654
        %v1736 = vunpack.c.h.b16 %v1654
        %v1737 = vunpack.c.l.b16 %v1655
        %v1738 = vunpack.c.h.b16 %v1655
        %v1739 = vunpack.c.l.b16 %v1656
        %v1740 = vunpack.c.h.b16 %v1656
        %v1741 = vunpack.c.l.b16 %v1657
        %v1742 = vunpack.c.h.b16 %v1657
        %v1743 = vunpack.c.l.b16 %v1658
        %v1744 = vunpack.c.h.b16 %v1658
        %v1745 = vunpack.c.l.b16 %v1659
        %v1746 = vunpack.c.h.b16 %v1659
        %v1747 = vunpack.c.l.b16 %v1660
        %v1748 = vunpack.c.h.b16 %v1660
        %v1749 = vunpack.c.l.b16 %v1661
        %v1750 = vunpack.c.h.b16 %v1661
        %v1751 = vunpack.c.l.b16 %v1662
        %v1752 = vunpack.c.h.b16 %v1662
        %v1753 = vunpack.c.l.b16 %v1663
        %v1754 = vunpack.c.h.b16 %v1663
        %v1755 = vunpack.c.l.b16 %v1664
        %v1756 = vunpack.c.h.b16 %v1664
        %v1757 = vunpack.c.l.b16 %v1665
        %v1758 = vunpack.c.h.b16 %v1665
        %v1759 = vunpack.c.l.b16 %v1666
        %v1760 = vunpack.c.h.b16 %v1666
        %v1761 = vunpack.c.l.b16 %v1667
        %v1762 = vunpack.c.h.b16 %v1667
        %v1763 = vunpack.c.l.b16 %v1668
        %v1764 = vunpack.c.h.b16 %v1668
        %v1765 = vpack.c.b16 %v1703, %v1701
        %v1766 = vpack.c.b16 %v1704, %v1702
        %v1767 = vpack.c.b16 %v1707, %v1705
        %v1768 = vpack.c.b16 %v1708, %v1706
        %v1769 = vpack.c.b16 %v1711, %v1709
        %v1770 = vpack.c.b16 %v1712, %v1710
        %v1771 = vpack.c.b16 %v1715, %v1713
        %v1772 = vpack.c.b16 %v1716, %v1714
        %v1773 = vpack.c.b16 %v1719, %v1717
        %v1774 = vpack.c.b16 %v1720, %v1718
        %v1775 = vpack.c.b16 %v1723, %v1721
        %v1776 = vpack.c.b16 %v1724, %v1722
        %v1777 = vpack.c.b16 %v1727, %v1725
        %v1778 = vpack.c.b16 %v1728, %v1726
        %v1779 = vpack.c.b16 %v1731, %v1729
        %v1780 = vpack.c.b16 %v1732, %v1730
        %v1781 = vpack.c.b16 %v1735, %v1733
        %v1782 = vpack.c.b16 %v1736, %v1734
        %v1783 = vpack.c.b16 %v1739, %v1737
        %v1784 = vpack.c.b16 %v1740, %v1738
        %v1785 = vpack.c.b16 %v1743, %v1741
        %v1786 = vpack.c.b16 %v1744, %v1742
        %v1787 = vpack.c.b16 %v1747, %v1745
        %v1788 = vpack.c.b16 %v1748, %v1746
        %v1789 = vpack.c.b16 %v1751, %v1749
        %v1790 = vpack.c.b16 %v1752, %v1750
        %v1791 = vpack.c.b16 %v1755, %v1753
        %v1792 = vpack.c.b16 %v1756, %v1754
        %v1793 = vpack.c.b16 %v1759, %v1757
        %v1794 = vpack.c.b16 %v1760, %v1758
        %v1795 = vpack.c.b16 %v1763, %v1761
        %v1796 = vpack.c.b16 %v1764, %v1762
        %1829 = vmatprep.subr.bf16.mxu0 %v1780
        %1830 = vmatpush1.bf16.msra.mxu0 %v1779
        %1831 = vmatprep.subr.bf16.mxu0 %v1778
        %1832 = vmatpush1.bf16.msra.mxu0 %v1777
        %1833 = vmatprep.subr.bf16.mxu0 %v1776
        %1834 = vmatpush1.bf16.msra.mxu0 %v1775
        %1835 = vmatprep.subr.bf16.mxu0 %v1774
        %1836 = vmatpush1.bf16.msra.mxu0 %v1773
        %1837 = vmatprep.subr.bf16.mxu0 %v1772
        %1838 = vmatpush1.bf16.msra.mxu0 %v1771
        %1839 = vmatprep.subr.bf16.mxu0 %v1770
        %1840 = vmatpush1.bf16.msra.mxu0 %v1769
        %1841 = vmatprep.subr.bf16.mxu0 %v1768
        %1842 = vmatpush1.bf16.msra.mxu0 %v1767
        %1843 = vmatprep.subr.bf16.mxu0 %v1766
        %1844 = vmatpush1.bf16.msra.mxu0 %v1765
        %1845 = vmatprep.subr.bf16.mxu0 %v1796
        %1846 = vmatpush2.bf16.msra.mxu0 %v1795
        %1847 = vmatprep.subr.bf16.mxu0 %v1794
        %1848 = vmatpush2.bf16.msra.mxu0 %v1793
        %1849 = vmatprep.subr.bf16.mxu0 %v1792
        %1850 = vmatpush2.bf16.msra.mxu0 %v1791
        %1851 = vmatprep.subr.bf16.mxu0 %v1790
        %1852 = vmatpush2.bf16.msra.mxu0 %v1789
        %1853 = vmatprep.subr.bf16.mxu0 %v1788
        %1854 = vmatpush2.bf16.msra.mxu0 %v1787
        %1855 = vmatprep.subr.bf16.mxu0 %v1786
        %1856 = vmatpush2.bf16.msra.mxu0 %v1785
        %1857 = vmatprep.subr.bf16.mxu0 %v1784
        %1858 = vmatpush2.bf16.msra.mxu0 %v1783
        %1859 = vmatprep.subr.bf16.mxu0 %v1782
        %1860 = vmatpush2.bf16.msra.mxu0 %v1781
        %1861 = vmatprep.mubr.bf16.mxu0 %v850
        %1862 = vmatmul.mubr.bf16.gmra.mxu0 %v849
        %v1863 = vpop.f32.mrf.mxu0
        %v1864 = vadd.f32 0.0, %v1863
        %v1865 = vpop.f32.mrf.mxu0
        %v1866 = vadd.f32 0.0, %v1865
        %v1867 = vpop.f32.mrf.mxu0
        %v1868 = vadd.f32 0.0, %v1867
        %v1869 = vpop.f32.mrf.mxu0
        %v1870 = vadd.f32 0.0, %v1869
        %1871 = vmatprep.mubr.bf16.mxu0 %v852
        %1872 = vmatmul.mubr.bf16.gmra.mxu0 %v851
        %v1873 = vpop.f32.mrf.mxu0
        %v1874 = vadd.f32 0.0, %v1873
        %v1875 = vpop.f32.mrf.mxu0
        %v1876 = vadd.f32 0.0, %v1875
        %v1877 = vpop.f32.mrf.mxu0
        %v1878 = vadd.f32 0.0, %v1877
        %v1879 = vpop.f32.mrf.mxu0
        %v1880 = vadd.f32 0.0, %v1879
        %1881 = vdwg.mxu0
        %s1882 = scalar_lea.vmem [#allocation2], 192
        %v1883 = vld [vmem:[%s1882] sm:$0xff]
        %v1884 = vld [vmem:[%s1882 + $0x8] sm:$0xff]
        %v1885 = vld [vmem:[%s1882 + $0x10] sm:$0xff]
        %v1886 = vld [vmem:[%s1882 + $0x18] sm:$0xff]
        %v1887 = vld [vmem:[%s1882 + $0x20] sm:$0xff]
        %v1888 = vld [vmem:[%s1882 + $0x28] sm:$0xff]
        %v1889 = vld [vmem:[%s1882 + $0x30] sm:$0xff]
        %v1890 = vld [vmem:[%s1882 + $0x38] sm:$0xff]
        %v1891 = vadd.f32 %v1883, %v1864
        %v1892 = vadd.f32 %v1884, %v1866
        %v1893 = vadd.f32 %v1885, %v1868
        %v1894 = vadd.f32 %v1886, %v1870
        %v1895 = vadd.f32 %v1887, %v1874
        %v1896 = vadd.f32 %v1888, %v1876
        %v1897 = vadd.f32 %v1889, %v1878
        %v1898 = vadd.f32 %v1890, %v1880
        %1899 = vst [vmem:[%s1882] sm:$0xff] %v1891
        %1900 = vst [vmem:[%s1882 + $0x8] sm:$0xff] %v1892
        %1901 = vst [vmem:[%s1882 + $0x10] sm:$0xff] %v1893
        %1902 = vst [vmem:[%s1882 + $0x18] sm:$0xff] %v1894
        %1903 = vst [vmem:[%s1882 + $0x20] sm:$0xff] %v1895
        %1904 = vst [vmem:[%s1882 + $0x28] sm:$0xff] %v1896
        %1905 = vst [vmem:[%s1882 + $0x30] sm:$0xff] %v1897
        %1906 = vst [vmem:[%s1882 + $0x38] sm:$0xff] %v1898
        %p1907 = scmp.eq.s32.totalorder %s34, 7
        // Predicated region
        $region81: #{tpu_custom_call.1} parent=47 // pred_check
          %p1908 = pneg %p1907
        $region82: #{tpu_custom_call.1} parent=47 // pred_check_branch
          %1910 = sbr.rel (%p1908) target = $region84
        $region83: #{tpu_custom_call.1} parent=47 // pred_region
          %v1911 = vld [vmem:[#allocation3] sm:$0x3]
          %v1912 = vld [vmem:[#allocation13] sm:$0x3]
          %v1913 = vadd.f32 %v1911, %v1912
          %v1914 = vmax.f32 %v1913, 0.0
          %v1916 = vlaneseq
          %v1917 = vshrl.u32 %v1916, 7
          %v1918 = vsub.s32 0, %v1917
          %v1919 = vrot.slane %v1914, %v1918
          %v1920 = vlaneseq
          %v1921 = vshrl.u32 %v1920, 7
          %v1922 = vsub.s32 1, %v1921
          %v1923 = vrot.slane %v1914, %v1922
          %v1926 = vpack.c.bf16 %v1919, %v1919
          %v1927 = vpack.c.bf16 %v1923, %v1923
          %s1928 = scalar_lea.vmem [#allocation10], 1024
          %v1929 = vld [vmem:[%s1928] sm:$0xff]
          %v1930 = vld [vmem:[%s1928 + $0x8] sm:$0xff]
          %v1931 = vld [vmem:[%s1928 + $0x10] sm:$0xff]
          %v1932 = vld [vmem:[%s1928 + $0x18] sm:$0xff]
          %v1933 = vld [vmem:[%s1928 + $0x20] sm:$0xff]
          %v1934 = vld [vmem:[%s1928 + $0x28] sm:$0xff]
          %v1935 = vld [vmem:[%s1928 + $0x30] sm:$0xff]
          %v1936 = vld [vmem:[%s1928 + $0x38] sm:$0xff]
          %v1937 = vld [vmem:[%s1928 + $0x40] sm:$0xff]
          %v1938 = vld [vmem:[%s1928 + $0x48] sm:$0xff]
          %v1939 = vld [vmem:[%s1928 + $0x50] sm:$0xff]
          %v1940 = vld [vmem:[%s1928 + $0x58] sm:$0xff]
          %v1941 = vld [vmem:[%s1928 + $0x60] sm:$0xff]
          %v1942 = vld [vmem:[%s1928 + $0x68] sm:$0xff]
          %v1943 = vld [vmem:[%s1928 + $0x70] sm:$0xff]
          %v1944 = vld [vmem:[%s1928 + $0x78] sm:$0xff]
          %v1945 = vld [vmem:[%s1928 + $0x80] sm:$0xff]
          %v1946 = vld [vmem:[%s1928 + $0x88] sm:$0xff]
          %v1947 = vld [vmem:[%s1928 + $0x90] sm:$0xff]
          %v1948 = vld [vmem:[%s1928 + $0x98] sm:$0xff]
          %v1949 = vld [vmem:[%s1928 + $0xa0] sm:$0xff]
          %v1950 = vld [vmem:[%s1928 + $0xa8] sm:$0xff]
          %v1951 = vld [vmem:[%s1928 + $0xb0] sm:$0xff]
          %v1952 = vld [vmem:[%s1928 + $0xb8] sm:$0xff]
          %v1953 = vld [vmem:[%s1928 + $0xc0] sm:$0xff]
          %v1954 = vld [vmem:[%s1928 + $0xc8] sm:$0xff]
          %v1955 = vld [vmem:[%s1928 + $0xd0] sm:$0xff]
          %v1956 = vld [vmem:[%s1928 + $0xd8] sm:$0xff]
          %v1957 = vld [vmem:[%s1928 + $0xe0] sm:$0xff]
          %v1958 = vld [vmem:[%s1928 + $0xe8] sm:$0xff]
          %v1959 = vld [vmem:[%s1928 + $0xf0] sm:$0xff]
          %v1960 = vld [vmem:[%s1928 + $0xf8] sm:$0xff]
          %v1961 = vld [vmem:[#allocation15] sm:$0x3]
          %v1994 = vunpack.c.l.b16 %v1929
          %v1995 = vunpack.c.h.b16 %v1929
          %v1996 = vunpack.c.l.b16 %v1930
          %v1997 = vunpack.c.h.b16 %v1930
          %v1998 = vunpack.c.l.b16 %v1931
          %v1999 = vunpack.c.h.b16 %v1931
          %v2000 = vunpack.c.l.b16 %v1932
          %v2001 = vunpack.c.h.b16 %v1932
          %v2002 = vunpack.c.l.b16 %v1933
          %v2003 = vunpack.c.h.b16 %v1933
          %v2004 = vunpack.c.l.b16 %v1934
          %v2005 = vunpack.c.h.b16 %v1934
          %v2006 = vunpack.c.l.b16 %v1935
          %v2007 = vunpack.c.h.b16 %v1935
          %v2008 = vunpack.c.l.b16 %v1936
          %v2009 = vunpack.c.h.b16 %v1936
          %v2010 = vunpack.c.l.b16 %v1937
          %v2011 = vunpack.c.h.b16 %v1937
          %v2012 = vunpack.c.l.b16 %v1938
          %v2013 = vunpack.c.h.b16 %v1938
          %v2014 = vunpack.c.l.b16 %v1939
          %v2015 = vunpack.c.h.b16 %v1939
          %v2016 = vunpack.c.l.b16 %v1940
          %v2017 = vunpack.c.h.b16 %v1940
          %v2018 = vunpack.c.l.b16 %v1941
          %v2019 = vunpack.c.h.b16 %v1941
          %v2020 = vunpack.c.l.b16 %v1942
          %v2021 = vunpack.c.h.b16 %v1942
          %v2022 = vunpack.c.l.b16 %v1943
          %v2023 = vunpack.c.h.b16 %v1943
          %v2024 = vunpack.c.l.b16 %v1944
          %v2025 = vunpack.c.h.b16 %v1944
          %v2026 = vunpack.c.l.b16 %v1945
          %v2027 = vunpack.c.h.b16 %v1945
          %v2028 = vunpack.c.l.b16 %v1946
          %v2029 = vunpack.c.h.b16 %v1946
          %v2030 = vunpack.c.l.b16 %v1947
          %v2031 = vunpack.c.h.b16 %v1947
          %v2032 = vunpack.c.l.b16 %v1948
          %v2033 = vunpack.c.h.b16 %v1948
          %v2034 = vunpack.c.l.b16 %v1949
          %v2035 = vunpack.c.h.b16 %v1949
          %v2036 = vunpack.c.l.b16 %v1950
          %v2037 = vunpack.c.h.b16 %v1950
          %v2038 = vunpack.c.l.b16 %v1951
          %v2039 = vunpack.c.h.b16 %v1951
          %v2040 = vunpack.c.l.b16 %v1952
          %v2041 = vunpack.c.h.b16 %v1952
          %v2042 = vunpack.c.l.b16 %v1953
          %v2043 = vunpack.c.h.b16 %v1953
          %v2044 = vunpack.c.l.b16 %v1954
          %v2045 = vunpack.c.h.b16 %v1954
          %v2046 = vunpack.c.l.b16 %v1955
          %v2047 = vunpack.c.h.b16 %v1955
          %v2048 = vunpack.c.l.b16 %v1956
          %v2049 = vunpack.c.h.b16 %v1956
          %v2050 = vunpack.c.l.b16 %v1957
          %v2051 = vunpack.c.h.b16 %v1957
          %v2052 = vunpack.c.l.b16 %v1958
          %v2053 = vunpack.c.h.b16 %v1958
          %v2054 = vunpack.c.l.b16 %v1959
          %v2055 = vunpack.c.h.b16 %v1959
          %v2056 = vunpack.c.l.b16 %v1960
          %v2057 = vunpack.c.h.b16 %v1960
          %v2058 = vpack.c.b16 %v1996, %v1994
          %v2059 = vpack.c.b16 %v1997, %v1995
          %v2060 = vpack.c.b16 %v2000, %v1998
          %v2061 = vpack.c.b16 %v2001, %v1999
          %v2062 = vpack.c.b16 %v2004, %v2002
          %v2063 = vpack.c.b16 %v2005, %v2003
          %v2064 = vpack.c.b16 %v2008, %v2006
          %v2065 = vpack.c.b16 %v2009, %v2007
          %v2066 = vpack.c.b16 %v2012, %v2010
          %v2067 = vpack.c.b16 %v2013, %v2011
          %v2068 = vpack.c.b16 %v2016, %v2014
          %v2069 = vpack.c.b16 %v2017, %v2015
          %v2070 = vpack.c.b16 %v2020, %v2018
          %v2071 = vpack.c.b16 %v2021, %v2019
          %v2072 = vpack.c.b16 %v2024, %v2022
          %v2073 = vpack.c.b16 %v2025, %v2023
          %v2074 = vpack.c.b16 %v2028, %v2026
          %v2075 = vpack.c.b16 %v2029, %v2027
          %v2076 = vpack.c.b16 %v2032, %v2030
          %v2077 = vpack.c.b16 %v2033, %v2031
          %v2078 = vpack.c.b16 %v2036, %v2034
          %v2079 = vpack.c.b16 %v2037, %v2035
          %v2080 = vpack.c.b16 %v2040, %v2038
          %v2081 = vpack.c.b16 %v2041, %v2039
          %v2082 = vpack.c.b16 %v2044, %v2042
          %v2083 = vpack.c.b16 %v2045, %v2043
          %v2084 = vpack.c.b16 %v2048, %v2046
          %v2085 = vpack.c.b16 %v2049, %v2047
          %v2086 = vpack.c.b16 %v2052, %v2050
          %v2087 = vpack.c.b16 %v2053, %v2051
          %v2088 = vpack.c.b16 %v2056, %v2054
          %v2089 = vpack.c.b16 %v2057, %v2055
          %v2123 = vlaneseq
          %v2124 = vshrl.u32 %v2123, 7
          %v2125 = vsub.s32 0, %v2124
          %v2126 = vrot.slane %v1961, %v2125
          %v2127 = vlaneseq
          %v2128 = vshrl.u32 %v2127, 7
          %v2129 = vsub.s32 1, %v2128
          %v2130 = vrot.slane %v1961, %v2129
          %2133 = vmatprep.subr.bf16.mxu0 %v2073
          %2134 = vmatpush1.bf16.msra.mxu0 %v2072
          %2135 = vmatprep.subr.bf16.mxu0 %v2071
          %2136 = vmatpush1.bf16.msra.mxu0 %v2070
          %2137 = vmatprep.subr.bf16.mxu0 %v2069
          %2138 = vmatpush1.bf16.msra.mxu0 %v2068
          %2139 = vmatprep.subr.bf16.mxu0 %v2067
          %2140 = vmatpush1.bf16.msra.mxu0 %v2066
          %2141 = vmatprep.subr.bf16.mxu0 %v2065
          %2142 = vmatpush1.bf16.msra.mxu0 %v2064
          %2143 = vmatprep.subr.bf16.mxu0 %v2063
          %2144 = vmatpush1.bf16.msra.mxu0 %v2062
          %2145 = vmatprep.subr.bf16.mxu0 %v2061
          %2146 = vmatpush1.bf16.msra.mxu0 %v2060
          %2147 = vmatprep.subr.bf16.mxu0 %v2059
          %2148 = vmatpush1.bf16.msra.mxu0 %v2058
          %2149 = vmatprep.subr.bf16.mxu0 %v2089
          %2150 = vmatpush2.bf16.msra.mxu0 %v2088
          %2151 = vmatprep.subr.bf16.mxu0 %v2087
          %2152 = vmatpush2.bf16.msra.mxu0 %v2086
          %2153 = vmatprep.subr.bf16.mxu0 %v2085
          %2154 = vmatpush2.bf16.msra.mxu0 %v2084
          %2155 = vmatprep.subr.bf16.mxu0 %v2083
          %2156 = vmatpush2.bf16.msra.mxu0 %v2082
          %2157 = vmatprep.subr.bf16.mxu0 %v2081
          %2158 = vmatpush2.bf16.msra.mxu0 %v2080
          %2159 = vmatprep.subr.bf16.mxu0 %v2079
          %2160 = vmatpush2.bf16.msra.mxu0 %v2078
          %2161 = vmatprep.subr.bf16.mxu0 %v2077
          %2162 = vmatpush2.bf16.msra.mxu0 %v2076
          %2163 = vmatprep.subr.bf16.mxu0 %v2075
          %2164 = vmatpush2.bf16.msra.mxu0 %v2074
          %2165 = vmatprep.mubr.bf16.mxu0 %v1927
          %2166 = vmatmul.mubr.bf16.gmra.mxu0 %v1926
          %v2167 = vpop.f32.mrf.mxu0
          %v2168 = vadd.f32 %v2126, %v2167
          %v2169 = vpop.f32.mrf.mxu0
          %v2170 = vadd.f32 %v2130, %v2169
          %v2171 = vpop.f32.mrf.mxu0
          %v2172 = vpop.f32.mrf.mxu0
          %2173 = vdwg.mxu0
          %v2174 = vld [vmem:[#allocation2] sm:$0xff]
          %v2175 = vld [vmem:[#allocation2 + $0x8] sm:$0xff]
          %v2176 = vld [vmem:[#allocation2 + $0x10] sm:$0xff]
          %v2177 = vld [vmem:[#allocation2 + $0x18] sm:$0xff]
          %v2178 = vld [vmem:[#allocation2 + $0x20] sm:$0xff]
          %v2179 = vld [vmem:[#allocation2 + $0x28] sm:$0xff]
          %v2180 = vld [vmem:[#allocation2 + $0x30] sm:$0xff]
          %v2181 = vld [vmem:[#allocation2 + $0x38] sm:$0xff]
          %v2182 = vld [vmem:[#allocation12] sm:$0x3]
          %v2184 = vlaneseq
          %v2185 = vshrl.u32 %v2184, 7
          %v2186 = vsub.s32 0, %v2185
          %v2187 = vrot.slane %v2182, %v2186
          %v2188 = vlaneseq
          %v2189 = vshrl.u32 %v2188, 7
          %v2190 = vsub.s32 1, %v2189
          %v2191 = vrot.slane %v2182, %v2190
          %v2194 = vadd.f32 %v2174, %v2187
          %v2195 = vadd.f32 %v2175, %v2191
          %v2196 = vadd.f32 %v2176, %v2187
          %v2197 = vadd.f32 %v2177, %v2191
          %v2198 = vadd.f32 %v2178, %v2187
          %v2199 = vadd.f32 %v2179, %v2191
          %v2200 = vadd.f32 %v2180, %v2187
          %v2201 = vadd.f32 %v2181, %v2191
          %v2202 = vmax.f32 %v2194, 0.0
          %v2203 = vmax.f32 %v2195, 0.0
          %v2204 = vmax.f32 %v2196, 0.0
          %v2205 = vmax.f32 %v2197, 0.0
          %v2206 = vmax.f32 %v2198, 0.0
          %v2207 = vmax.f32 %v2199, 0.0
          %v2208 = vmax.f32 %v2200, 0.0
          %v2209 = vmax.f32 %v2201, 0.0
          %v2210 = vpack.c.bf16 %v2204, %v2202
          %v2211 = vpack.c.bf16 %v2205, %v2203
          %v2212 = vpack.c.bf16 %v2208, %v2206
          %v2213 = vpack.c.bf16 %v2209, %v2207
          %v2214 = vld [vmem:[#allocation10] sm:$0xff]
          %v2215 = vld [vmem:[#allocation10 + $0x8] sm:$0xff]
          %v2216 = vld [vmem:[#allocation10 + $0x10] sm:$0xff]
          %v2217 = vld [vmem:[#allocation10 + $0x18] sm:$0xff]
          %v2218 = vld [vmem:[#allocation10 + $0x20] sm:$0xff]
          %v2219 = vld [vmem:[#allocation10 + $0x28] sm:$0xff]
          %v2220 = vld [vmem:[#allocation10 + $0x30] sm:$0xff]
          %v2221 = vld [vmem:[#allocation10 + $0x38] sm:$0xff]
          %v2222 = vld [vmem:[#allocation10 + $0x40] sm:$0xff]
          %v2223 = vld [vmem:[#allocation10 + $0x48] sm:$0xff]
          %v2224 = vld [vmem:[#allocation10 + $0x50] sm:$0xff]
          %v2225 = vld [vmem:[#allocation10 + $0x58] sm:$0xff]
          %v2226 = vld [vmem:[#allocation10 + $0x60] sm:$0xff]
          %v2227 = vld [vmem:[#allocation10 + $0x68] sm:$0xff]
          %v2228 = vld [vmem:[#allocation10 + $0x70] sm:$0xff]
          %v2229 = vld [vmem:[#allocation10 + $0x78] sm:$0xff]
          %v2230 = vld [vmem:[#allocation10 + $0x80] sm:$0xff]
          %v2231 = vld [vmem:[#allocation10 + $0x88] sm:$0xff]
          %v2232 = vld [vmem:[#allocation10 + $0x90] sm:$0xff]
          %v2233 = vld [vmem:[#allocation10 + $0x98] sm:$0xff]
          %v2234 = vld [vmem:[#allocation10 + $0xa0] sm:$0xff]
          %v2235 = vld [vmem:[#allocation10 + $0xa8] sm:$0xff]
          %v2236 = vld [vmem:[#allocation10 + $0xb0] sm:$0xff]
          %v2237 = vld [vmem:[#allocation10 + $0xb8] sm:$0xff]
          %v2238 = vld [vmem:[#allocation10 + $0xc0] sm:$0xff]
          %v2239 = vld [vmem:[#allocation10 + $0xc8] sm:$0xff]
          %v2240 = vld [vmem:[#allocation10 + $0xd0] sm:$0xff]
          %v2241 = vld [vmem:[#allocation10 + $0xd8] sm:$0xff]
          %v2242 = vld [vmem:[#allocation10 + $0xe0] sm:$0xff]
          %v2243 = vld [vmem:[#allocation10 + $0xe8] sm:$0xff]
          %v2244 = vld [vmem:[#allocation10 + $0xf0] sm:$0xff]
          %v2245 = vld [vmem:[#allocation10 + $0xf8] sm:$0xff]
          %v2246 = vld [vmem:[%s1340] sm:$0xff]
          %v2247 = vld [vmem:[%s1340 + $0x8] sm:$0xff]
          %v2248 = vld [vmem:[%s1340 + $0x10] sm:$0xff]
          %v2249 = vld [vmem:[%s1340 + $0x18] sm:$0xff]
          %v2250 = vld [vmem:[%s1340 + $0x20] sm:$0xff]
          %v2251 = vld [vmem:[%s1340 + $0x28] sm:$0xff]
          %v2252 = vld [vmem:[%s1340 + $0x30] sm:$0xff]
          %v2253 = vld [vmem:[%s1340 + $0x38] sm:$0xff]
          %s2254 = scalar_lea.vmem [#allocation12], 2
          %v2255 = vld [vmem:[%s2254] sm:$0x3]
          %v2257 = vlaneseq
          %v2258 = vshrl.u32 %v2257, 7
          %v2259 = vsub.s32 0, %v2258
          %v2260 = vrot.slane %v2255, %v2259
          %v2261 = vlaneseq
          %v2262 = vshrl.u32 %v2261, 7
          %v2263 = vsub.s32 1, %v2262
          %v2264 = vrot.slane %v2255, %v2263
          %v2267 = vadd.f32 %v2246, %v2260
          %v2268 = vadd.f32 %v2247, %v2264
          %v2269 = vadd.f32 %v2248, %v2260
          %v2270 = vadd.f32 %v2249, %v2264
          %v2271 = vadd.f32 %v2250, %v2260
          %v2272 = vadd.f32 %v2251, %v2264
          %v2273 = vadd.f32 %v2252, %v2260
          %v2274 = vadd.f32 %v2253, %v2264
          %v2275 = vmax.f32 %v2267, 0.0
          %v2276 = vmax.f32 %v2268, 0.0
          %v2277 = vmax.f32 %v2269, 0.0
          %v2278 = vmax.f32 %v2270, 0.0
          %v2279 = vmax.f32 %v2271, 0.0
          %v2280 = vmax.f32 %v2272, 0.0
          %v2281 = vmax.f32 %v2273, 0.0
          %v2282 = vmax.f32 %v2274, 0.0
          %v2283 = vpack.c.bf16 %v2277, %v2275
          %v2284 = vpack.c.bf16 %v2278, %v2276
          %v2285 = vpack.c.bf16 %v2281, %v2279
          %v2286 = vpack.c.bf16 %v2282, %v2280
          %s2287 = scalar_lea.vmem [#allocation10], 256
          %v2288 = vld [vmem:[%s2287] sm:$0xff]
          %v2289 = vld [vmem:[%s2287 + $0x8] sm:$0xff]
          %v2290 = vld [vmem:[%s2287 + $0x10] sm:$0xff]
          %v2291 = vld [vmem:[%s2287 + $0x18] sm:$0xff]
          %v2292 = vld [vmem:[%s2287 + $0x20] sm:$0xff]
          %v2293 = vld [vmem:[%s2287 + $0x28] sm:$0xff]
          %v2294 = vld [vmem:[%s2287 + $0x30] sm:$0xff]
          %v2295 = vld [vmem:[%s2287 + $0x38] sm:$0xff]
          %v2296 = vld [vmem:[%s2287 + $0x40] sm:$0xff]
          %v2297 = vld [vmem:[%s2287 + $0x48] sm:$0xff]
          %v2298 = vld [vmem:[%s2287 + $0x50] sm:$0xff]
          %v2299 = vld [vmem:[%s2287 + $0x58] sm:$0xff]
          %v2300 = vld [vmem:[%s2287 + $0x60] sm:$0xff]
          %v2301 = vld [vmem:[%s2287 + $0x68] sm:$0xff]
          %v2302 = vld [vmem:[%s2287 + $0x70] sm:$0xff]
          %v2303 = vld [vmem:[%s2287 + $0x78] sm:$0xff]
          %v2304 = vld [vmem:[%s2287 + $0x80] sm:$0xff]
          %v2305 = vld [vmem:[%s2287 + $0x88] sm:$0xff]
          %v2306 = vld [vmem:[%s2287 + $0x90] sm:$0xff]
          %v2307 = vld [vmem:[%s2287 + $0x98] sm:$0xff]
          %v2308 = vld [vmem:[%s2287 + $0xa0] sm:$0xff]
          %v2309 = vld [vmem:[%s2287 + $0xa8] sm:$0xff]
          %v2310 = vld [vmem:[%s2287 + $0xb0] sm:$0xff]
          %v2311 = vld [vmem:[%s2287 + $0xb8] sm:$0xff]
          %v2312 = vld [vmem:[%s2287 + $0xc0] sm:$0xff]
          %v2313 = vld [vmem:[%s2287 + $0xc8] sm:$0xff]
          %v2314 = vld [vmem:[%s2287 + $0xd0] sm:$0xff]
          %v2315 = vld [vmem:[%s2287 + $0xd8] sm:$0xff]
          %v2316 = vld [vmem:[%s2287 + $0xe0] sm:$0xff]
          %v2317 = vld [vmem:[%s2287 + $0xe8] sm:$0xff]
          %v2318 = vld [vmem:[%s2287 + $0xf0] sm:$0xff]
          %v2319 = vld [vmem:[%s2287 + $0xf8] sm:$0xff]
          %v2352 = vunpack.c.l.b16 %v2288
          %v2353 = vunpack.c.h.b16 %v2288
          %v2354 = vunpack.c.l.b16 %v2289
          %v2355 = vunpack.c.h.b16 %v2289
          %v2356 = vunpack.c.l.b16 %v2290
          %v2357 = vunpack.c.h.b16 %v2290
          %v2358 = vunpack.c.l.b16 %v2291
          %v2359 = vunpack.c.h.b16 %v2291
          %v2360 = vunpack.c.l.b16 %v2292
          %v2361 = vunpack.c.h.b16 %v2292
          %v2362 = vunpack.c.l.b16 %v2293
          %v2363 = vunpack.c.h.b16 %v2293
          %v2364 = vunpack.c.l.b16 %v2294
          %v2365 = vunpack.c.h.b16 %v2294
          %v2366 = vunpack.c.l.b16 %v2295
          %v2367 = vunpack.c.h.b16 %v2295
          %v2368 = vunpack.c.l.b16 %v2296
          %v2369 = vunpack.c.h.b16 %v2296
          %v2370 = vunpack.c.l.b16 %v2297
          %v2371 = vunpack.c.h.b16 %v2297
          %v2372 = vunpack.c.l.b16 %v2298
          %v2373 = vunpack.c.h.b16 %v2298
          %v2374 = vunpack.c.l.b16 %v2299
          %v2375 = vunpack.c.h.b16 %v2299
          %v2376 = vunpack.c.l.b16 %v2300
          %v2377 = vunpack.c.h.b16 %v2300
          %v2378 = vunpack.c.l.b16 %v2301
          %v2379 = vunpack.c.h.b16 %v2301
          %v2380 = vunpack.c.l.b16 %v2302
          %v2381 = vunpack.c.h.b16 %v2302
          %v2382 = vunpack.c.l.b16 %v2303
          %v2383 = vunpack.c.h.b16 %v2303
          %v2384 = vunpack.c.l.b16 %v2304
          %v2385 = vunpack.c.h.b16 %v2304
          %v2386 = vunpack.c.l.b16 %v2305
          %v2387 = vunpack.c.h.b16 %v2305
          %v2388 = vunpack.c.l.b16 %v2306
          %v2389 = vunpack.c.h.b16 %v2306
          %v2390 = vunpack.c.l.b16 %v2307
          %v2391 = vunpack.c.h.b16 %v2307
          %v2392 = vunpack.c.l.b16 %v2308
          %v2393 = vunpack.c.h.b16 %v2308
          %v2394 = vunpack.c.l.b16 %v2309
          %v2395 = vunpack.c.h.b16 %v2309
          %v2396 = vunpack.c.l.b16 %v2310
          %v2397 = vunpack.c.h.b16 %v2310
          %v2398 = vunpack.c.l.b16 %v2311
          %v2399 = vunpack.c.h.b16 %v2311
          %v2400 = vunpack.c.l.b16 %v2312
          %v2401 = vunpack.c.h.b16 %v2312
          %v2402 = vunpack.c.l.b16 %v2313
          %v2403 = vunpack.c.h.b16 %v2313
          %v2404 = vunpack.c.l.b16 %v2314
          %v2405 = vunpack.c.h.b16 %v2314
          %v2406 = vunpack.c.l.b16 %v2315
          %v2407 = vunpack.c.h.b16 %v2315
          %v2408 = vunpack.c.l.b16 %v2316
          %v2409 = vunpack.c.h.b16 %v2316
          %v2410 = vunpack.c.l.b16 %v2317
          %v2411 = vunpack.c.h.b16 %v2317
          %v2412 = vunpack.c.l.b16 %v2318
          %v2413 = vunpack.c.h.b16 %v2318
          %v2414 = vunpack.c.l.b16 %v2319
          %v2415 = vunpack.c.h.b16 %v2319
          %v2416 = vpack.c.b16 %v2354, %v2352
          %v2417 = vpack.c.b16 %v2355, %v2353
          %v2418 = vpack.c.b16 %v2358, %v2356
          %v2419 = vpack.c.b16 %v2359, %v2357
          %v2420 = vpack.c.b16 %v2362, %v2360
          %v2421 = vpack.c.b16 %v2363, %v2361
          %v2422 = vpack.c.b16 %v2366, %v2364
          %v2423 = vpack.c.b16 %v2367, %v2365
          %v2424 = vpack.c.b16 %v2370, %v2368
          %v2425 = vpack.c.b16 %v2371, %v2369
          %v2426 = vpack.c.b16 %v2374, %v2372
          %v2427 = vpack.c.b16 %v2375, %v2373
          %v2428 = vpack.c.b16 %v2378, %v2376
          %v2429 = vpack.c.b16 %v2379, %v2377
          %v2430 = vpack.c.b16 %v2382, %v2380
          %v2431 = vpack.c.b16 %v2383, %v2381
          %v2432 = vpack.c.b16 %v2386, %v2384
          %v2433 = vpack.c.b16 %v2387, %v2385
          %v2434 = vpack.c.b16 %v2390, %v2388
          %v2435 = vpack.c.b16 %v2391, %v2389
          %v2436 = vpack.c.b16 %v2394, %v2392
          %v2437 = vpack.c.b16 %v2395, %v2393
          %v2438 = vpack.c.b16 %v2398, %v2396
          %v2439 = vpack.c.b16 %v2399, %v2397
          %v2440 = vpack.c.b16 %v2402, %v2400
          %v2441 = vpack.c.b16 %v2403, %v2401
          %v2442 = vpack.c.b16 %v2406, %v2404
          %v2443 = vpack.c.b16 %v2407, %v2405
          %v2444 = vpack.c.b16 %v2410, %v2408
          %v2445 = vpack.c.b16 %v2411, %v2409
          %v2446 = vpack.c.b16 %v2414, %v2412
          %v2447 = vpack.c.b16 %v2415, %v2413
          %2480 = vmatprep.subr.bf16.mxu0 %v2431
          %2481 = vmatpush1.bf16.msra.mxu0 %v2430
          %2482 = vmatprep.subr.bf16.mxu0 %v2429
          %2483 = vmatpush1.bf16.msra.mxu0 %v2428
          %2484 = vmatprep.subr.bf16.mxu0 %v2427
          %2485 = vmatpush1.bf16.msra.mxu0 %v2426
          %2486 = vmatprep.subr.bf16.mxu0 %v2425
          %2487 = vmatpush1.bf16.msra.mxu0 %v2424
          %2488 = vmatprep.subr.bf16.mxu0 %v2423
          %2489 = vmatpush1.bf16.msra.mxu0 %v2422
          %2490 = vmatprep.subr.bf16.mxu0 %v2421
          %2491 = vmatpush1.bf16.msra.mxu0 %v2420
          %2492 = vmatprep.subr.bf16.mxu0 %v2419
          %2493 = vmatpush1.bf16.msra.mxu0 %v2418
          %2494 = vmatprep.subr.bf16.mxu0 %v2417
          %2495 = vmatpush1.bf16.msra.mxu0 %v2416
          %2496 = vmatprep.subr.bf16.mxu0 %v2447
          %2497 = vmatpush2.bf16.msra.mxu0 %v2446
          %2498 = vmatprep.subr.bf16.mxu0 %v2445
          %2499 = vmatpush2.bf16.msra.mxu0 %v2444
          %2500 = vmatprep.subr.bf16.mxu0 %v2443
          %2501 = vmatpush2.bf16.msra.mxu0 %v2442
          %2502 = vmatprep.subr.bf16.mxu0 %v2441
          %2503 = vmatpush2.bf16.msra.mxu0 %v2440
          %2504 = vmatprep.subr.bf16.mxu0 %v2439
          %2505 = vmatpush2.bf16.msra.mxu0 %v2438
          %2506 = vmatprep.subr.bf16.mxu0 %v2437
          %2507 = vmatpush2.bf16.msra.mxu0 %v2436
          %2508 = vmatprep.subr.bf16.mxu0 %v2435
          %2509 = vmatpush2.bf16.msra.mxu0 %v2434
          %2510 = vmatprep.subr.bf16.mxu0 %v2433
          %2511 = vmatpush2.bf16.msra.mxu0 %v2432
          %2512 = vmatprep.mubr.bf16.mxu0 %v2284
          %2513 = vmatmul.mubr.bf16.gmra.mxu0 %v2283
          %v2514 = vpop.f32.mrf.mxu0
          %v2515 = vadd.f32 0.0, %v2514
          %v2516 = vpop.f32.mrf.mxu0
          %v2517 = vadd.f32 0.0, %v2516
          %v2518 = vpop.f32.mrf.mxu0
          %v2519 = vadd.f32 0.0, %v2518
          %v2520 = vpop.f32.mrf.mxu0
          %v2521 = vadd.f32 0.0, %v2520
          %2522 = vmatprep.mubr.bf16.mxu0 %v2286
          %2523 = vmatmul.mubr.bf16.gmra.mxu0 %v2285
          %v2524 = vpop.f32.mrf.mxu0
          %v2525 = vadd.f32 0.0, %v2524
          %v2526 = vpop.f32.mrf.mxu0
          %v2527 = vadd.f32 0.0, %v2526
          %v2528 = vpop.f32.mrf.mxu0
          %v2529 = vadd.f32 0.0, %v2528
          %v2530 = vpop.f32.mrf.mxu0
          %v2531 = vadd.f32 0.0, %v2530
          %2532 = vdwg.mxu0
          %v2565 = vunpack.c.l.b16 %v2214
          %v2566 = vunpack.c.h.b16 %v2214
          %v2567 = vunpack.c.l.b16 %v2215
          %v2568 = vunpack.c.h.b16 %v2215
          %v2569 = vunpack.c.l.b16 %v2216
          %v2570 = vunpack.c.h.b16 %v2216
          %v2571 = vunpack.c.l.b16 %v2217
          %v2572 = vunpack.c.h.b16 %v2217
          %v2573 = vunpack.c.l.b16 %v2218
          %v2574 = vunpack.c.h.b16 %v2218
          %v2575 = vunpack.c.l.b16 %v2219
          %v2576 = vunpack.c.h.b16 %v2219
          %v2577 = vunpack.c.l.b16 %v2220
          %v2578 = vunpack.c.h.b16 %v2220
          %v2579 = vunpack.c.l.b16 %v2221
          %v2580 = vunpack.c.h.b16 %v2221
          %v2581 = vunpack.c.l.b16 %v2222
          %v2582 = vunpack.c.h.b16 %v2222
          %v2583 = vunpack.c.l.b16 %v2223
          %v2584 = vunpack.c.h.b16 %v2223
          %v2585 = vunpack.c.l.b16 %v2224
          %v2586 = vunpack.c.h.b16 %v2224
          %v2587 = vunpack.c.l.b16 %v2225
          %v2588 = vunpack.c.h.b16 %v2225
          %v2589 = vunpack.c.l.b16 %v2226
          %v2590 = vunpack.c.h.b16 %v2226
          %v2591 = vunpack.c.l.b16 %v2227
          %v2592 = vunpack.c.h.b16 %v2227
          %v2593 = vunpack.c.l.b16 %v2228
          %v2594 = vunpack.c.h.b16 %v2228
          %v2595 = vunpack.c.l.b16 %v2229
          %v2596 = vunpack.c.h.b16 %v2229
          %v2597 = vunpack.c.l.b16 %v2230
          %v2598 = vunpack.c.h.b16 %v2230
          %v2599 = vunpack.c.l.b16 %v2231
          %v2600 = vunpack.c.h.b16 %v2231
          %v2601 = vunpack.c.l.b16 %v2232
          %v2602 = vunpack.c.h.b16 %v2232
          %v2603 = vunpack.c.l.b16 %v2233
          %v2604 = vunpack.c.h.b16 %v2233
          %v2605 = vunpack.c.l.b16 %v2234
          %v2606 = vunpack.c.h.b16 %v2234
          %v2607 = vunpack.c.l.b16 %v2235
          %v2608 = vunpack.c.h.b16 %v2235
          %v2609 = vunpack.c.l.b16 %v2236
          %v2610 = vunpack.c.h.b16 %v2236
          %v2611 = vunpack.c.l.b16 %v2237
          %v2612 = vunpack.c.h.b16 %v2237
          %v2613 = vunpack.c.l.b16 %v2238
          %v2614 = vunpack.c.h.b16 %v2238
          %v2615 = vunpack.c.l.b16 %v2239
          %v2616 = vunpack.c.h.b16 %v2239
          %v2617 = vunpack.c.l.b16 %v2240
          %v2618 = vunpack.c.h.b16 %v2240
          %v2619 = vunpack.c.l.b16 %v2241
          %v2620 = vunpack.c.h.b16 %v2241
          %v2621 = vunpack.c.l.b16 %v2242
          %v2622 = vunpack.c.h.b16 %v2242
          %v2623 = vunpack.c.l.b16 %v2243
          %v2624 = vunpack.c.h.b16 %v2243
          %v2625 = vunpack.c.l.b16 %v2244
          %v2626 = vunpack.c.h.b16 %v2244
          %v2627 = vunpack.c.l.b16 %v2245
          %v2628 = vunpack.c.h.b16 %v2245
          %v2629 = vpack.c.b16 %v2567, %v2565
          %v2630 = vpack.c.b16 %v2568, %v2566
          %v2631 = vpack.c.b16 %v2571, %v2569
          %v2632 = vpack.c.b16 %v2572, %v2570
          %v2633 = vpack.c.b16 %v2575, %v2573
          %v2634 = vpack.c.b16 %v2576, %v2574
          %v2635 = vpack.c.b16 %v2579, %v2577
          %v2636 = vpack.c.b16 %v2580, %v2578
          %v2637 = vpack.c.b16 %v2583, %v2581
          %v2638 = vpack.c.b16 %v2584, %v2582
          %v2639 = vpack.c.b16 %v2587, %v2585
          %v2640 = vpack.c.b16 %v2588, %v2586
          %v2641 = vpack.c.b16 %v2591, %v2589
          %v2642 = vpack.c.b16 %v2592, %v2590
          %v2643 = vpack.c.b16 %v2595, %v2593
          %v2644 = vpack.c.b16 %v2596, %v2594
          %v2645 = vpack.c.b16 %v2599, %v2597
          %v2646 = vpack.c.b16 %v2600, %v2598
          %v2647 = vpack.c.b16 %v2603, %v2601
          %v2648 = vpack.c.b16 %v2604, %v2602
          %v2649 = vpack.c.b16 %v2607, %v2605
          %v2650 = vpack.c.b16 %v2608, %v2606
          %v2651 = vpack.c.b16 %v2611, %v2609
          %v2652 = vpack.c.b16 %v2612, %v2610
          %v2653 = vpack.c.b16 %v2615, %v2613
          %v2654 = vpack.c.b16 %v2616, %v2614
          %v2655 = vpack.c.b16 %v2619, %v2617
          %v2656 = vpack.c.b16 %v2620, %v2618
          %v2657 = vpack.c.b16 %v2623, %v2621
          %v2658 = vpack.c.b16 %v2624, %v2622
          %v2659 = vpack.c.b16 %v2627, %v2625
          %v2660 = vpack.c.b16 %v2628, %v2626
          %2693 = vmatprep.subr.bf16.mxu0 %v2644
          %2694 = vmatpush1.bf16.msra.mxu0 %v2643
          %2695 = vmatprep.subr.bf16.mxu0 %v2642
          %2696 = vmatpush1.bf16.msra.mxu0 %v2641
          %2697 = vmatprep.subr.bf16.mxu0 %v2640
          %2698 = vmatpush1.bf16.msra.mxu0 %v2639
          %2699 = vmatprep.subr.bf16.mxu0 %v2638
          %2700 = vmatpush1.bf16.msra.mxu0 %v2637
          %2701 = vmatprep.subr.bf16.mxu0 %v2636
          %2702 = vmatpush1.bf16.msra.mxu0 %v2635
          %2703 = vmatprep.subr.bf16.mxu0 %v2634
          %2704 = vmatpush1.bf16.msra.mxu0 %v2633
          %2705 = vmatprep.subr.bf16.mxu0 %v2632
          %2706 = vmatpush1.bf16.msra.mxu0 %v2631
          %2707 = vmatprep.subr.bf16.mxu0 %v2630
          %2708 = vmatpush1.bf16.msra.mxu0 %v2629
          %2709 = vmatprep.subr.bf16.mxu0 %v2660
          %2710 = vmatpush2.bf16.msra.mxu0 %v2659
          %2711 = vmatprep.subr.bf16.mxu0 %v2658
          %2712 = vmatpush2.bf16.msra.mxu0 %v2657
          %2713 = vmatprep.subr.bf16.mxu0 %v2656
          %2714 = vmatpush2.bf16.msra.mxu0 %v2655
          %2715 = vmatprep.subr.bf16.mxu0 %v2654
          %2716 = vmatpush2.bf16.msra.mxu0 %v2653
          %2717 = vmatprep.subr.bf16.mxu0 %v2652
          %2718 = vmatpush2.bf16.msra.mxu0 %v2651
          %2719 = vmatprep.subr.bf16.mxu0 %v2650
          %2720 = vmatpush2.bf16.msra.mxu0 %v2649
          %2721 = vmatprep.subr.bf16.mxu0 %v2648
          %2722 = vmatpush2.bf16.msra.mxu0 %v2647
          %2723 = vmatprep.subr.bf16.mxu0 %v2646
          %2724 = vmatpush2.bf16.msra.mxu0 %v2645
          %2725 = vmatprep.mubr.bf16.mxu0 %v2211
          %2726 = vmatmul.mubr.bf16.gmra.mxu0 %v2210
          %v2727 = vpop.f32.mrf.mxu0
          %v2728 = vadd.f32 %v2515, %v2727
          %v2729 = vpop.f32.mrf.mxu0
          %v2730 = vadd.f32 %v2517, %v2729
          %v2731 = vpop.f32.mrf.mxu0
          %v2732 = vadd.f32 %v2519, %v2731
          %v2733 = vpop.f32.mrf.mxu0
          %v2734 = vadd.f32 %v2521, %v2733
          %2735 = vmatprep.mubr.bf16.mxu0 %v2213
          %2736 = vmatmul.mubr.bf16.gmra.mxu0 %v2212
          %v2737 = vpop.f32.mrf.mxu0
          %v2738 = vadd.f32 %v2525, %v2737
          %v2739 = vpop.f32.mrf.mxu0
          %v2740 = vadd.f32 %v2527, %v2739
          %v2741 = vpop.f32.mrf.mxu0
          %v2742 = vadd.f32 %v2529, %v2741
          %v2743 = vpop.f32.mrf.mxu0
          %v2744 = vadd.f32 %v2531, %v2743
          %2745 = vdwg.mxu0
          %v2746 = vld [vmem:[%s1611] sm:$0xff]
          %v2747 = vld [vmem:[%s1611 + $0x8] sm:$0xff]
          %v2748 = vld [vmem:[%s1611 + $0x10] sm:$0xff]
          %v2749 = vld [vmem:[%s1611 + $0x18] sm:$0xff]
          %v2750 = vld [vmem:[%s1611 + $0x20] sm:$0xff]
          %v2751 = vld [vmem:[%s1611 + $0x28] sm:$0xff]
          %v2752 = vld [vmem:[%s1611 + $0x30] sm:$0xff]
          %v2753 = vld [vmem:[%s1611 + $0x38] sm:$0xff]
          %s2754 = scalar_lea.vmem [#allocation12], 4
          %v2755 = vld [vmem:[%s2754] sm:$0x3]
          %v2757 = vlaneseq
          %v2758 = vshrl.u32 %v2757, 7
          %v2759 = vsub.s32 0, %v2758
          %v2760 = vrot.slane %v2755, %v2759
          %v2761 = vlaneseq
          %v2762 = vshrl.u32 %v2761, 7
          %v2763 = vsub.s32 1, %v2762
          %v2764 = vrot.slane %v2755, %v2763
          %v2767 = vadd.f32 %v2746, %v2760
          %v2768 = vadd.f32 %v2747, %v2764
          %v2769 = vadd.f32 %v2748, %v2760
          %v2770 = vadd.f32 %v2749, %v2764
          %v2771 = vadd.f32 %v2750, %v2760
          %v2772 = vadd.f32 %v2751, %v2764
          %v2773 = vadd.f32 %v2752, %v2760
          %v2774 = vadd.f32 %v2753, %v2764
          %v2775 = vmax.f32 %v2767, 0.0
          %v2776 = vmax.f32 %v2768, 0.0
          %v2777 = vmax.f32 %v2769, 0.0
          %v2778 = vmax.f32 %v2770, 0.0
          %v2779 = vmax.f32 %v2771, 0.0
          %v2780 = vmax.f32 %v2772, 0.0
          %v2781 = vmax.f32 %v2773, 0.0
          %v2782 = vmax.f32 %v2774, 0.0
          %v2783 = vpack.c.bf16 %v2777, %v2775
          %v2784 = vpack.c.bf16 %v2778, %v2776
          %v2785 = vpack.c.bf16 %v2781, %v2779
          %v2786 = vpack.c.bf16 %v2782, %v2780
          %s2787 = scalar_lea.vmem [#allocation10], 512
          %v2788 = vld [vmem:[%s2787] sm:$0xff]
          %v2789 = vld [vmem:[%s2787 + $0x8] sm:$0xff]
          %v2790 = vld [vmem:[%s2787 + $0x10] sm:$0xff]
          %v2791 = vld [vmem:[%s2787 + $0x18] sm:$0xff]
          %v2792 = vld [vmem:[%s2787 + $0x20] sm:$0xff]
          %v2793 = vld [vmem:[%s2787 + $0x28] sm:$0xff]
          %v2794 = vld [vmem:[%s2787 + $0x30] sm:$0xff]
          %v2795 = vld [vmem:[%s2787 + $0x38] sm:$0xff]
          %v2796 = vld [vmem:[%s2787 + $0x40] sm:$0xff]
          %v2797 = vld [vmem:[%s2787 + $0x48] sm:$0xff]
          %v2798 = vld [vmem:[%s2787 + $0x50] sm:$0xff]
          %v2799 = vld [vmem:[%s2787 + $0x58] sm:$0xff]
          %v2800 = vld [vmem:[%s2787 + $0x60] sm:$0xff]
          %v2801 = vld [vmem:[%s2787 + $0x68] sm:$0xff]
          %v2802 = vld [vmem:[%s2787 + $0x70] sm:$0xff]
          %v2803 = vld [vmem:[%s2787 + $0x78] sm:$0xff]
          %v2804 = vld [vmem:[%s2787 + $0x80] sm:$0xff]
          %v2805 = vld [vmem:[%s2787 + $0x88] sm:$0xff]
          %v2806 = vld [vmem:[%s2787 + $0x90] sm:$0xff]
          %v2807 = vld [vmem:[%s2787 + $0x98] sm:$0xff]
          %v2808 = vld [vmem:[%s2787 + $0xa0] sm:$0xff]
          %v2809 = vld [vmem:[%s2787 + $0xa8] sm:$0xff]
          %v2810 = vld [vmem:[%s2787 + $0xb0] sm:$0xff]
          %v2811 = vld [vmem:[%s2787 + $0xb8] sm:$0xff]
          %v2812 = vld [vmem:[%s2787 + $0xc0] sm:$0xff]
          %v2813 = vld [vmem:[%s2787 + $0xc8] sm:$0xff]
          %v2814 = vld [vmem:[%s2787 + $0xd0] sm:$0xff]
          %v2815 = vld [vmem:[%s2787 + $0xd8] sm:$0xff]
          %v2816 = vld [vmem:[%s2787 + $0xe0] sm:$0xff]
          %v2817 = vld [vmem:[%s2787 + $0xe8] sm:$0xff]
          %v2818 = vld [vmem:[%s2787 + $0xf0] sm:$0xff]
          %v2819 = vld [vmem:[%s2787 + $0xf8] sm:$0xff]
          %v2852 = vunpack.c.l.b16 %v2788
          %v2853 = vunpack.c.h.b16 %v2788
          %v2854 = vunpack.c.l.b16 %v2789
          %v2855 = vunpack.c.h.b16 %v2789
          %v2856 = vunpack.c.l.b16 %v2790
          %v2857 = vunpack.c.h.b16 %v2790
          %v2858 = vunpack.c.l.b16 %v2791
          %v2859 = vunpack.c.h.b16 %v2791
          %v2860 = vunpack.c.l.b16 %v2792
          %v2861 = vunpack.c.h.b16 %v2792
          %v2862 = vunpack.c.l.b16 %v2793
          %v2863 = vunpack.c.h.b16 %v2793
          %v2864 = vunpack.c.l.b16 %v2794
          %v2865 = vunpack.c.h.b16 %v2794
          %v2866 = vunpack.c.l.b16 %v2795
          %v2867 = vunpack.c.h.b16 %v2795
          %v2868 = vunpack.c.l.b16 %v2796
          %v2869 = vunpack.c.h.b16 %v2796
          %v2870 = vunpack.c.l.b16 %v2797
          %v2871 = vunpack.c.h.b16 %v2797
          %v2872 = vunpack.c.l.b16 %v2798
          %v2873 = vunpack.c.h.b16 %v2798
          %v2874 = vunpack.c.l.b16 %v2799
          %v2875 = vunpack.c.h.b16 %v2799
          %v2876 = vunpack.c.l.b16 %v2800
          %v2877 = vunpack.c.h.b16 %v2800
          %v2878 = vunpack.c.l.b16 %v2801
          %v2879 = vunpack.c.h.b16 %v2801
          %v2880 = vunpack.c.l.b16 %v2802
          %v2881 = vunpack.c.h.b16 %v2802
          %v2882 = vunpack.c.l.b16 %v2803
          %v2883 = vunpack.c.h.b16 %v2803
          %v2884 = vunpack.c.l.b16 %v2804
          %v2885 = vunpack.c.h.b16 %v2804
          %v2886 = vunpack.c.l.b16 %v2805
          %v2887 = vunpack.c.h.b16 %v2805
          %v2888 = vunpack.c.l.b16 %v2806
          %v2889 = vunpack.c.h.b16 %v2806
          %v2890 = vunpack.c.l.b16 %v2807
          %v2891 = vunpack.c.h.b16 %v2807
          %v2892 = vunpack.c.l.b16 %v2808
          %v2893 = vunpack.c.h.b16 %v2808
          %v2894 = vunpack.c.l.b16 %v2809
          %v2895 = vunpack.c.h.b16 %v2809
          %v2896 = vunpack.c.l.b16 %v2810
          %v2897 = vunpack.c.h.b16 %v2810
          %v2898 = vunpack.c.l.b16 %v2811
          %v2899 = vunpack.c.h.b16 %v2811
          %v2900 = vunpack.c.l.b16 %v2812
          %v2901 = vunpack.c.h.b16 %v2812
          %v2902 = vunpack.c.l.b16 %v2813
          %v2903 = vunpack.c.h.b16 %v2813
          %v2904 = vunpack.c.l.b16 %v2814
          %v2905 = vunpack.c.h.b16 %v2814
          %v2906 = vunpack.c.l.b16 %v2815
          %v2907 = vunpack.c.h.b16 %v2815
          %v2908 = vunpack.c.l.b16 %v2816
          %v2909 = vunpack.c.h.b16 %v2816
          %v2910 = vunpack.c.l.b16 %v2817
          %v2911 = vunpack.c.h.b16 %v2817
          %v2912 = vunpack.c.l.b16 %v2818
          %v2913 = vunpack.c.h.b16 %v2818
          %v2914 = vunpack.c.l.b16 %v2819
          %v2915 = vunpack.c.h.b16 %v2819
          %v2916 = vpack.c.b16 %v2854, %v2852
          %v2917 = vpack.c.b16 %v2855, %v2853
          %v2918 = vpack.c.b16 %v2858, %v2856
          %v2919 = vpack.c.b16 %v2859, %v2857
          %v2920 = vpack.c.b16 %v2862, %v2860
          %v2921 = vpack.c.b16 %v2863, %v2861
          %v2922 = vpack.c.b16 %v2866, %v2864
          %v2923 = vpack.c.b16 %v2867, %v2865
          %v2924 = vpack.c.b16 %v2870, %v2868
          %v2925 = vpack.c.b16 %v2871, %v2869
          %v2926 = vpack.c.b16 %v2874, %v2872
          %v2927 = vpack.c.b16 %v2875, %v2873
          %v2928 = vpack.c.b16 %v2878, %v2876
          %v2929 = vpack.c.b16 %v2879, %v2877
          %v2930 = vpack.c.b16 %v2882, %v2880
          %v2931 = vpack.c.b16 %v2883, %v2881
          %v2932 = vpack.c.b16 %v2886, %v2884
          %v2933 = vpack.c.b16 %v2887, %v2885
          %v2934 = vpack.c.b16 %v2890, %v2888
          %v2935 = vpack.c.b16 %v2891, %v2889
          %v2936 = vpack.c.b16 %v2894, %v2892
          %v2937 = vpack.c.b16 %v2895, %v2893
          %v2938 = vpack.c.b16 %v2898, %v2896
          %v2939 = vpack.c.b16 %v2899, %v2897
          %v2940 = vpack.c.b16 %v2902, %v2900
          %v2941 = vpack.c.b16 %v2903, %v2901
          %v2942 = vpack.c.b16 %v2906, %v2904
          %v2943 = vpack.c.b16 %v2907, %v2905
          %v2944 = vpack.c.b16 %v2910, %v2908
          %v2945 = vpack.c.b16 %v2911, %v2909
          %v2946 = vpack.c.b16 %v2914, %v2912
          %v2947 = vpack.c.b16 %v2915, %v2913
          %2980 = vmatprep.subr.bf16.mxu0 %v2931
          %2981 = vmatpush1.bf16.msra.mxu0 %v2930
          %2982 = vmatprep.subr.bf16.mxu0 %v2929
          %2983 = vmatpush1.bf16.msra.mxu0 %v2928
          %2984 = vmatprep.subr.bf16.mxu0 %v2927
          %2985 = vmatpush1.bf16.msra.mxu0 %v2926
          %2986 = vmatprep.subr.bf16.mxu0 %v2925
          %2987 = vmatpush1.bf16.msra.mxu0 %v2924
          %2988 = vmatprep.subr.bf16.mxu0 %v2923
          %2989 = vmatpush1.bf16.msra.mxu0 %v2922
          %2990 = vmatprep.subr.bf16.mxu0 %v2921
          %2991 = vmatpush1.bf16.msra.mxu0 %v2920
          %2992 = vmatprep.subr.bf16.mxu0 %v2919
          %2993 = vmatpush1.bf16.msra.mxu0 %v2918
          %2994 = vmatprep.subr.bf16.mxu0 %v2917
          %2995 = vmatpush1.bf16.msra.mxu0 %v2916
          %2996 = vmatprep.subr.bf16.mxu0 %v2947
          %2997 = vmatpush2.bf16.msra.mxu0 %v2946
          %2998 = vmatprep.subr.bf16.mxu0 %v2945
          %2999 = vmatpush2.bf16.msra.mxu0 %v2944
          %3000 = vmatprep.subr.bf16.mxu0 %v2943
          %3001 = vmatpush2.bf16.msra.mxu0 %v2942
          %3002 = vmatprep.subr.bf16.mxu0 %v2941
          %3003 = vmatpush2.bf16.msra.mxu0 %v2940
          %3004 = vmatprep.subr.bf16.mxu0 %v2939
          %3005 = vmatpush2.bf16.msra.mxu0 %v2938
          %3006 = vmatprep.subr.bf16.mxu0 %v2937
          %3007 = vmatpush2.bf16.msra.mxu0 %v2936
          %3008 = vmatprep.subr.bf16.mxu0 %v2935
          %3009 = vmatpush2.bf16.msra.mxu0 %v2934
          %3010 = vmatprep.subr.bf16.mxu0 %v2933
          %3011 = vmatpush2.bf16.msra.mxu0 %v2932
          %3012 = vmatprep.mubr.bf16.mxu0 %v2784
          %3013 = vmatmul.mubr.bf16.gmra.mxu0 %v2783
          %v3014 = vpop.f32.mrf.mxu0
          %v3015 = vadd.f32 0.0, %v3014
          %v3016 = vpop.f32.mrf.mxu0
          %v3017 = vadd.f32 0.0, %v3016
          %v3018 = vpop.f32.mrf.mxu0
          %v3019 = vadd.f32 0.0, %v3018
          %v3020 = vpop.f32.mrf.mxu0
          %v3021 = vadd.f32 0.0, %v3020
          %3022 = vmatprep.mubr.bf16.mxu0 %v2786
          %3023 = vmatmul.mubr.bf16.gmra.mxu0 %v2785
          %v3024 = vpop.f32.mrf.mxu0
          %v3025 = vadd.f32 0.0, %v3024
          %v3026 = vpop.f32.mrf.mxu0
          %v3027 = vadd.f32 0.0, %v3026
          %v3028 = vpop.f32.mrf.mxu0
          %v3029 = vadd.f32 0.0, %v3028
          %v3030 = vpop.f32.mrf.mxu0
          %v3031 = vadd.f32 0.0, %v3030
          %3032 = vdwg.mxu0
          %v3033 = vadd.f32 %v2728, %v3015
          %v3034 = vadd.f32 %v2730, %v3017
          %v3035 = vadd.f32 %v2732, %v3019
          %v3036 = vadd.f32 %v2734, %v3021
          %v3037 = vadd.f32 %v2738, %v3025
          %v3038 = vadd.f32 %v2740, %v3027
          %v3039 = vadd.f32 %v2742, %v3029
          %v3040 = vadd.f32 %v2744, %v3031
          %v3041 = vld [vmem:[%s1882] sm:$0xff]
          %v3042 = vld [vmem:[%s1882 + $0x8] sm:$0xff]
          %v3043 = vld [vmem:[%s1882 + $0x10] sm:$0xff]
          %v3044 = vld [vmem:[%s1882 + $0x18] sm:$0xff]
          %v3045 = vld [vmem:[%s1882 + $0x20] sm:$0xff]
          %v3046 = vld [vmem:[%s1882 + $0x28] sm:$0xff]
          %v3047 = vld [vmem:[%s1882 + $0x30] sm:$0xff]
          %v3048 = vld [vmem:[%s1882 + $0x38] sm:$0xff]
          %s3049 = scalar_lea.vmem [#allocation12], 6
          %v3050 = vld [vmem:[%s3049] sm:$0x3]
          %v3052 = vlaneseq
          %v3053 = vshrl.u32 %v3052, 7
          %v3054 = vsub.s32 0, %v3053
          %v3055 = vrot.slane %v3050, %v3054
          %v3056 = vlaneseq
          %v3057 = vshrl.u32 %v3056, 7
          %v3058 = vsub.s32 1, %v3057
          %v3059 = vrot.slane %v3050, %v3058
          %v3062 = vadd.f32 %v3041, %v3055
          %v3063 = vadd.f32 %v3042, %v3059
          %v3064 = vadd.f32 %v3043, %v3055
          %v3065 = vadd.f32 %v3044, %v3059
          %v3066 = vadd.f32 %v3045, %v3055
          %v3067 = vadd.f32 %v3046, %v3059
          %v3068 = vadd.f32 %v3047, %v3055
          %v3069 = vadd.f32 %v3048, %v3059
          %v3070 = vmax.f32 %v3062, 0.0
          %v3071 = vmax.f32 %v3063, 0.0
          %v3072 = vmax.f32 %v3064, 0.0
          %v3073 = vmax.f32 %v3065, 0.0
          %v3074 = vmax.f32 %v3066, 0.0
          %v3075 = vmax.f32 %v3067, 0.0
          %v3076 = vmax.f32 %v3068, 0.0
          %v3077 = vmax.f32 %v3069, 0.0
          %v3078 = vpack.c.bf16 %v3072, %v3070
          %v3079 = vpack.c.bf16 %v3073, %v3071
          %v3080 = vpack.c.bf16 %v3076, %v3074
          %v3081 = vpack.c.bf16 %v3077, %v3075
          %s3082 = scalar_lea.vmem [#allocation10], 768
          %v3083 = vld [vmem:[%s3082] sm:$0xff]
          %v3084 = vld [vmem:[%s3082 + $0x8] sm:$0xff]
          %v3085 = vld [vmem:[%s3082 + $0x10] sm:$0xff]
          %v3086 = vld [vmem:[%s3082 + $0x18] sm:$0xff]
          %v3087 = vld [vmem:[%s3082 + $0x20] sm:$0xff]
          %v3088 = vld [vmem:[%s3082 + $0x28] sm:$0xff]
          %v3089 = vld [vmem:[%s3082 + $0x30] sm:$0xff]
          %v3090 = vld [vmem:[%s3082 + $0x38] sm:$0xff]
          %v3091 = vld [vmem:[%s3082 + $0x40] sm:$0xff]
          %v3092 = vld [vmem:[%s3082 + $0x48] sm:$0xff]
          %v3093 = vld [vmem:[%s3082 + $0x50] sm:$0xff]
          %v3094 = vld [vmem:[%s3082 + $0x58] sm:$0xff]
          %v3095 = vld [vmem:[%s3082 + $0x60] sm:$0xff]
          %v3096 = vld [vmem:[%s3082 + $0x68] sm:$0xff]
          %v3097 = vld [vmem:[%s3082 + $0x70] sm:$0xff]
          %v3098 = vld [vmem:[%s3082 + $0x78] sm:$0xff]
          %v3099 = vld [vmem:[%s3082 + $0x80] sm:$0xff]
          %v3100 = vld [vmem:[%s3082 + $0x88] sm:$0xff]
          %v3101 = vld [vmem:[%s3082 + $0x90] sm:$0xff]
          %v3102 = vld [vmem:[%s3082 + $0x98] sm:$0xff]
          %v3103 = vld [vmem:[%s3082 + $0xa0] sm:$0xff]
          %v3104 = vld [vmem:[%s3082 + $0xa8] sm:$0xff]
          %v3105 = vld [vmem:[%s3082 + $0xb0] sm:$0xff]
          %v3106 = vld [vmem:[%s3082 + $0xb8] sm:$0xff]
          %v3107 = vld [vmem:[%s3082 + $0xc0] sm:$0xff]
          %v3108 = vld [vmem:[%s3082 + $0xc8] sm:$0xff]
          %v3109 = vld [vmem:[%s3082 + $0xd0] sm:$0xff]
          %v3110 = vld [vmem:[%s3082 + $0xd8] sm:$0xff]
          %v3111 = vld [vmem:[%s3082 + $0xe0] sm:$0xff]
          %v3112 = vld [vmem:[%s3082 + $0xe8] sm:$0xff]
          %v3113 = vld [vmem:[%s3082 + $0xf0] sm:$0xff]
          %v3114 = vld [vmem:[%s3082 + $0xf8] sm:$0xff]
          %v3147 = vunpack.c.l.b16 %v3083
          %v3148 = vunpack.c.h.b16 %v3083
          %v3149 = vunpack.c.l.b16 %v3084
          %v3150 = vunpack.c.h.b16 %v3084
          %v3151 = vunpack.c.l.b16 %v3085
          %v3152 = vunpack.c.h.b16 %v3085
          %v3153 = vunpack.c.l.b16 %v3086
          %v3154 = vunpack.c.h.b16 %v3086
          %v3155 = vunpack.c.l.b16 %v3087
          %v3156 = vunpack.c.h.b16 %v3087
          %v3157 = vunpack.c.l.b16 %v3088
          %v3158 = vunpack.c.h.b16 %v3088
          %v3159 = vunpack.c.l.b16 %v3089
          %v3160 = vunpack.c.h.b16 %v3089
          %v3161 = vunpack.c.l.b16 %v3090
          %v3162 = vunpack.c.h.b16 %v3090
          %v3163 = vunpack.c.l.b16 %v3091
          %v3164 = vunpack.c.h.b16 %v3091
          %v3165 = vunpack.c.l.b16 %v3092
          %v3166 = vunpack.c.h.b16 %v3092
          %v3167 = vunpack.c.l.b16 %v3093
          %v3168 = vunpack.c.h.b16 %v3093
          %v3169 = vunpack.c.l.b16 %v3094
          %v3170 = vunpack.c.h.b16 %v3094
          %v3171 = vunpack.c.l.b16 %v3095
          %v3172 = vunpack.c.h.b16 %v3095
          %v3173 = vunpack.c.l.b16 %v3096
          %v3174 = vunpack.c.h.b16 %v3096
          %v3175 = vunpack.c.l.b16 %v3097
          %v3176 = vunpack.c.h.b16 %v3097
          %v3177 = vunpack.c.l.b16 %v3098
          %v3178 = vunpack.c.h.b16 %v3098
          %v3179 = vunpack.c.l.b16 %v3099
          %v3180 = vunpack.c.h.b16 %v3099
          %v3181 = vunpack.c.l.b16 %v3100
          %v3182 = vunpack.c.h.b16 %v3100
          %v3183 = vunpack.c.l.b16 %v3101
          %v3184 = vunpack.c.h.b16 %v3101
          %v3185 = vunpack.c.l.b16 %v3102
          %v3186 = vunpack.c.h.b16 %v3102
          %v3187 = vunpack.c.l.b16 %v3103
          %v3188 = vunpack.c.h.b16 %v3103
          %v3189 = vunpack.c.l.b16 %v3104
          %v3190 = vunpack.c.h.b16 %v3104
          %v3191 = vunpack.c.l.b16 %v3105
          %v3192 = vunpack.c.h.b16 %v3105
          %v3193 = vunpack.c.l.b16 %v3106
          %v3194 = vunpack.c.h.b16 %v3106
          %v3195 = vunpack.c.l.b16 %v3107
          %v3196 = vunpack.c.h.b16 %v3107
          %v3197 = vunpack.c.l.b16 %v3108
          %v3198 = vunpack.c.h.b16 %v3108
          %v3199 = vunpack.c.l.b16 %v3109
          %v3200 = vunpack.c.h.b16 %v3109
          %v3201 = vunpack.c.l.b16 %v3110
          %v3202 = vunpack.c.h.b16 %v3110
          %v3203 = vunpack.c.l.b16 %v3111
          %v3204 = vunpack.c.h.b16 %v3111
          %v3205 = vunpack.c.l.b16 %v3112
          %v3206 = vunpack.c.h.b16 %v3112
          %v3207 = vunpack.c.l.b16 %v3113
          %v3208 = vunpack.c.h.b16 %v3113
          %v3209 = vunpack.c.l.b16 %v3114
          %v3210 = vunpack.c.h.b16 %v3114
          %v3211 = vpack.c.b16 %v3149, %v3147
          %v3212 = vpack.c.b16 %v3150, %v3148
          %v3213 = vpack.c.b16 %v3153, %v3151
          %v3214 = vpack.c.b16 %v3154, %v3152
          %v3215 = vpack.c.b16 %v3157, %v3155
          %v3216 = vpack.c.b16 %v3158, %v3156
          %v3217 = vpack.c.b16 %v3161, %v3159
          %v3218 = vpack.c.b16 %v3162, %v3160
          %v3219 = vpack.c.b16 %v3165, %v3163
          %v3220 = vpack.c.b16 %v3166, %v3164
          %v3221 = vpack.c.b16 %v3169, %v3167
          %v3222 = vpack.c.b16 %v3170, %v3168
          %v3223 = vpack.c.b16 %v3173, %v3171
          %v3224 = vpack.c.b16 %v3174, %v3172
          %v3225 = vpack.c.b16 %v3177, %v3175
          %v3226 = vpack.c.b16 %v3178, %v3176
          %v3227 = vpack.c.b16 %v3181, %v3179
          %v3228 = vpack.c.b16 %v3182, %v3180
          %v3229 = vpack.c.b16 %v3185, %v3183
          %v3230 = vpack.c.b16 %v3186, %v3184
          %v3231 = vpack.c.b16 %v3189, %v3187
          %v3232 = vpack.c.b16 %v3190, %v3188
          %v3233 = vpack.c.b16 %v3193, %v3191
          %v3234 = vpack.c.b16 %v3194, %v3192
          %v3235 = vpack.c.b16 %v3197, %v3195
          %v3236 = vpack.c.b16 %v3198, %v3196
          %v3237 = vpack.c.b16 %v3201, %v3199
          %v3238 = vpack.c.b16 %v3202, %v3200
          %v3239 = vpack.c.b16 %v3205, %v3203
          %v3240 = vpack.c.b16 %v3206, %v3204
          %v3241 = vpack.c.b16 %v3209, %v3207
          %v3242 = vpack.c.b16 %v3210, %v3208
          %3275 = vmatprep.subr.bf16.mxu0 %v3226
          %3276 = vmatpush1.bf16.msra.mxu0 %v3225
          %3277 = vmatprep.subr.bf16.mxu0 %v3224
          %3278 = vmatpush1.bf16.msra.mxu0 %v3223
          %3279 = vmatprep.subr.bf16.mxu0 %v3222
          %3280 = vmatpush1.bf16.msra.mxu0 %v3221
          %3281 = vmatprep.subr.bf16.mxu0 %v3220
          %3282 = vmatpush1.bf16.msra.mxu0 %v3219
          %3283 = vmatprep.subr.bf16.mxu0 %v3218
          %3284 = vmatpush1.bf16.msra.mxu0 %v3217
          %3285 = vmatprep.subr.bf16.mxu0 %v3216
          %3286 = vmatpush1.bf16.msra.mxu0 %v3215
          %3287 = vmatprep.subr.bf16.mxu0 %v3214
          %3288 = vmatpush1.bf16.msra.mxu0 %v3213
          %3289 = vmatprep.subr.bf16.mxu0 %v3212
          %3290 = vmatpush1.bf16.msra.mxu0 %v3211
          %3291 = vmatprep.subr.bf16.mxu0 %v3242
          %3292 = vmatpush2.bf16.msra.mxu0 %v3241
          %3293 = vmatprep.subr.bf16.mxu0 %v3240
          %3294 = vmatpush2.bf16.msra.mxu0 %v3239
          %3295 = vmatprep.subr.bf16.mxu0 %v3238
          %3296 = vmatpush2.bf16.msra.mxu0 %v3237
          %3297 = vmatprep.subr.bf16.mxu0 %v3236
          %3298 = vmatpush2.bf16.msra.mxu0 %v3235
          %3299 = vmatprep.subr.bf16.mxu0 %v3234
          %3300 = vmatpush2.bf16.msra.mxu0 %v3233
          %3301 = vmatprep.subr.bf16.mxu0 %v3232
          %3302 = vmatpush2.bf16.msra.mxu0 %v3231
          %3303 = vmatprep.subr.bf16.mxu0 %v3230
          %3304 = vmatpush2.bf16.msra.mxu0 %v3229
          %3305 = vmatprep.subr.bf16.mxu0 %v3228
          %3306 = vmatpush2.bf16.msra.mxu0 %v3227
          %3307 = vmatprep.mubr.bf16.mxu0 %v3079
          %3308 = vmatmul.mubr.bf16.gmra.mxu0 %v3078
          %v3309 = vpop.f32.mrf.mxu0
          %v3310 = vadd.f32 0.0, %v3309
          %v3311 = vpop.f32.mrf.mxu0
          %v3312 = vadd.f32 0.0, %v3311
          %v3313 = vpop.f32.mrf.mxu0
          %v3314 = vadd.f32 0.0, %v3313
          %v3315 = vpop.f32.mrf.mxu0
          %v3316 = vadd.f32 0.0, %v3315
          %3317 = vmatprep.mubr.bf16.mxu0 %v3081
          %3318 = vmatmul.mubr.bf16.gmra.mxu0 %v3080
          %v3319 = vpop.f32.mrf.mxu0
          %v3320 = vadd.f32 0.0, %v3319
          %v3321 = vpop.f32.mrf.mxu0
          %v3322 = vadd.f32 0.0, %v3321
          %v3323 = vpop.f32.mrf.mxu0
          %v3324 = vadd.f32 0.0, %v3323
          %v3325 = vpop.f32.mrf.mxu0
          %v3326 = vadd.f32 0.0, %v3325
          %3327 = vdwg.mxu0
          %v3328 = vadd.f32 %v3033, %v3310
          %v3329 = vadd.f32 %v3034, %v3312
          %v3330 = vadd.f32 %v3035, %v3314
          %v3331 = vadd.f32 %v3036, %v3316
          %v3332 = vadd.f32 %v3037, %v3320
          %v3333 = vadd.f32 %v3038, %v3322
          %v3334 = vadd.f32 %v3039, %v3324
          %v3335 = vadd.f32 %v3040, %v3326
          %v3336 = vlaneseq
          %v3337 = vshrl.u32 %v3336, 7
          %v3338 = vsub.s32 0, %v3337
          %v3339 = vrot.slane %v2168, %v3338
          %v3340 = vlaneseq
          %v3341 = vshrl.u32 %v3340, 7
          %v3342 = vsub.s32 0, %v3341
          %v3343 = vrot.slane %v2170, %v3342
          %v3344 = vadd.f32 %v3328, %v3339
          %v3345 = vadd.f32 %v3329, %v3343
          %v3346 = vadd.f32 %v3330, %v3339
          %v3347 = vadd.f32 %v3331, %v3343
          %v3348 = vadd.f32 %v3332, %v3339
          %v3349 = vadd.f32 %v3333, %v3343
          %v3350 = vadd.f32 %v3334, %v3339
          %v3351 = vadd.f32 %v3335, %v3343
          %v3352 = vmax.f32 %v3344, 0.0
          %v3353 = vmax.f32 %v3345, 0.0
          %v3354 = vmax.f32 %v3346, 0.0
          %v3355 = vmax.f32 %v3347, 0.0
          %v3356 = vmax.f32 %v3348, 0.0
          %v3357 = vmax.f32 %v3349, 0.0
          %v3358 = vmax.f32 %v3350, 0.0
          %v3359 = vmax.f32 %v3351, 0.0
          %v3360 = vpack.c.bf16 %v3352, %v3352
          %v3361 = vpack.c.bf16 %v3353, %v3353
          %v3362 = vpack.c.bf16 %v3354, %v3354
          %v3363 = vpack.c.bf16 %v3355, %v3355
          %v3364 = vpack.c.bf16 %v3356, %v3356
          %v3365 = vpack.c.bf16 %v3357, %v3357
          %v3366 = vpack.c.bf16 %v3358, %v3358
          %v3367 = vpack.c.bf16 %v3359, %v3359
          %v3376 = vcombine.low %v3360, %v3361
          %v3378 = vunpack.c.l.s4 1983009808
          %v3379 = vunpack.c.0.s8 %v3378
          %v3380 = vlaneseq
          %v3381 = vshrl.u32 %v3380, 7
          %v3382 = vsub.s32 %v3379, %v3381
          %v3383 = vrot.slane %v3376, %v3382
          %v3384 = vcombine.low %v3362, %v3363
          %v3386 = vunpack.c.l.s4 1983009808
          %v3387 = vunpack.c.0.s8 %v3386
          %v3388 = vlaneseq
          %v3389 = vshrl.u32 %v3388, 7
          %v3390 = vsub.s32 %v3387, %v3389
          %v3391 = vrot.slane %v3384, %v3390
          %v3392 = vcombine.low %v3364, %v3365
          %v3394 = vunpack.c.l.s4 1983009808
          %v3395 = vunpack.c.0.s8 %v3394
          %v3396 = vlaneseq
          %v3397 = vshrl.u32 %v3396, 7
          %v3398 = vsub.s32 %v3395, %v3397
          %v3399 = vrot.slane %v3392, %v3398
          %v3400 = vcombine.low %v3366, %v3367
          %v3402 = vunpack.c.l.s4 1983009808
          %v3403 = vunpack.c.0.s8 %v3402
          %v3404 = vlaneseq
          %v3405 = vshrl.u32 %v3404, 7
          %v3406 = vsub.s32 %v3403, %v3405
          %v3407 = vrot.slane %v3400, %v3406
          %3412 = vst [vmem:[%s470] sm:$0xf] %v3383
          %3413 = vst [vmem:[%s470 + $0x4] sm:$0xf] %v3391
          %3414 = vst [vmem:[%s470 + $0x8] sm:$0xf] %v3399
          %3415 = vst [vmem:[%s470 + $0xc] sm:$0xf] %v3407
        $region84: #{tpu_custom_call.1} parent=47 // pred_fallthru
          _
        %s3416 = sand.u32 %s213, 1
        %s3417 = scalar_lea.sflag [#allocation6], %s3416
        %s3418 = sand.u32 %s213, 1
        %s3419 = smul.addr %s3418, 16
        %s3420 = scalar_lea.vmem [#allocation16], %s3419
        // Predicated region
        $region85: #{tpu_custom_call.1} parent=47 // pred_check
          %p3421 = pneg %p223
        $region86: #{tpu_custom_call.1} parent=47 // pred_check_branch
          %3423 = sbr.rel (%p3421) target = $region88
        $region87: #{tpu_custom_call.1} parent=47 // pred_region
          %s3425 = ssub.s32 256, 256
          %3426 = vsyncadd %s3417, %s3425
          %s3427 = smul.addr %s33, 8
          %s3428 = smul.addr %s3427, 32
          %s3429 = scalar_lea.hbm %s7, %s3428
          %s3430 = sshll.u32 %s3420, 4
          %s3431 = int_to_ptr.vmem [resolvable:$true] %s3430
          %3436 = dma.vmem_to_hbm [thread:$0]  %s3431, 256, %s3429, %s3417, 64, 64, 4
        $region88: #{tpu_custom_call.1} parent=47 // pred_fallthru
          _
      $region48: #{tpu_custom_call.1} parent=5 // pred_fallthru
        _
      %p3437 = scmp.le.s32.totalorder 2, %s24
      // Predicated region
      $region89: #{tpu_custom_call.1} parent=5 // pred_check
        %p3438 = pneg %p3437
      $region90: #{tpu_custom_call.1} parent=5 // pred_check_branch
        %3440 = sbr.rel (%p3438) target = $region92
      $region91: #{tpu_custom_call.1} parent=5 // pred_region
        %s3441 = ssub.s32 %s24, 2
        // Predicated region
        $region93: #{tpu_custom_call.1} parent=91 // pred_check
          %p3442 = pneg %p229
        $region94: #{tpu_custom_call.1} parent=91 // pred_check_branch
          %3444 = sbr.rel (%p3442) target = $region96
        $region95: #{tpu_custom_call.1} parent=91 // pred_region
          %s3445 = sand.u32 %s214, 1
          %s3446 = scalar_lea.sflag [#allocation6], %s3445
          %s3447 = sand.u32 %s214, 1
          %s3448 = smul.addr %s3447, 16
          %s3449 = scalar_lea.vmem [#allocation16], %s3448
          %3450 = dma.done %s3446, 256
        $region96: #{tpu_custom_call.1} parent=91 // pred_fallthru
          _
      $region92: #{tpu_custom_call.1} parent=5 // pred_fallthru
        _
    $region6: #{tpu_custom_call.1} parent=1 // loop_footer
      %s28 = sadd.s32 1, %s24
    $region7: #{tpu_custom_call.1} parent=1 // loop_footer_branch
      %23 = sbr.rel target = $region3
    $region8: #{tpu_custom_call.1} parent=1 // loop_exit
      _
    %3451 = vsyncpa [#allocation5], 1
    %s3452 = scalar_lea.sflag [#allocation5], 1
    %3453 = vsyncpa %s3452, 1
    %3454 = vsyncpa [#allocation8], 1
    %s3455 = scalar_lea.sflag [#allocation8], 1
    %3456 = vsyncpa %s3455, 1
    %3457 = vsyncpa [#allocation11], 1
    %3458 = vsyncpa [#allocation14], 1
    %3459 = vsyncpa [#allocation6], 1
    %s3460 = scalar_lea.sflag [#allocation6], 1
    %3461 = vsyncpa %s3460, 1

</llo_original>
